<compile_context>
chip_gen: v6e
topology: v6e:2x2x1
jax: 0.10.0
libtpu: 0.0.40
codegen_flags: <defaults>
</compile_context>

<pallas_src>
import functools
from dataclasses import dataclass

import numpy as np
import jax
import jax.numpy as jnp
from jax.experimental import pallas as pl
from jax.experimental.pallas import tpu as pltpu


@dataclass
class MelConfig:
    sr: int = 16000
    n_fft: int = 128
    win_length: int = 128
    hop_length: int = 32
    n_mels: int = 16
    top_db: float = 80.0

    @property
    def n_stft(self) -> int:
        return self.n_fft // 2 + 1


def _round_up(x, m):
    return (x + m - 1) // m * m


# ----------------------------------------------------------------------------
# Host-side parameter construction (numpy, deterministic)
# ----------------------------------------------------------------------------
def _melscale_fbanks(n_freqs, f_min, f_max, n_mels, sr):
    """torchaudio.functional.melscale_fbanks, norm=None, mel_scale='htk'."""
    all_freqs = np.linspace(0.0, sr / 2.0, n_freqs)

    def hz2mel(f):
        return 2595.0 * np.log10(1.0 + f / 700.0)

    def mel2hz(m):
        return 700.0 * (10.0 ** (m / 2595.0) - 1.0)

    m_pts = np.linspace(hz2mel(f_min), hz2mel(f_max), n_mels + 2)
    f_pts = mel2hz(m_pts)
    f_diff = f_pts[1:] - f_pts[:-1]
    slopes = f_pts[None, :] - all_freqs[:, None]
    down = -slopes[:, :-2] / f_diff[:-1]
    up = slopes[:, 2:] / f_diff[1:]
    return np.maximum(0.0, np.minimum(down, up))            # (n_freqs, n_mels) f64


def _np_overlap_add(frames, hop, env):
    """frames: (N, T, n_fft) already windowed -> (N, out_len): OLA + center trim + /env."""
    N, T, n_fft = frames.shape
    L = n_fft + (T - 1) * hop
    sig = np.zeros((N, L), np.float64)
    for t in range(T):
        sig[:, t * hop:t * hop + n_fft] += frames[:, t]
    pad = n_fft // 2
    out_len = (T - 1) * hop
    return sig[:, pad:pad + out_len] / env[None, :]


def _np_frame(sig, n_fft, hop):
    """torch.stft(center=True, pad_mode='reflect') framing: (N, L) -> (N, T, n_fft)."""
    pad = n_fft // 2
    x = np.pad(sig, ((0, 0), (pad, pad)), mode="reflect")
    L = x.shape[1]
    T = 1 + (L - n_fft) // hop
    idx = np.arange(T)[:, None] * hop + np.arange(n_fft)[None, :]
    return x[:, idx]


# ----------------------------------------------------------------------------
# Fused Pallas kernel: full pipeline in one call, everything resident in VMEM
# ----------------------------------------------------------------------------
def _fused_griffinlim_kernel(mel_ref, pinvT_ref, istft_ref, G_ref, stft_ref, W_ref,
                             out_ref, *, B, T, n_fft, NF, db_scale, n_iter, momentum_c):
    BT = B * T
    eps = 1e-16

    # ---- dB -> amplitude -> inverse mel (lstsq min-norm pinv) -> magnitude ----------
    mel = jnp.concatenate([mel_ref[b] for b in range(B)], axis=0)          # (B*T, n_mels)
    amp = jnp.exp(mel * db_scale)                                          # 10**(0.1*dB)
    spec = jnp.dot(amp, pinvT_ref[...], preferred_element_type=jnp.float32)
    mag = jnp.sqrt(jnp.maximum(spec, 0.0))                                 # (B*T, NF)

    def flatten(frames):                 # (B*T, n_fft) -> (B, T*n_fft)
        rows = []
        for b in range(B):
            rows.append(jnp.concatenate(
                [frames[b * T + t:b * T + t + 1, :] for t in range(T)], axis=1))
        return jnp.concatenate(rows, axis=0)

    def unflatten(flat):                 # (B, T*n_fft) -> (B*T, n_fft)
        rows = []
        for b in range(B):
            for t in range(T):
                rows.append(flat[b:b + 1, t * n_fft:(t + 1) * n_fft])
        return jnp.concatenate(rows, axis=0)

    def istft_frames(ang):               # ang: (B*T, 2*NF) -> windowed iDFT frames
        ar = ang[:, :NF]
        ai = ang[:, NF:]
        inv = pl.reciprocal(jnp.sqrt(ar * ar + ai * ai) + eps, approx=True)  # EUP
        cre = mag * ar * inv
        cim = mag * ai * inv
        coef = jnp.concatenate([cre, cim], axis=1)                          # (B*T, 2*NF)
        return jnp.dot(coef, istft_ref[...], preferred_element_type=jnp.float32)

    def body(_, carry):
        ang, tprev = carry
        frames = istft_frames(ang)                                          # (B*T, n_fft)
        # overlap-add + /env + reflect-pad + re-frame, all as one dense matmul
        inflat = jnp.dot(flatten(frames), G_ref[...],
                         preferred_element_type=jnp.float32)                # (B, T*n_fft)
        frames_in = unflatten(inflat)                                       # (B*T, n_fft)
        rebuilt = jnp.dot(frames_in, stft_ref[...],
                          preferred_element_type=jnp.float32)               # (B*T, 2*NF)
        return rebuilt - momentum_c * tprev, rebuilt

    # TODO(synk): torchaudio GriffinLim default rand_init=True uses torch.rand;
    # deterministic unit-phase init (rand_init=False equivalent) is used here.
    ang0 = jnp.concatenate([jnp.ones((BT, NF), jnp.float32),
                            jnp.zeros((BT, NF), jnp.float32)], axis=1)
    ang, _ = jax.lax.fori_loop(0, n_iter, body, (ang0, jnp.zeros_like(ang0)))

    frames = istft_frames(ang)                                              # final ISTFT
    out_ref[...] = jnp.dot(flatten(frames), W_ref[...],
                           preferred_element_type=jnp.float32)              # (B, out_len)


# ----------------------------------------------------------------------------
# Pipeline builder
# ----------------------------------------------------------------------------
def make_pipeline(cfg: MelConfig, n_frames: int, n_iter: int = 32, momentum: float = 0.99):
    assert cfg.win_length == cfg.n_fft, "kernel assumes win_length == n_fft"
    n_fft, hop, nf, n_mels = cfg.n_fft, cfg.hop_length, cfg.n_stft, cfg.n_mels
    T = n_frames
    NF = _round_up(nf, 128)                     # lane-dense padded frequency dim
    out_len = (T - 1) * hop

    # --- mel filterbank pseudo-inverse (min-norm lstsq solution), transposed + padded
    fb = _melscale_fbanks(nf, 0.0, cfg.sr / 2.0, n_mels, cfg.sr)            # (nf, n_mels)
    P = np.linalg.pinv(fb.T)                                                # (nf, n_mels)
    pinvT = np.zeros((n_mels, NF), np.float64)
    pinvT[:, :nf] = P.T

    # --- periodic Hann window (torch.hann_window default)
    win = 0.5 - 0.5 * np.cos(2.0 * np.pi * np.arange(n_fft) / n_fft)

    # --- forward DFT basis (window baked in), [cos | sin] side-by-side: (n_fft, 2*NF)
    n = np.arange(n_fft)[:, None]
    k = np.arange(nf)[None, :]
    ang = 2.0 * np.pi * n * k / n_fft
    stft_basis = np.zeros((n_fft, 2 * NF), np.float64)
    stft_basis[:, :nf] = win[:, None] * np.cos(ang)
    stft_basis[:, NF:NF + nf] = -win[:, None] * np.sin(ang)

    # --- inverse DFT basis (onesided irfft 1/N + window), [re ; im] stacked: (2*NF, n_fft)
    wgt = np.ones(nf)
    wgt[1:-1] = 2.0
    istft_basis = np.zeros((2 * NF, n_fft), np.float64)
    istft_basis[:nf, :] = (wgt[:, None] * np.cos(ang.T)) / n_fft * win[None, :]
    istft_basis[NF:NF + nf, :] = (-wgt[:, None] * np.sin(ang.T)) / n_fft * win[None, :]

    # --- window^2 overlap-add envelope (torch.istft center=True normalization)
    L_full = n_fft + (T - 1) * hop
    env = np.zeros(L_full)
    for t in range(T):
        env[t * hop:t * hop + n_fft] += win ** 2
    pad = n_fft // 2
    env = env[pad:pad + out_len]
    # TODO(synk): no zero-envelope guard (torch.istft would raise); fine for this config.

    # --- exact linear operators for the in-kernel glue, built by probing with identity:
    #   W : flattened windowed-ISTFT frames -> waveform      (OLA + trim + /env)
    #   G : flattened windowed-ISTFT frames -> next STFT input frames (W + reflect-pad + frame)
    eye = np.eye(T * n_fft).reshape(T * n_fft, T, n_fft)
    Wmat = _np_overlap_add(eye, hop, env)                                   # (T*n_fft, out_len)
    Gmat = _np_frame(Wmat, n_fft, hop).reshape(T * n_fft, T * n_fft)        # (T*n_fft, T*n_fft)
    # TODO(synk): Gmat is (T*n_fft)^2; for long signals replace with an in-kernel banded
    # overlap-add (and shard batch over cores on v7x) instead of a dense operator.

    pinvT_d = jnp.asarray(pinvT, jnp.float32)
    istft_d = jnp.asarray(istft_basis, jnp.float32)
    G_d = jnp.asarray(Gmat, jnp.float32)
    stft_d = jnp.asarray(stft_basis, jnp.float32)
    W_d = jnp.asarray(Wmat, jnp.float32)

    momentum_c = float(momentum / (1.0 + momentum))
    # Lambda(mel/2*top_db) + DBToAmplitude(ref=1, power=1):  amp = 10 ** (0.1 * mel*top_db/2)
    db_scale = float(np.log(10.0) * 0.1 * cfg.top_db / 2.0)

    def build_call(B):
        kern = functools.partial(
            _fused_griffinlim_kernel, B=B, T=T, n_fft=n_fft, NF=NF,
            db_scale=db_scale, n_iter=n_iter, momentum_c=momentum_c)
        return pl.pallas_call(
            kern,
            out_shape=jax.ShapeDtypeStruct((B, out_len), jnp.float32),
            grid=(1,),
            in_specs=[
                pl.BlockSpec((B, T, n_mels), lambda i: (0, 0, 0)),
                pl.BlockSpec((n_mels, NF), lambda i: (0, 0)),
                pl.BlockSpec((2 * NF, n_fft), lambda i: (0, 0)),
                pl.BlockSpec((T * n_fft, T * n_fft), lambda i: (0, 0)),
                pl.BlockSpec((n_fft, 2 * NF), lambda i: (0, 0)),
                pl.BlockSpec((T * n_fft, out_len), lambda i: (0, 0)),
            ],
            out_specs=pl.BlockSpec((B, out_len), lambda i: (0, 0)),
            compiler_params=pltpu.CompilerParams(
                dimension_semantics=("arbitrary",),
                vmem_limit_bytes=48 * 1024 * 1024,
            ),
        )

    @jax.jit
    def forward(mel):
        # mel: (B, n_mels, T) float32, same layout as the PyTorch module input
        B = mel.shape[0]
        mel_t = jnp.transpose(mel.astype(jnp.float32), (0, 2, 1))           # (B, T, n_mels)
        call = build_call(B)
        return call(mel_t, pinvT_d, istft_d, G_d, stft_d, W_d)              # (B, out_len)

    return forward


# ----------------------------------------------------------------------------
if __name__ == "__main__":
    cfg = MelConfig()
    B, T = 2, 8
    forward = make_pipeline(cfg, n_frames=T, n_iter=32, momentum=0.99)

    key = jax.random.PRNGKey(0)
    mel = jax.random.uniform(key, (B, cfg.n_mels, T), dtype=jnp.float32,
                             minval=-1.0, maxval=0.0)

    wav = forward(mel)
    wav = jax.block_until_ready(wav)

    assert wav.shape == (B, (T - 1) * cfg.hop_length), wav.shape
    assert bool(jnp.all(jnp.isfinite(wav)))
    print("KERNEL_OK")
</pallas_src>

<mosaic_0001>
module attributes {stable_mosaic.version = 11 : i64} {
  func.func @_fused_griffinlim_kernel(%arg0: i32, %arg1: memref<2x8x16xf32, #tpu.memory_space<vmem>>, %arg2: memref<16x128xf32, #tpu.memory_space<vmem>>, %arg3: memref<256x128xf32, #tpu.memory_space<vmem>>, %arg4: memref<1024x1024xf32, #tpu.memory_space<vmem>>, %arg5: memref<128x256xf32, #tpu.memory_space<vmem>>, %arg6: memref<1024x224xf32, #tpu.memory_space<vmem>>, %arg7: memref<2x224xf32, #tpu.memory_space<vmem>>) attributes {dimension_semantics = [#tpu.dimension_semantics<arbitrary>], iteration_bounds = array<i64: 1>, scalar_prefetch = 0 : i64, scratch_operands = 0 : i64, tpu.core_type = #tpu.core_type<tc>, window_params = [{pipeline_mode = #tpu.pipeline_mode<synchronous>, transform_indices = @transform_0, window_bounds = array<i64: 2, 8, 16>}, {pipeline_mode = #tpu.pipeline_mode<synchronous>, transform_indices = @transform_1, window_bounds = array<i64: 16, 128>}, {pipeline_mode = #tpu.pipeline_mode<synchronous>, transform_indices = @transform_2, window_bounds = array<i64: 256, 128>}, {pipeline_mode = #tpu.pipeline_mode<synchronous>, transform_indices = @transform_3, window_bounds = array<i64: 1024, 1024>}, {pipeline_mode = #tpu.pipeline_mode<synchronous>, transform_indices = @transform_4, window_bounds = array<i64: 128, 256>}, {pipeline_mode = #tpu.pipeline_mode<synchronous>, transform_indices = @transform_5, window_bounds = array<i64: 1024, 224>}, {pipeline_mode = #tpu.pipeline_mode<synchronous>, transform_indices = @transform_6, window_bounds = array<i64: 2, 224>}]} {
    %c0 = arith.constant 0 : index
    %c0_0 = arith.constant 0 : index
    %c0_1 = arith.constant 0 : index
    %0 = vector.load %arg1[%c0, %c0_0, %c0_1] : memref<2x8x16xf32, #tpu.memory_space<vmem>>, vector<1x8x16xf32>
    %1 = vector.shape_cast %0 : vector<1x8x16xf32> to vector<8x16xf32>
    %c1 = arith.constant 1 : index
    %c0_2 = arith.constant 0 : index
    %c0_3 = arith.constant 0 : index
    %2 = vector.load %arg1[%c1, %c0_2, %c0_3] : memref<2x8x16xf32, #tpu.memory_space<vmem>>, vector<1x8x16xf32>
    %3 = vector.shape_cast %2 : vector<1x8x16xf32> to vector<8x16xf32>
    %4 = tpu.concatenate %1, %3 in 0 : vector<8x16xf32>, vector<8x16xf32> -> vector<16x16xf32>
    %cst = arith.constant 9.21034049 : f32
    %5 = vector.broadcast %cst : f32 to vector<16x16xf32>
    %6 = arith.mulf %4, %5 : vector<16x16xf32>
    %7 = math.exp %6 : vector<16x16xf32>
    %c0_4 = arith.constant 0 : index
    %c0_5 = arith.constant 0 : index
    %8 = vector.load %arg2[%c0_4, %c0_5] : memref<16x128xf32, #tpu.memory_space<vmem>>, vector<16x128xf32>
    %cst_6 = arith.constant dense<0.000000e+00> : vector<16x128xf32>
    %9 = tpu.matmul %7, %8, %cst_6 {dimension_numbers = #tpu.dot_dimension_numbers<[1], [0], [0], [1], [0, 0, 1, 1], [], []>} : vector<16x16xf32>, vector<16x128xf32>, vector<16x128xf32> -> vector<16x128xf32>
    %cst_7 = arith.constant 0.000000e+00 : f32
    %10 = vector.broadcast %cst_7 : f32 to vector<16x128xf32>
    %11 = arith.maximumf %9, %10 : vector<16x128xf32>
    %12 = math.sqrt %11 : vector<16x128xf32>
    %cst_8 = arith.constant 1.000000e+00 : f32
    %13 = vector.broadcast %cst_8 : f32 to vector<16x128xf32>
    %cst_9 = arith.constant 0.000000e+00 : f32
    %14 = vector.broadcast %cst_9 : f32 to vector<16x128xf32>
    %15 = tpu.concatenate %13, %14 in 1 : vector<16x128xf32>, vector<16x128xf32> -> vector<16x256xf32>
    %cst_10 = arith.constant 0.000000e+00 : f32
    %16 = vector.broadcast %cst_10 : f32 to vector<16x256xf32>
    %c0_i32 = arith.constant 0 : i32
    %c32_i32 = arith.constant 32 : i32
    %17 = arith.addi %c0_i32, %c32_i32 : i32
    %c1_i32 = arith.constant 1 : i32
    %18:2 = scf.for %arg8 = %c0_i32 to %17 step %c1_i32 iter_args(%arg9 = %15, %arg10 = %16) -> (vector<16x256xf32>, vector<16x256xf32>)  : i32 {
      %57 = vector.extract_strided_slice %arg9 {offsets = [0, 0], sizes = [16, 128], strides = [1, 1]} : vector<16x256xf32> to vector<16x128xf32>
      %58 = vector.extract_strided_slice %arg9 {offsets = [0, 128], sizes = [16, 128], strides = [1, 1]} : vector<16x256xf32> to vector<16x128xf32>
      %59 = arith.mulf %57, %57 : vector<16x128xf32>
      %60 = arith.mulf %58, %58 : vector<16x128xf32>
      %61 = arith.addf %59, %60 : vector<16x128xf32>
      %62 = math.sqrt %61 : vector<16x128xf32>
      %cst_20 = arith.constant 1.000000e-16 : f32
      %63 = vector.broadcast %cst_20 : f32 to vector<16x128xf32>
      %64 = arith.addf %62, %63 : vector<16x128xf32>
      %65 = tpu.reciprocal %64 {approx = true} : vector<16x128xf32> -> vector<16x128xf32>
      %66 = arith.mulf %12, %57 : vector<16x128xf32>
      %67 = arith.mulf %66, %65 : vector<16x128xf32>
      %68 = arith.mulf %12, %58 : vector<16x128xf32>
      %69 = arith.mulf %68, %65 : vector<16x128xf32>
      %70 = tpu.concatenate %67, %69 in 1 : vector<16x128xf32>, vector<16x128xf32> -> vector<16x256xf32>
      %c0_21 = arith.constant 0 : index
      %c0_22 = arith.constant 0 : index
      %71 = vector.load %arg3[%c0_21, %c0_22] : memref<256x128xf32, #tpu.memory_space<vmem>>, vector<256x128xf32>
      %cst_23 = arith.constant dense<0.000000e+00> : vector<16x128xf32>
      %72 = tpu.matmul %70, %71, %cst_23 {dimension_numbers = #tpu.dot_dimension_numbers<[1], [0], [0], [1], [0, 0, 1, 1], [], []>} : vector<16x256xf32>, vector<256x128xf32>, vector<16x128xf32> -> vector<16x128xf32>
      %73 = vector.extract_strided_slice %72 {offsets = [0, 0], sizes = [1, 128], strides = [1, 1]} : vector<16x128xf32> to vector<1x128xf32>
      %74 = vector.extract_strided_slice %72 {offsets = [1, 0], sizes = [1, 128], strides = [1, 1]} : vector<16x128xf32> to vector<1x128xf32>
      %75 = vector.extract_strided_slice %72 {offsets = [2, 0], sizes = [1, 128], strides = [1, 1]} : vector<16x128xf32> to vector<1x128xf32>
      %76 = vector.extract_strided_slice %72 {offsets = [3, 0], sizes = [1, 128], strides = [1, 1]} : vector<16x128xf32> to vector<1x128xf32>
      %77 = vector.extract_strided_slice %72 {offsets = [4, 0], sizes = [1, 128], strides = [1, 1]} : vector<16x128xf32> to vector<1x128xf32>
      %78 = vector.extract_strided_slice %72 {offsets = [5, 0], sizes = [1, 128], strides = [1, 1]} : vector<16x128xf32> to vector<1x128xf32>
      %79 = vector.extract_strided_slice %72 {offsets = [6, 0], sizes = [1, 128], strides = [1, 1]} : vector<16x128xf32> to vector<1x128xf32>
      %80 = vector.extract_strided_slice %72 {offsets = [7, 0], sizes = [1, 128], strides = [1, 1]} : vector<16x128xf32> to vector<1x128xf32>
      %81 = tpu.concatenate %73, %74, %75, %76, %77, %78, %79, %80 in 1 : vector<1x128xf32>, vector<1x128xf32>, vector<1x128xf32>, vector<1x128xf32>, vector<1x128xf32>, vector<1x128xf32>, vector<1x128xf32>, vector<1x128xf32> -> vector<1x1024xf32>
      %82 = vector.extract_strided_slice %72 {offsets = [8, 0], sizes = [1, 128], strides = [1, 1]} : vector<16x128xf32> to vector<1x128xf32>
      %83 = vector.extract_strided_slice %72 {offsets = [9, 0], sizes = [1, 128], strides = [1, 1]} : vector<16x128xf32> to vector<1x128xf32>
      %84 = vector.extract_strided_slice %72 {offsets = [10, 0], sizes = [1, 128], strides = [1, 1]} : vector<16x128xf32> to vector<1x128xf32>
      %85 = vector.extract_strided_slice %72 {offsets = [11, 0], sizes = [1, 128], strides = [1, 1]} : vector<16x128xf32> to vector<1x128xf32>
      %86 = vector.extract_strided_slice %72 {offsets = [12, 0], sizes = [1, 128], strides = [1, 1]} : vector<16x128xf32> to vector<1x128xf32>
      %87 = vector.extract_strided_slice %72 {offsets = [13, 0], sizes = [1, 128], strides = [1, 1]} : vector<16x128xf32> to vector<1x128xf32>
      %88 = vector.extract_strided_slice %72 {offsets = [14, 0], sizes = [1, 128], strides = [1, 1]} : vector<16x128xf32> to vector<1x128xf32>
      %89 = vector.extract_strided_slice %72 {offsets = [15, 0], sizes = [1, 128], strides = [1, 1]} : vector<16x128xf32> to vector<1x128xf32>
      %90 = tpu.concatenate %82, %83, %84, %85, %86, %87, %88, %89 in 1 : vector<1x128xf32>, vector<1x128xf32>, vector<1x128xf32>, vector<1x128xf32>, vector<1x128xf32>, vector<1x128xf32>, vector<1x128xf32>, vector<1x128xf32> -> vector<1x1024xf32>
      %91 = tpu.concatenate %81, %90 in 0 : vector<1x1024xf32>, vector<1x1024xf32> -> vector<2x1024xf32>
      %c0_24 = arith.constant 0 : index
      %c0_25 = arith.constant 0 : index
      %92 = vector.load %arg4[%c0_24, %c0_25] : memref<1024x1024xf32, #tpu.memory_space<vmem>>, vector<1024x1024xf32>
      %cst_26 = arith.constant dense<0.000000e+00> : vector<2x1024xf32>
      %93 = tpu.matmul %91, %92, %cst_26 {dimension_numbers = #tpu.dot_dimension_numbers<[1], [0], [0], [1], [0, 0, 1, 1], [], []>} : vector<2x1024xf32>, vector<1024x1024xf32>, vector<2x1024xf32> -> vector<2x1024xf32>
      %94 = vector.extract_strided_slice %93 {offsets = [0, 0], sizes = [1, 128], strides = [1, 1]} : vector<2x1024xf32> to vector<1x128xf32>
      %95 = vector.extract_strided_slice %93 {offsets = [0, 128], sizes = [1, 128], strides = [1, 1]} : vector<2x1024xf32> to vector<1x128xf32>
      %96 = vector.extract_strided_slice %93 {offsets = [0, 256], sizes = [1, 128], strides = [1, 1]} : vector<2x1024xf32> to vector<1x128xf32>
      %97 = vector.extract_strided_slice %93 {offsets = [0, 384], sizes = [1, 128], strides = [1, 1]} : vector<2x1024xf32> to vector<1x128xf32>
      %98 = vector.extract_strided_slice %93 {offsets = [0, 512], sizes = [1, 128], strides = [1, 1]} : vector<2x1024xf32> to vector<1x128xf32>
      %99 = vector.extract_strided_slice %93 {offsets = [0, 640], sizes = [1, 128], strides = [1, 1]} : vector<2x1024xf32> to vector<1x128xf32>
      %100 = vector.extract_strided_slice %93 {offsets = [0, 768], sizes = [1, 128], strides = [1, 1]} : vector<2x1024xf32> to vector<1x128xf32>
      %101 = vector.extract_strided_slice %93 {offsets = [0, 896], sizes = [1, 128], strides = [1, 1]} : vector<2x1024xf32> to vector<1x128xf32>
      %102 = vector.extract_strided_slice %93 {offsets = [1, 0], sizes = [1, 128], strides = [1, 1]} : vector<2x1024xf32> to vector<1x128xf32>
      %103 = vector.extract_strided_slice %93 {offsets = [1, 128], sizes = [1, 128], strides = [1, 1]} : vector<2x1024xf32> to vector<1x128xf32>
      %104 = vector.extract_strided_slice %93 {offsets = [1, 256], sizes = [1, 128], strides = [1, 1]} : vector<2x1024xf32> to vector<1x128xf32>
      %105 = vector.extract_strided_slice %93 {offsets = [1, 384], sizes = [1, 128], strides = [1, 1]} : vector<2x1024xf32> to vector<1x128xf32>
      %106 = vector.extract_strided_slice %93 {offsets = [1, 512], sizes = [1, 128], strides = [1, 1]} : vector<2x1024xf32> to vector<1x128xf32>
      %107 = vector.extract_strided_slice %93 {offsets = [1, 640], sizes = [1, 128], strides = [1, 1]} : vector<2x1024xf32> to vector<1x128xf32>
      %108 = vector.extract_strided_slice %93 {offsets = [1, 768], sizes = [1, 128], strides = [1, 1]} : vector<2x1024xf32> to vector<1x128xf32>
      %109 = vector.extract_strided_slice %93 {offsets = [1, 896], sizes = [1, 128], strides = [1, 1]} : vector<2x1024xf32> to vector<1x128xf32>
      %110 = tpu.concatenate %94, %95, %96, %97, %98, %99, %100, %101, %102, %103, %104, %105, %106, %107, %108, %109 in 0 : vector<1x128xf32>, vector<1x128xf32>, vector<1x128xf32>, vector<1x128xf32>, vector<1x128xf32>, vector<1x128xf32>, vector<1x128xf32>, vector<1x128xf32>, vector<1x128xf32>, vector<1x128xf32>, vector<1x128xf32>, vector<1x128xf32>, vector<1x128xf32>, vector<1x128xf32>, vector<1x128xf32>, vector<1x128xf32> -> vector<16x128xf32>
      %c0_27 = arith.constant 0 : index
      %c0_28 = arith.constant 0 : index
      %111 = vector.load %arg5[%c0_27, %c0_28] : memref<128x256xf32, #tpu.memory_space<vmem>>, vector<128x256xf32>
      %cst_29 = arith.constant dense<0.000000e+00> : vector<16x256xf32>
      %112 = tpu.matmul %110, %111, %cst_29 {dimension_numbers = #tpu.dot_dimension_numbers<[1], [0], [0], [1], [0, 0, 1, 1], [], []>} : vector<16x128xf32>, vector<128x256xf32>, vector<16x256xf32> -> vector<16x256xf32>
      %cst_30 = arith.constant 0.497487426 : f32
      %113 = vector.broadcast %cst_30 : f32 to vector<16x256xf32>
      %114 = arith.mulf %113, %arg10 : vector<16x256xf32>
      %115 = arith.subf %112, %114 : vector<16x256xf32>
      scf.yield %115, %112 : vector<16x256xf32>, vector<16x256xf32>
    }
    %19 = vector.extract_strided_slice %18#0 {offsets = [0, 0], sizes = [16, 128], strides = [1, 1]} : vector<16x256xf32> to vector<16x128xf32>
    %20 = vector.extract_strided_slice %18#0 {offsets = [0, 128], sizes = [16, 128], strides = [1, 1]} : vector<16x256xf32> to vector<16x128xf32>
    %21 = arith.mulf %19, %19 : vector<16x128xf32>
    %22 = arith.mulf %20, %20 : vector<16x128xf32>
    %23 = arith.addf %21, %22 : vector<16x128xf32>
    %24 = math.sqrt %23 : vector<16x128xf32>
    %cst_11 = arith.constant 1.000000e-16 : f32
    %25 = vector.broadcast %cst_11 : f32 to vector<16x128xf32>
    %26 = arith.addf %24, %25 : vector<16x128xf32>
    %27 = tpu.reciprocal %26 {approx = true} : vector<16x128xf32> -> vector<16x128xf32>
    %28 = arith.mulf %12, %19 : vector<16x128xf32>
    %29 = arith.mulf %28, %27 : vector<16x128xf32>
    %30 = arith.mulf %12, %20 : vector<16x128xf32>
    %31 = arith.mulf %30, %27 : vector<16x128xf32>
    %32 = tpu.concatenate %29, %31 in 1 : vector<16x128xf32>, vector<16x128xf32> -> vector<16x256xf32>
    %c0_12 = arith.constant 0 : index
    %c0_13 = arith.constant 0 : index
    %33 = vector.load %arg3[%c0_12, %c0_13] : memref<256x128xf32, #tpu.memory_space<vmem>>, vector<256x128xf32>
    %cst_14 = arith.constant dense<0.000000e+00> : vector<16x128xf32>
    %34 = tpu.matmul %32, %33, %cst_14 {dimension_numbers = #tpu.dot_dimension_numbers<[1], [0], [0], [1], [0, 0, 1, 1], [], []>} : vector<16x256xf32>, vector<256x128xf32>, vector<16x128xf32> -> vector<16x128xf32>
    %35 = vector.extract_strided_slice %34 {offsets = [0, 0], sizes = [1, 128], strides = [1, 1]} : vector<16x128xf32> to vector<1x128xf32>
    %36 = vector.extract_strided_slice %34 {offsets = [1, 0], sizes = [1, 128], strides = [1, 1]} : vector<16x128xf32> to vector<1x128xf32>
    %37 = vector.extract_strided_slice %34 {offsets = [2, 0], sizes = [1, 128], strides = [1, 1]} : vector<16x128xf32> to vector<1x128xf32>
    %38 = vector.extract_strided_slice %34 {offsets = [3, 0], sizes = [1, 128], strides = [1, 1]} : vector<16x128xf32> to vector<1x128xf32>
    %39 = vector.extract_strided_slice %34 {offsets = [4, 0], sizes = [1, 128], strides = [1, 1]} : vector<16x128xf32> to vector<1x128xf32>
    %40 = vector.extract_strided_slice %34 {offsets = [5, 0], sizes = [1, 128], strides = [1, 1]} : vector<16x128xf32> to vector<1x128xf32>
    %41 = vector.extract_strided_slice %34 {offsets = [6, 0], sizes = [1, 128], strides = [1, 1]} : vector<16x128xf32> to vector<1x128xf32>
    %42 = vector.extract_strided_slice %34 {offsets = [7, 0], sizes = [1, 128], strides = [1, 1]} : vector<16x128xf32> to vector<1x128xf32>
    %43 = tpu.concatenate %35, %36, %37, %38, %39, %40, %41, %42 in 1 : vector<1x128xf32>, vector<1x128xf32>, vector<1x128xf32>, vector<1x128xf32>, vector<1x128xf32>, vector<1x128xf32>, vector<1x128xf32>, vector<1x128xf32> -> vector<1x1024xf32>
    %44 = vector.extract_strided_slice %34 {offsets = [8, 0], sizes = [1, 128], strides = [1, 1]} : vector<16x128xf32> to vector<1x128xf32>
    %45 = vector.extract_strided_slice %34 {offsets = [9, 0], sizes = [1, 128], strides = [1, 1]} : vector<16x128xf32> to vector<1x128xf32>
    %46 = vector.extract_strided_slice %34 {offsets = [10, 0], sizes = [1, 128], strides = [1, 1]} : vector<16x128xf32> to vector<1x128xf32>
    %47 = vector.extract_strided_slice %34 {offsets = [11, 0], sizes = [1, 128], strides = [1, 1]} : vector<16x128xf32> to vector<1x128xf32>
    %48 = vector.extract_strided_slice %34 {offsets = [12, 0], sizes = [1, 128], strides = [1, 1]} : vector<16x128xf32> to vector<1x128xf32>
    %49 = vector.extract_strided_slice %34 {offsets = [13, 0], sizes = [1, 128], strides = [1, 1]} : vector<16x128xf32> to vector<1x128xf32>
    %50 = vector.extract_strided_slice %34 {offsets = [14, 0], sizes = [1, 128], strides = [1, 1]} : vector<16x128xf32> to vector<1x128xf32>
    %51 = vector.extract_strided_slice %34 {offsets = [15, 0], sizes = [1, 128], strides = [1, 1]} : vector<16x128xf32> to vector<1x128xf32>
    %52 = tpu.concatenate %44, %45, %46, %47, %48, %49, %50, %51 in 1 : vector<1x128xf32>, vector<1x128xf32>, vector<1x128xf32>, vector<1x128xf32>, vector<1x128xf32>, vector<1x128xf32>, vector<1x128xf32>, vector<1x128xf32> -> vector<1x1024xf32>
    %53 = tpu.concatenate %43, %52 in 0 : vector<1x1024xf32>, vector<1x1024xf32> -> vector<2x1024xf32>
    %c0_15 = arith.constant 0 : index
    %c0_16 = arith.constant 0 : index
    %54 = vector.load %arg6[%c0_15, %c0_16] : memref<1024x224xf32, #tpu.memory_space<vmem>>, vector<1024x224xf32>
    %cst_17 = arith.constant dense<0.000000e+00> : vector<2x224xf32>
    %55 = tpu.matmul %53, %54, %cst_17 {dimension_numbers = #tpu.dot_dimension_numbers<[1], [0], [0], [1], [0, 0, 1, 1], [], []>} : vector<2x1024xf32>, vector<1024x224xf32>, vector<2x224xf32> -> vector<2x224xf32>
    %c0_18 = arith.constant 0 : index
    %c0_19 = arith.constant 0 : index
    %56 = vector.load %arg7[%c0_18, %c0_19] : memref<2x224xf32, #tpu.memory_space<vmem>>, vector<2x224xf32>
    tpu.vector_store %arg7[%c0_18, %c0_19], %55 {strides = array<i32>} : memref<2x224xf32, #tpu.memory_space<vmem>>, vector<2x224xf32>,
    return
  }
  func.func @transform_0(%arg0: i32) -> (i32, i32, i32) {
    %c0_i32 = arith.constant 0 : i32
    %c0_i32_0 = arith.constant 0 : i32
    %c0_i32_1 = arith.constant 0 : i32
    %c0_i32_2 = arith.constant 0 : i32
    return %c0_i32, %c0_i32_0, %c0_i32_1 : i32, i32, i32
  }
  func.func @transform_1(%arg0: i32) -> (i32, i32) {
    %c0_i32 = arith.constant 0 : i32
    %c0_i32_0 = arith.constant 0 : i32
    %c0_i32_1 = arith.constant 0 : i32
    return %c0_i32, %c0_i32_0 : i32, i32
  }
  func.func @transform_2(%arg0: i32) -> (i32, i32) {
    %c0_i32 = arith.constant 0 : i32
    %c0_i32_0 = arith.constant 0 : i32
    %c0_i32_1 = arith.constant 0 : i32
    return %c0_i32, %c0_i32_0 : i32, i32
  }
  func.func @transform_3(%arg0: i32) -> (i32, i32) {
    %c0_i32 = arith.constant 0 : i32
    %c0_i32_0 = arith.constant 0 : i32
    %c0_i32_1 = arith.constant 0 : i32
    return %c0_i32, %c0_i32_0 : i32, i32
  }
  func.func @transform_4(%arg0: i32) -> (i32, i32) {
    %c0_i32 = arith.constant 0 : i32
    %c0_i32_0 = arith.constant 0 : i32
    %c0_i32_1 = arith.constant 0 : i32
    return %c0_i32, %c0_i32_0 : i32, i32
  }
  func.func @transform_5(%arg0: i32) -> (i32, i32) {
    %c0_i32 = arith.constant 0 : i32
    %c0_i32_0 = arith.constant 0 : i32
    %c0_i32_1 = arith.constant 0 : i32
    return %c0_i32, %c0_i32_0 : i32, i32
  }
  func.func @transform_6(%arg0: i32) -> (i32, i32) {
    %c0_i32 = arith.constant 0 : i32
    %c0_i32_0 = arith.constant 0 : i32
    %c0_i32_1 = arith.constant 0 : i32
    return %c0_i32, %c0_i32_0 : i32, i32
  }
}

</mosaic_0001>

<llo_original>
// kernel: forward.1
$region0: #{forward.1}
  #allocation0 [shape = 'u32[]', space=smem, size = 0x4, offset = 0x4, fixed_abs, tag = 'smem constant byte address 0x4 - core index']
  #allocation1 [shape = 'u32[144,128]{1,0:T(1,128)}', space=vmem, size = 0x12000, scoped, tag = 'internal scratch']
  %s0 = inlined_call_operand.hbm [shape: f32[2,8,16], index: 0, kind: input, shape index: {}]
  %s1 = inlined_call_operand.hbm [shape: f32[16,128], index: 1, kind: input, shape index: {}]
  %s2 = inlined_call_operand.hbm [shape: f32[256,128], index: 2, kind: input, shape index: {}]
  %s3 = inlined_call_operand.hbm [shape: f32[1024,1024], index: 3, kind: input, shape index: {}]
  %s4 = inlined_call_operand.hbm [shape: f32[128,256], index: 4, kind: input, shape index: {}]
  %s5 = inlined_call_operand.hbm [shape: f32[1024,224], index: 5, kind: input, shape index: {}]
  %s6 = inlined_call_operand.hbm [shape: f32[2,224], index: 6, kind: output, shape index: {}]
  %s7 = sld [smem:[#allocation0]]
  $region65: #{forward.1} parent=0
    _
  %s9 = ssub.s32 1, %s7
  %s10 = scalar_select 0, %s9, %s7
  $region1: #{forward.1} parent=0
    #allocation2 [shape = 'u8[8192]{0}', space=vmem, size = 0x2000, scoped, tag = 'input window, operand 0, single buffered']
    #allocation3 [shape = 's32[1]{0}', space=sflag, size = 0x4, scoped, tag = 'scoped memory for forward.1']
    #allocation4 [shape = 's32[1]{0}', space=sflag, size = 0x4, scoped, tag = 'scoped memory for forward.1']
    #allocation5 [shape = 'u8[8192]{0}', space=vmem, size = 0x2000, scoped, tag = 'input window, operand 1, single buffered']
    #allocation6 [shape = 's32[1]{0}', space=sflag, size = 0x4, scoped, tag = 'scoped memory for forward.1']
    #allocation7 [shape = 'u8[131072]{0}', space=vmem, size = 0x20000, scoped, tag = 'input window, operand 2, single buffered']
    #allocation8 [shape = 'u8[4194304]{0}', space=vmem, size = 0x400000, scoped, tag = 'input window, operand 3, single buffered']
    #allocation9 [shape = 's32[1]{0}', space=sflag, size = 0x4, scoped, tag = 'scoped memory for forward.1']
    #allocation10 [shape = 'u8[131072]{0}', space=vmem, size = 0x20000, scoped, tag = 'input window, operand 4, single buffered']
    #allocation11 [shape = 'u8[1048576]{0}', space=vmem, size = 0x100000, scoped, tag = 'input window, operand 5, single buffered']
    #allocation12 [shape = 's32[1]{0}', space=sflag, size = 0x4, scoped, tag = 'scoped memory for forward.1']
    #allocation13 [shape = 'u8[2048]{0}', space=vmem, size = 0x800, scoped, tag = 'output window, operand 0, single buffered']
    %11 = vsyncpa [#allocation3], 0
    %12 = vsyncpa [#allocation6], 0
    %13 = vsyncpa [#allocation9], 0
    %14 = vsyncpa [#allocation12], 0
    %15 = vsyncpa [#allocation4], 0
    // Predicated region
    $region2: #{forward.1} parent=1 // pred_check
      _
    $region3: #{forward.1} parent=1 // pred_check_branch
      %17 = sbr.rel (0) target = $region5
    $region4: #{forward.1} parent=1 // pred_region
      %s19 = ssub.s32 256, 256
      %20 = vsyncadd [#allocation3], %s19
      %s21 = sshll.u32 [#allocation2], 4
      %s22 = int_to_ptr.vmem [resolvable:$true] %s21
      %27 = dma.hbm_to_vmem [thread:$0]  %s0, 256, %s22, [#allocation3], 128, 128, 8
    $region5: #{forward.1} parent=1 // pred_fallthru
      _
    // Predicated region
    $region6: #{forward.1} parent=1 // pred_check
      _
    $region7: #{forward.1} parent=1 // pred_check_branch
      %29 = sbr.rel (0) target = $region9
    $region8: #{forward.1} parent=1 // pred_region
      %s31 = ssub.s32 256, 256
      %32 = vsyncadd [#allocation6], %s31
      %s33 = sshll.u32 [#allocation5], 4
      %s34 = int_to_ptr.vmem [resolvable:$true] %s33
      %39 = dma.hbm_to_vmem [thread:$0]  %s1, 256, %s34, [#allocation6], 128, 128, 8
    $region9: #{forward.1} parent=1 // pred_fallthru
      _
    // Predicated region
    $region10: #{forward.1} parent=1 // pred_check
      _
    $region11: #{forward.1} parent=1 // pred_check_branch
      %41 = sbr.rel (0) target = $region13
    $region12: #{forward.1} parent=1 // pred_region
      %s43 = ssub.s32 4096, 4096
      %44 = vsyncadd [#allocation6], %s43
      %s45 = sshll.u32 [#allocation7], 4
      %s46 = int_to_ptr.vmem [resolvable:$true] %s45
      %51 = dma.hbm_to_vmem [thread:$0]  %s2, 4096, %s46, [#allocation6], 128, 128, 8
    $region13: #{forward.1} parent=1 // pred_fallthru
      _
    // Predicated region
    $region14: #{forward.1} parent=1 // pred_check
      _
    $region15: #{forward.1} parent=1 // pred_check_branch
      %53 = sbr.rel (0) target = $region17
    $region16: #{forward.1} parent=1 // pred_region
      %s55 = ssub.s32 131072, 131072
      %56 = vsyncadd [#allocation9], %s55
      %s57 = sshll.u32 [#allocation8], 4
      %s58 = int_to_ptr.vmem [resolvable:$true] %s57
      %63 = dma.hbm_to_vmem [thread:$0]  %s3, 131072, %s58, [#allocation9], 1024, 1024, 64
    $region17: #{forward.1} parent=1 // pred_fallthru
      _
    // Predicated region
    $region18: #{forward.1} parent=1 // pred_check
      _
    $region19: #{forward.1} parent=1 // pred_check_branch
      %65 = sbr.rel (0) target = $region21
    $region20: #{forward.1} parent=1 // pred_region
      %s67 = ssub.s32 4096, 4096
      %68 = vsyncadd [#allocation9], %s67
      %s69 = sshll.u32 [#allocation10], 4
      %s70 = int_to_ptr.vmem [resolvable:$true] %s69
      %75 = dma.hbm_to_vmem [thread:$0]  %s4, 4096, %s70, [#allocation9], 256, 256, 16
    $region21: #{forward.1} parent=1 // pred_fallthru
      _
    // Predicated region
    $region22: #{forward.1} parent=1 // pred_check
      _
    $region23: #{forward.1} parent=1 // pred_check_branch
      %77 = sbr.rel (0) target = $region25
    $region24: #{forward.1} parent=1 // pred_region
      %s79 = ssub.s32 32768, 32768
      %80 = vsyncadd [#allocation12], %s79
      %s81 = sshll.u32 [#allocation11], 4
      %s82 = int_to_ptr.vmem [resolvable:$true] %s81
      %87 = dma.hbm_to_vmem [thread:$0]  %s5, 32768, %s82, [#allocation12], 256, 256, 16
    $region25: #{forward.1} parent=1 // pred_fallthru
      _
    // Predicated region
    $region26: #{forward.1} parent=1 // pred_check
      _
    $region27: #{forward.1} parent=1 // pred_check_branch
      %89 = sbr.rel (0) target = $region29
    $region28: #{forward.1} parent=1 // pred_region
      %90 = dma.done [#allocation3], 256
    $region29: #{forward.1} parent=1 // pred_fallthru
      _
    // Predicated region
    $region30: #{forward.1} parent=1 // pred_check
      _
    $region31: #{forward.1} parent=1 // pred_check_branch
      %92 = sbr.rel (0) target = $region33
    $region32: #{forward.1} parent=1 // pred_region
      %93 = dma.done [#allocation6], 256
    $region33: #{forward.1} parent=1 // pred_fallthru
      _
    // Predicated region
    $region34: #{forward.1} parent=1 // pred_check
      _
    $region35: #{forward.1} parent=1 // pred_check_branch
      %95 = sbr.rel (0) target = $region37
    $region36: #{forward.1} parent=1 // pred_region
      %96 = dma.done [#allocation6], 4096
    $region37: #{forward.1} parent=1 // pred_fallthru
      _
    // Predicated region
    $region38: #{forward.1} parent=1 // pred_check
      _
    $region39: #{forward.1} parent=1 // pred_check_branch
      %98 = sbr.rel (0) target = $region41
    $region40: #{forward.1} parent=1 // pred_region
      %99 = dma.done [#allocation9], 131072
    $region41: #{forward.1} parent=1 // pred_fallthru
      _
    // Predicated region
    $region42: #{forward.1} parent=1 // pred_check
      _
    $region43: #{forward.1} parent=1 // pred_check_branch
      %101 = sbr.rel (0) target = $region45
    $region44: #{forward.1} parent=1 // pred_region
      %102 = dma.done [#allocation9], 4096
    $region45: #{forward.1} parent=1 // pred_fallthru
      _
    // Predicated region
    $region46: #{forward.1} parent=1 // pred_check
      _
    $region47: #{forward.1} parent=1 // pred_check_branch
      %104 = sbr.rel (0) target = $region49
    $region48: #{forward.1} parent=1 // pred_region
      %105 = dma.done [#allocation12], 32768
    $region49: #{forward.1} parent=1 // pred_fallthru
      _
    %v106 = vld [vmem:[#allocation2] sm:$0xff]
    %s107 = scalar_lea.vmem [#allocation2], 8
    %v108 = vld [vmem:[%s107] sm:$0xff]
    %v109 = vmul.f32 %v106, 9.2103405
    %v110 = vmul.f32 %v108, 9.2103405
    %v111 = vmul.f32 %v109, 1.442695
    %v112 = vpow.pop %v111
    %v113 = vmul.f32 %v110, 1.442695
    %v114 = vpow.pop %v113
    %v115 = vld [vmem:[#allocation5] sm:$0xff]
    %v116 = vld [vmem:[#allocation5 + $0x8] sm:$0xff]
    %vm117 = vcmask 130048
    %v119 = vsel %vm117, %v112, 0
    %v122 = vsel %vm117, %v114, 0
    %124 = vmatprep.subr.mxu0 0.0
    %125 = vmatpush1.msra.mxu0 0.0
    %126 = vmatprep.subr.mxu0 0.0
    %127 = vmatpush1.msra.mxu0 0.0
    %128 = vmatprep.subr.mxu0 0.0
    %129 = vmatpush1.msra.mxu0 0.0
    %130 = vmatprep.subr.mxu0 0.0
    %131 = vmatpush1.msra.mxu0 0.0
    %132 = vmatprep.subr.mxu0 0.0
    %133 = vmatpush1.msra.mxu0 0.0
    %134 = vmatprep.subr.mxu0 0.0
    %135 = vmatpush1.msra.mxu0 0.0
    %136 = vmatprep.subr.mxu0 0.0
    %137 = vmatpush1.msra.mxu0 0.0
    %138 = vmatprep.subr.mxu0 0.0
    %139 = vmatpush1.msra.mxu0 0.0
    %140 = vmatprep.subr.mxu0 0.0
    %141 = vmatpush1.msra.mxu0 0.0
    %142 = vmatprep.subr.mxu0 0.0
    %143 = vmatpush1.msra.mxu0 0.0
    %144 = vmatprep.subr.mxu0 0.0
    %145 = vmatpush1.msra.mxu0 0.0
    %146 = vmatprep.subr.mxu0 0.0
    %147 = vmatpush1.msra.mxu0 0.0
    %148 = vmatprep.subr.mxu0 0.0
    %149 = vmatpush1.msra.mxu0 0.0
    %150 = vmatprep.subr.mxu0 0.0
    %151 = vmatpush1.msra.mxu0 0.0
    %152 = vmatprep.subr.mxu0 0.0
    %153 = vmatpush1.msra.mxu0 %v116
    %154 = vmatprep.subr.mxu0 0.0
    %155 = vmatpush1.msra.mxu0 %v115
    %156 = vmatprep.subr.mxu0 0.0
    %157 = vmatpush2.msra.mxu0 0.0
    %158 = vmatprep.subr.mxu0 0.0
    %159 = vmatpush2.msra.mxu0 0.0
    %160 = vmatprep.subr.mxu0 0.0
    %161 = vmatpush2.msra.mxu0 0.0
    %162 = vmatprep.subr.mxu0 0.0
    %163 = vmatpush2.msra.mxu0 0.0
    %164 = vmatprep.subr.mxu0 0.0
    %165 = vmatpush2.msra.mxu0 0.0
    %166 = vmatprep.subr.mxu0 0.0
    %167 = vmatpush2.msra.mxu0 0.0
    %168 = vmatprep.subr.mxu0 0.0
    %169 = vmatpush2.msra.mxu0 0.0
    %170 = vmatprep.subr.mxu0 0.0
    %171 = vmatpush2.msra.mxu0 0.0
    %172 = vmatprep.subr.mxu0 0.0
    %173 = vmatpush2.msra.mxu0 0.0
    %174 = vmatprep.subr.mxu0 0.0
    %175 = vmatpush2.msra.mxu0 0.0
    %176 = vmatprep.subr.mxu0 0.0
    %177 = vmatpush2.msra.mxu0 0.0
    %178 = vmatprep.subr.mxu0 0.0
    %179 = vmatpush2.msra.mxu0 0.0
    %180 = vmatprep.subr.mxu0 0.0
    %181 = vmatpush2.msra.mxu0 0.0
    %182 = vmatprep.subr.mxu0 0.0
    %183 = vmatpush2.msra.mxu0 0.0
    %184 = vmatprep.subr.mxu0 0.0
    %185 = vmatpush2.msra.mxu0 0.0
    %186 = vmatprep.subr.mxu0 0.0
    %187 = vmatpush2.msra.mxu0 0.0
    %188 = vmatprep.mubr.f32.mxu0 0.0
    %189 = vmatmul.mubr.f32.gmra.mxu0 %v119
    %v190 = vpop.f32.mrf.mxu0
    %v191 = vadd.f32 0.0, %v190
    %v192 = vpop.f32.mrf.mxu0
    %193 = vmatprep.mubr.f32.mxu0 0.0
    %194 = vmatmul.mubr.f32.gmra.mxu0 %v122
    %v195 = vpop.f32.mrf.mxu0
    %v196 = vadd.f32 0.0, %v195
    %v197 = vpop.f32.mrf.mxu0
    %198 = vdwg.mxu0
    %v199 = vmax.f32 %v191, 0.0
    %v200 = vmax.f32 %v196, 0.0
    %v201 = vrsqrt.pop %v199
    %v202 = vmul.f32 %v199, %v201
    %vm203 = vcmp.eq.f32.partialorder %v199, inf
    %v204 = vsel %vm203, %v199, %v202
    %vm205 = vcmp.eq.f32.partialorder %v199, 0.0
    %v206 = vand.u32 %v199, 2147483648
    %v207 = vsel %vm205, %v206, %v204
    %v208 = vrsqrt.pop %v200
    %v209 = vmul.f32 %v200, %v208
    %vm210 = vcmp.eq.f32.partialorder %v200, inf
    %v211 = vsel %vm210, %v200, %v209
    %vm212 = vcmp.eq.f32.partialorder %v200, 0.0
    %v213 = vand.u32 %v200, 2147483648
    %v214 = vsel %vm212, %v213, %v211
    loop: start=0, step=1, limit=32
    $region50: #{forward.1} parent=1 // loop_pre_header
      _
    $region51: #{forward.1} parent=1 // loop_header
      %s216 = sphi 0, %s220
      %p217 = scmp.ge.s32.totalorder %s216, 32
      %v221 = vphi 1.0, %v2744
      %v222 = vphi 0.0, %v2745
      %v223 = vphi 1.0, %v2746
      %v224 = vphi 0.0, %v2747
      %v225 = vphi 0.0, %v2730
      %v226 = vphi 0.0, %v2732
      %v227 = vphi 0.0, %v2736
      %v228 = vphi 0.0, %v2738
    $region52: #{forward.1} parent=1 // loop_header_branch
      %219 = sbr.rel (%p217) target = $region56
    $region53: #{forward.1} parent=1 // loop_body
      %v229 = vmul.f32 %v221, %v221
      %v230 = vmul.f32 %v223, %v223
      %v231 = vmul.f32 %v222, %v222
      %v232 = vmul.f32 %v224, %v224
      %v233 = vadd.f32 %v229, %v231
      %v234 = vadd.f32 %v230, %v232
      %v235 = vrsqrt.pop %v233
      %v236 = vmul.f32 %v233, %v235
      %vm237 = vcmp.eq.f32.partialorder %v233, inf
      %v238 = vsel %vm237, %v233, %v236
      %vm239 = vcmp.eq.f32.partialorder %v233, 0.0
      %v240 = vand.u32 %v233, 2147483648
      %v241 = vsel %vm239, %v240, %v238
      %v242 = vrsqrt.pop %v234
      %v243 = vmul.f32 %v234, %v242
      %vm244 = vcmp.eq.f32.partialorder %v234, inf
      %v245 = vsel %vm244, %v234, %v243
      %vm246 = vcmp.eq.f32.partialorder %v234, 0.0
      %v247 = vand.u32 %v234, 2147483648
      %v248 = vsel %vm246, %v247, %v245
      %v249 = vadd.f32 %v241, 1e-16
      %v250 = vadd.f32 %v248, 1e-16
      %v251 = vrcp.pop %v249
      %v252 = vrcp.pop %v250
      %v253 = vmul.f32 %v207, %v221
      %v254 = vmul.f32 %v214, %v223
      %v255 = vmul.f32 %v253, %v251
      %v256 = vmul.f32 %v254, %v252
      %v257 = vmul.f32 %v207, %v222
      %v258 = vmul.f32 %v214, %v224
      %v259 = vmul.f32 %v257, %v251
      %v260 = vmul.f32 %v258, %v252
      %v261 = vld [vmem:[#allocation7] sm:$0xff]
      %v262 = vld [vmem:[#allocation7 + $0x8] sm:$0xff]
      %v263 = vld [vmem:[#allocation7 + $0x10] sm:$0xff]
      %v264 = vld [vmem:[#allocation7 + $0x18] sm:$0xff]
      %v265 = vld [vmem:[#allocation7 + $0x20] sm:$0xff]
      %v266 = vld [vmem:[#allocation7 + $0x28] sm:$0xff]
      %v267 = vld [vmem:[#allocation7 + $0x30] sm:$0xff]
      %v268 = vld [vmem:[#allocation7 + $0x38] sm:$0xff]
      %v269 = vld [vmem:[#allocation7 + $0x40] sm:$0xff]
      %v270 = vld [vmem:[#allocation7 + $0x48] sm:$0xff]
      %v271 = vld [vmem:[#allocation7 + $0x50] sm:$0xff]
      %v272 = vld [vmem:[#allocation7 + $0x58] sm:$0xff]
      %v273 = vld [vmem:[#allocation7 + $0x60] sm:$0xff]
      %v274 = vld [vmem:[#allocation7 + $0x68] sm:$0xff]
      %v275 = vld [vmem:[#allocation7 + $0x70] sm:$0xff]
      %v276 = vld [vmem:[#allocation7 + $0x78] sm:$0xff]
      %v277 = vld [vmem:[#allocation7 + $0x80] sm:$0xff]
      %v278 = vld [vmem:[#allocation7 + $0x88] sm:$0xff]
      %v279 = vld [vmem:[#allocation7 + $0x90] sm:$0xff]
      %v280 = vld [vmem:[#allocation7 + $0x98] sm:$0xff]
      %v281 = vld [vmem:[#allocation7 + $0xa0] sm:$0xff]
      %v282 = vld [vmem:[#allocation7 + $0xa8] sm:$0xff]
      %v283 = vld [vmem:[#allocation7 + $0xb0] sm:$0xff]
      %v284 = vld [vmem:[#allocation7 + $0xb8] sm:$0xff]
      %v285 = vld [vmem:[#allocation7 + $0xc0] sm:$0xff]
      %v286 = vld [vmem:[#allocation7 + $0xc8] sm:$0xff]
      %v287 = vld [vmem:[#allocation7 + $0xd0] sm:$0xff]
      %v288 = vld [vmem:[#allocation7 + $0xd8] sm:$0xff]
      %v289 = vld [vmem:[#allocation7 + $0xe0] sm:$0xff]
      %v290 = vld [vmem:[#allocation7 + $0xe8] sm:$0xff]
      %v291 = vld [vmem:[#allocation7 + $0xf0] sm:$0xff]
      %v292 = vld [vmem:[#allocation7 + $0xf8] sm:$0xff]
      %293 = vmatprep.subr.mxu0 0.0
      %294 = vmatpush1.msra.mxu0 %v276
      %295 = vmatprep.subr.mxu0 0.0
      %296 = vmatpush1.msra.mxu0 %v275
      %297 = vmatprep.subr.mxu0 0.0
      %298 = vmatpush1.msra.mxu0 %v274
      %299 = vmatprep.subr.mxu0 0.0
      %300 = vmatpush1.msra.mxu0 %v273
      %301 = vmatprep.subr.mxu0 0.0
      %302 = vmatpush1.msra.mxu0 %v272
      %303 = vmatprep.subr.mxu0 0.0
      %304 = vmatpush1.msra.mxu0 %v271
      %305 = vmatprep.subr.mxu0 0.0
      %306 = vmatpush1.msra.mxu0 %v270
      %307 = vmatprep.subr.mxu0 0.0
      %308 = vmatpush1.msra.mxu0 %v269
      %309 = vmatprep.subr.mxu0 0.0
      %310 = vmatpush1.msra.mxu0 %v268
      %311 = vmatprep.subr.mxu0 0.0
      %312 = vmatpush1.msra.mxu0 %v267
      %313 = vmatprep.subr.mxu0 0.0
      %314 = vmatpush1.msra.mxu0 %v266
      %315 = vmatprep.subr.mxu0 0.0
      %316 = vmatpush1.msra.mxu0 %v265
      %317 = vmatprep.subr.mxu0 0.0
      %318 = vmatpush1.msra.mxu0 %v264
      %319 = vmatprep.subr.mxu0 0.0
      %320 = vmatpush1.msra.mxu0 %v263
      %321 = vmatprep.subr.mxu0 0.0
      %322 = vmatpush1.msra.mxu0 %v262
      %323 = vmatprep.subr.mxu0 0.0
      %324 = vmatpush1.msra.mxu0 %v261
      %325 = vmatprep.subr.mxu0 0.0
      %326 = vmatpush2.msra.mxu0 %v292
      %327 = vmatprep.subr.mxu0 0.0
      %328 = vmatpush2.msra.mxu0 %v291
      %329 = vmatprep.subr.mxu0 0.0
      %330 = vmatpush2.msra.mxu0 %v290
      %331 = vmatprep.subr.mxu0 0.0
      %332 = vmatpush2.msra.mxu0 %v289
      %333 = vmatprep.subr.mxu0 0.0
      %334 = vmatpush2.msra.mxu0 %v288
      %335 = vmatprep.subr.mxu0 0.0
      %336 = vmatpush2.msra.mxu0 %v287
      %337 = vmatprep.subr.mxu0 0.0
      %338 = vmatpush2.msra.mxu0 %v286
      %339 = vmatprep.subr.mxu0 0.0
      %340 = vmatpush2.msra.mxu0 %v285
      %341 = vmatprep.subr.mxu0 0.0
      %342 = vmatpush2.msra.mxu0 %v284
      %343 = vmatprep.subr.mxu0 0.0
      %344 = vmatpush2.msra.mxu0 %v283
      %345 = vmatprep.subr.mxu0 0.0
      %346 = vmatpush2.msra.mxu0 %v282
      %347 = vmatprep.subr.mxu0 0.0
      %348 = vmatpush2.msra.mxu0 %v281
      %349 = vmatprep.subr.mxu0 0.0
      %350 = vmatpush2.msra.mxu0 %v280
      %351 = vmatprep.subr.mxu0 0.0
      %352 = vmatpush2.msra.mxu0 %v279
      %353 = vmatprep.subr.mxu0 0.0
      %354 = vmatpush2.msra.mxu0 %v278
      %355 = vmatprep.subr.mxu0 0.0
      %356 = vmatpush2.msra.mxu0 %v277
      %357 = vmatprep.mubr.f32.mxu0 %v259
      %358 = vmatmul.mubr.f32.gmra.mxu0 %v255
      %v359 = vpop.f32.mrf.mxu0
      %v360 = vadd.f32 0.0, %v359
      %v361 = vpop.f32.mrf.mxu0
      %362 = vmatprep.mubr.f32.mxu0 %v260
      %363 = vmatmul.mubr.f32.gmra.mxu0 %v256
      %v364 = vpop.f32.mrf.mxu0
      %v365 = vadd.f32 0.0, %v364
      %v366 = vpop.f32.mrf.mxu0
      %367 = vdwg.mxu0
      %v369 = vrot.slane %v360, 1
      %v371 = vrot.slane %v360, 2
      %v373 = vrot.slane %v360, 3
      %v375 = vrot.slane %v360, 4
      %v377 = vrot.slane %v360, 5
      %v379 = vrot.slane %v360, 6
      %v381 = vrot.slane %v360, 7
      %v384 = vrot.slane %v365, 1
      %v385 = vrot.slane %v365, 2
      %v386 = vrot.slane %v365, 3
      %v387 = vrot.slane %v365, 4
      %v388 = vrot.slane %v365, 5
      %v389 = vrot.slane %v365, 6
      %v390 = vrot.slane %v365, 7
      %v391 = vrot.slane %v384, 7
      %v392 = vrot.slane %v385, 7
      %v393 = vrot.slane %v386, 7
      %v394 = vrot.slane %v387, 7
      %v395 = vrot.slane %v388, 7
      %v396 = vrot.slane %v389, 7
      %v397 = vrot.slane %v390, 7
      %vm406 = vcmask 1040384
      %v407 = vsel %vm406, %v360, %v390
      %v408 = vsel %vm406, %v369, %v391
      %v409 = vsel %vm406, %v371, %v392
      %v410 = vsel %vm406, %v373, %v393
      %v411 = vsel %vm406, %v375, %v394
      %v412 = vsel %vm406, %v377, %v395
      %v413 = vsel %vm406, %v379, %v396
      %v414 = vsel %vm406, %v381, %v397
      %v415 = vld [vmem:[#allocation8] sm:$0xff]
      %v416 = vld [vmem:[#allocation8 + $0x8] sm:$0xff]
      %v417 = vld [vmem:[#allocation8 + $0x10] sm:$0xff]
      %v418 = vld [vmem:[#allocation8 + $0x18] sm:$0xff]
      %v419 = vld [vmem:[#allocation8 + $0x20] sm:$0xff]
      %v420 = vld [vmem:[#allocation8 + $0x28] sm:$0xff]
      %v421 = vld [vmem:[#allocation8 + $0x30] sm:$0xff]
      %v422 = vld [vmem:[#allocation8 + $0x38] sm:$0xff]
      %v423 = vld [vmem:[#allocation8 + $0x40] sm:$0xff]
      %v424 = vld [vmem:[#allocation8 + $0x48] sm:$0xff]
      %v425 = vld [vmem:[#allocation8 + $0x50] sm:$0xff]
      %v426 = vld [vmem:[#allocation8 + $0x58] sm:$0xff]
      %v427 = vld [vmem:[#allocation8 + $0x60] sm:$0xff]
      %v428 = vld [vmem:[#allocation8 + $0x68] sm:$0xff]
      %v429 = vld [vmem:[#allocation8 + $0x70] sm:$0xff]
      %v430 = vld [vmem:[#allocation8 + $0x78] sm:$0xff]
      %v431 = vld [vmem:[#allocation8 + $0x80] sm:$0xff]
      %v432 = vld [vmem:[#allocation8 + $0x88] sm:$0xff]
      %v433 = vld [vmem:[#allocation8 + $0x90] sm:$0xff]
      %v434 = vld [vmem:[#allocation8 + $0x98] sm:$0xff]
      %v435 = vld [vmem:[#allocation8 + $0xa0] sm:$0xff]
      %v436 = vld [vmem:[#allocation8 + $0xa8] sm:$0xff]
      %v437 = vld [vmem:[#allocation8 + $0xb0] sm:$0xff]
      %v438 = vld [vmem:[#allocation8 + $0xb8] sm:$0xff]
      %v439 = vld [vmem:[#allocation8 + $0xc0] sm:$0xff]
      %v440 = vld [vmem:[#allocation8 + $0xc8] sm:$0xff]
      %v441 = vld [vmem:[#allocation8 + $0xd0] sm:$0xff]
      %v442 = vld [vmem:[#allocation8 + $0xd8] sm:$0xff]
      %v443 = vld [vmem:[#allocation8 + $0xe0] sm:$0xff]
      %v444 = vld [vmem:[#allocation8 + $0xe8] sm:$0xff]
      %v445 = vld [vmem:[#allocation8 + $0xf0] sm:$0xff]
      %v446 = vld [vmem:[#allocation8 + $0xf8] sm:$0xff]
      %v447 = vld [vmem:[#allocation8 + $0x100] sm:$0xff]
      %v448 = vld [vmem:[#allocation8 + $0x108] sm:$0xff]
      %v449 = vld [vmem:[#allocation8 + $0x110] sm:$0xff]
      %v450 = vld [vmem:[#allocation8 + $0x118] sm:$0xff]
      %v451 = vld [vmem:[#allocation8 + $0x120] sm:$0xff]
      %v452 = vld [vmem:[#allocation8 + $0x128] sm:$0xff]
      %v453 = vld [vmem:[#allocation8 + $0x130] sm:$0xff]
      %v454 = vld [vmem:[#allocation8 + $0x138] sm:$0xff]
      %v455 = vld [vmem:[#allocation8 + $0x140] sm:$0xff]
      %v456 = vld [vmem:[#allocation8 + $0x148] sm:$0xff]
      %v457 = vld [vmem:[#allocation8 + $0x150] sm:$0xff]
      %v458 = vld [vmem:[#allocation8 + $0x158] sm:$0xff]
      %v459 = vld [vmem:[#allocation8 + $0x160] sm:$0xff]
      %v460 = vld [vmem:[#allocation8 + $0x168] sm:$0xff]
      %v461 = vld [vmem:[#allocation8 + $0x170] sm:$0xff]
      %v462 = vld [vmem:[#allocation8 + $0x178] sm:$0xff]
      %v463 = vld [vmem:[#allocation8 + $0x180] sm:$0xff]
      %v464 = vld [vmem:[#allocation8 + $0x188] sm:$0xff]
      %v465 = vld [vmem:[#allocation8 + $0x190] sm:$0xff]
      %v466 = vld [vmem:[#allocation8 + $0x198] sm:$0xff]
      %v467 = vld [vmem:[#allocation8 + $0x1a0] sm:$0xff]
      %v468 = vld [vmem:[#allocation8 + $0x1a8] sm:$0xff]
      %v469 = vld [vmem:[#allocation8 + $0x1b0] sm:$0xff]
      %v470 = vld [vmem:[#allocation8 + $0x1b8] sm:$0xff]
      %v471 = vld [vmem:[#allocation8 + $0x1c0] sm:$0xff]
      %v472 = vld [vmem:[#allocation8 + $0x1c8] sm:$0xff]
      %v473 = vld [vmem:[#allocation8 + $0x1d0] sm:$0xff]
      %v474 = vld [vmem:[#allocation8 + $0x1d8] sm:$0xff]
      %v475 = vld [vmem:[#allocation8 + $0x1e0] sm:$0xff]
      %v476 = vld [vmem:[#allocation8 + $0x1e8] sm:$0xff]
      %v477 = vld [vmem:[#allocation8 + $0x1f0] sm:$0xff]
      %v478 = vld [vmem:[#allocation8 + $0x1f8] sm:$0xff]
      %v479 = vld [vmem:[#allocation8 + $0x200] sm:$0xff]
      %v480 = vld [vmem:[#allocation8 + $0x208] sm:$0xff]
      %v481 = vld [vmem:[#allocation8 + $0x210] sm:$0xff]
      %v482 = vld [vmem:[#allocation8 + $0x218] sm:$0xff]
      %v483 = vld [vmem:[#allocation8 + $0x220] sm:$0xff]
      %v484 = vld [vmem:[#allocation8 + $0x228] sm:$0xff]
      %v485 = vld [vmem:[#allocation8 + $0x230] sm:$0xff]
      %v486 = vld [vmem:[#allocation8 + $0x238] sm:$0xff]
      %v487 = vld [vmem:[#allocation8 + $0x240] sm:$0xff]
      %v488 = vld [vmem:[#allocation8 + $0x248] sm:$0xff]
      %v489 = vld [vmem:[#allocation8 + $0x250] sm:$0xff]
      %v490 = vld [vmem:[#allocation8 + $0x258] sm:$0xff]
      %v491 = vld [vmem:[#allocation8 + $0x260] sm:$0xff]
      %v492 = vld [vmem:[#allocation8 + $0x268] sm:$0xff]
      %v493 = vld [vmem:[#allocation8 + $0x270] sm:$0xff]
      %v494 = vld [vmem:[#allocation8 + $0x278] sm:$0xff]
      %v495 = vld [vmem:[#allocation8 + $0x280] sm:$0xff]
      %v496 = vld [vmem:[#allocation8 + $0x288] sm:$0xff]
      %v497 = vld [vmem:[#allocation8 + $0x290] sm:$0xff]
      %v498 = vld [vmem:[#allocation8 + $0x298] sm:$0xff]
      %v499 = vld [vmem:[#allocation8 + $0x2a0] sm:$0xff]
      %v500 = vld [vmem:[#allocation8 + $0x2a8] sm:$0xff]
      %v501 = vld [vmem:[#allocation8 + $0x2b0] sm:$0xff]
      %v502 = vld [vmem:[#allocation8 + $0x2b8] sm:$0xff]
      %v503 = vld [vmem:[#allocation8 + $0x2c0] sm:$0xff]
      %v504 = vld [vmem:[#allocation8 + $0x2c8] sm:$0xff]
      %v505 = vld [vmem:[#allocation8 + $0x2d0] sm:$0xff]
      %v506 = vld [vmem:[#allocation8 + $0x2d8] sm:$0xff]
      %v507 = vld [vmem:[#allocation8 + $0x2e0] sm:$0xff]
      %v508 = vld [vmem:[#allocation8 + $0x2e8] sm:$0xff]
      %v509 = vld [vmem:[#allocation8 + $0x2f0] sm:$0xff]
      %v510 = vld [vmem:[#allocation8 + $0x2f8] sm:$0xff]
      %v511 = vld [vmem:[#allocation8 + $0x300] sm:$0xff]
      %v512 = vld [vmem:[#allocation8 + $0x308] sm:$0xff]
      %v513 = vld [vmem:[#allocation8 + $0x310] sm:$0xff]
      %v514 = vld [vmem:[#allocation8 + $0x318] sm:$0xff]
      %v515 = vld [vmem:[#allocation8 + $0x320] sm:$0xff]
      %v516 = vld [vmem:[#allocation8 + $0x328] sm:$0xff]
      %v517 = vld [vmem:[#allocation8 + $0x330] sm:$0xff]
      %v518 = vld [vmem:[#allocation8 + $0x338] sm:$0xff]
      %v519 = vld [vmem:[#allocation8 + $0x340] sm:$0xff]
      %v520 = vld [vmem:[#allocation8 + $0x348] sm:$0xff]
      %v521 = vld [vmem:[#allocation8 + $0x350] sm:$0xff]
      %v522 = vld [vmem:[#allocation8 + $0x358] sm:$0xff]
      %v523 = vld [vmem:[#allocation8 + $0x360] sm:$0xff]
      %v524 = vld [vmem:[#allocation8 + $0x368] sm:$0xff]
      %v525 = vld [vmem:[#allocation8 + $0x370] sm:$0xff]
      %v526 = vld [vmem:[#allocation8 + $0x378] sm:$0xff]
      %v527 = vld [vmem:[#allocation8 + $0x380] sm:$0xff]
      %v528 = vld [vmem:[#allocation8 + $0x388] sm:$0xff]
      %v529 = vld [vmem:[#allocation8 + $0x390] sm:$0xff]
      %v530 = vld [vmem:[#allocation8 + $0x398] sm:$0xff]
      %v531 = vld [vmem:[#allocation8 + $0x3a0] sm:$0xff]
      %v532 = vld [vmem:[#allocation8 + $0x3a8] sm:$0xff]
      %v533 = vld [vmem:[#allocation8 + $0x3b0] sm:$0xff]
      %v534 = vld [vmem:[#allocation8 + $0x3b8] sm:$0xff]
      %v535 = vld [vmem:[#allocation8 + $0x3c0] sm:$0xff]
      %v536 = vld [vmem:[#allocation8 + $0x3c8] sm:$0xff]
      %v537 = vld [vmem:[#allocation8 + $0x3d0] sm:$0xff]
      %v538 = vld [vmem:[#allocation8 + $0x3d8] sm:$0xff]
      %v539 = vld [vmem:[#allocation8 + $0x3e0] sm:$0xff]
      %v540 = vld [vmem:[#allocation8 + $0x3e8] sm:$0xff]
      %v541 = vld [vmem:[#allocation8 + $0x3f0] sm:$0xff]
      %v542 = vld [vmem:[#allocation8 + $0x3f8] sm:$0xff]
      %v543 = vld [vmem:[#allocation8 + $0x400] sm:$0xff]
      %v544 = vld [vmem:[#allocation8 + $0x408] sm:$0xff]
      %v545 = vld [vmem:[#allocation8 + $0x410] sm:$0xff]
      %v546 = vld [vmem:[#allocation8 + $0x418] sm:$0xff]
      %v547 = vld [vmem:[#allocation8 + $0x420] sm:$0xff]
      %v548 = vld [vmem:[#allocation8 + $0x428] sm:$0xff]
      %v549 = vld [vmem:[#allocation8 + $0x430] sm:$0xff]
      %v550 = vld [vmem:[#allocation8 + $0x438] sm:$0xff]
      %v551 = vld [vmem:[#allocation8 + $0x440] sm:$0xff]
      %v552 = vld [vmem:[#allocation8 + $0x448] sm:$0xff]
      %v553 = vld [vmem:[#allocation8 + $0x450] sm:$0xff]
      %v554 = vld [vmem:[#allocation8 + $0x458] sm:$0xff]
      %v555 = vld [vmem:[#allocation8 + $0x460] sm:$0xff]
      %v556 = vld [vmem:[#allocation8 + $0x468] sm:$0xff]
      %v557 = vld [vmem:[#allocation8 + $0x470] sm:$0xff]
      %v558 = vld [vmem:[#allocation8 + $0x478] sm:$0xff]
      %v559 = vld [vmem:[#allocation8 + $0x480] sm:$0xff]
      %v560 = vld [vmem:[#allocation8 + $0x488] sm:$0xff]
      %v561 = vld [vmem:[#allocation8 + $0x490] sm:$0xff]
      %v562 = vld [vmem:[#allocation8 + $0x498] sm:$0xff]
      %v563 = vld [vmem:[#allocation8 + $0x4a0] sm:$0xff]
      %v564 = vld [vmem:[#allocation8 + $0x4a8] sm:$0xff]
      %v565 = vld [vmem:[#allocation8 + $0x4b0] sm:$0xff]
      %v566 = vld [vmem:[#allocation8 + $0x4b8] sm:$0xff]
      %v567 = vld [vmem:[#allocation8 + $0x4c0] sm:$0xff]
      %v568 = vld [vmem:[#allocation8 + $0x4c8] sm:$0xff]
      %v569 = vld [vmem:[#allocation8 + $0x4d0] sm:$0xff]
      %v570 = vld [vmem:[#allocation8 + $0x4d8] sm:$0xff]
      %v571 = vld [vmem:[#allocation8 + $0x4e0] sm:$0xff]
      %v572 = vld [vmem:[#allocation8 + $0x4e8] sm:$0xff]
      %v573 = vld [vmem:[#allocation8 + $0x4f0] sm:$0xff]
      %v574 = vld [vmem:[#allocation8 + $0x4f8] sm:$0xff]
      %v575 = vld [vmem:[#allocation8 + $0x500] sm:$0xff]
      %v576 = vld [vmem:[#allocation8 + $0x508] sm:$0xff]
      %v577 = vld [vmem:[#allocation8 + $0x510] sm:$0xff]
      %v578 = vld [vmem:[#allocation8 + $0x518] sm:$0xff]
      %v579 = vld [vmem:[#allocation8 + $0x520] sm:$0xff]
      %v580 = vld [vmem:[#allocation8 + $0x528] sm:$0xff]
      %v581 = vld [vmem:[#allocation8 + $0x530] sm:$0xff]
      %v582 = vld [vmem:[#allocation8 + $0x538] sm:$0xff]
      %v583 = vld [vmem:[#allocation8 + $0x540] sm:$0xff]
      %v584 = vld [vmem:[#allocation8 + $0x548] sm:$0xff]
      %v585 = vld [vmem:[#allocation8 + $0x550] sm:$0xff]
      %v586 = vld [vmem:[#allocation8 + $0x558] sm:$0xff]
      %v587 = vld [vmem:[#allocation8 + $0x560] sm:$0xff]
      %v588 = vld [vmem:[#allocation8 + $0x568] sm:$0xff]
      %v589 = vld [vmem:[#allocation8 + $0x570] sm:$0xff]
      %v590 = vld [vmem:[#allocation8 + $0x578] sm:$0xff]
      %v591 = vld [vmem:[#allocation8 + $0x580] sm:$0xff]
      %v592 = vld [vmem:[#allocation8 + $0x588] sm:$0xff]
      %v593 = vld [vmem:[#allocation8 + $0x590] sm:$0xff]
      %v594 = vld [vmem:[#allocation8 + $0x598] sm:$0xff]
      %v595 = vld [vmem:[#allocation8 + $0x5a0] sm:$0xff]
      %v596 = vld [vmem:[#allocation8 + $0x5a8] sm:$0xff]
      %v597 = vld [vmem:[#allocation8 + $0x5b0] sm:$0xff]
      %v598 = vld [vmem:[#allocation8 + $0x5b8] sm:$0xff]
      %v599 = vld [vmem:[#allocation8 + $0x5c0] sm:$0xff]
      %v600 = vld [vmem:[#allocation8 + $0x5c8] sm:$0xff]
      %v601 = vld [vmem:[#allocation8 + $0x5d0] sm:$0xff]
      %v602 = vld [vmem:[#allocation8 + $0x5d8] sm:$0xff]
      %v603 = vld [vmem:[#allocation8 + $0x5e0] sm:$0xff]
      %v604 = vld [vmem:[#allocation8 + $0x5e8] sm:$0xff]
      %v605 = vld [vmem:[#allocation8 + $0x5f0] sm:$0xff]
      %v606 = vld [vmem:[#allocation8 + $0x5f8] sm:$0xff]
      %v607 = vld [vmem:[#allocation8 + $0x600] sm:$0xff]
      %v608 = vld [vmem:[#allocation8 + $0x608] sm:$0xff]
      %v609 = vld [vmem:[#allocation8 + $0x610] sm:$0xff]
      %v610 = vld [vmem:[#allocation8 + $0x618] sm:$0xff]
      %v611 = vld [vmem:[#allocation8 + $0x620] sm:$0xff]
      %v612 = vld [vmem:[#allocation8 + $0x628] sm:$0xff]
      %v613 = vld [vmem:[#allocation8 + $0x630] sm:$0xff]
      %v614 = vld [vmem:[#allocation8 + $0x638] sm:$0xff]
      %v615 = vld [vmem:[#allocation8 + $0x640] sm:$0xff]
      %v616 = vld [vmem:[#allocation8 + $0x648] sm:$0xff]
      %v617 = vld [vmem:[#allocation8 + $0x650] sm:$0xff]
      %v618 = vld [vmem:[#allocation8 + $0x658] sm:$0xff]
      %v619 = vld [vmem:[#allocation8 + $0x660] sm:$0xff]
      %v620 = vld [vmem:[#allocation8 + $0x668] sm:$0xff]
      %v621 = vld [vmem:[#allocation8 + $0x670] sm:$0xff]
      %v622 = vld [vmem:[#allocation8 + $0x678] sm:$0xff]
      %v623 = vld [vmem:[#allocation8 + $0x680] sm:$0xff]
      %v624 = vld [vmem:[#allocation8 + $0x688] sm:$0xff]
      %v625 = vld [vmem:[#allocation8 + $0x690] sm:$0xff]
      %v626 = vld [vmem:[#allocation8 + $0x698] sm:$0xff]
      %v627 = vld [vmem:[#allocation8 + $0x6a0] sm:$0xff]
      %v628 = vld [vmem:[#allocation8 + $0x6a8] sm:$0xff]
      %v629 = vld [vmem:[#allocation8 + $0x6b0] sm:$0xff]
      %v630 = vld [vmem:[#allocation8 + $0x6b8] sm:$0xff]
      %v631 = vld [vmem:[#allocation8 + $0x6c0] sm:$0xff]
      %v632 = vld [vmem:[#allocation8 + $0x6c8] sm:$0xff]
      %v633 = vld [vmem:[#allocation8 + $0x6d0] sm:$0xff]
      %v634 = vld [vmem:[#allocation8 + $0x6d8] sm:$0xff]
      %v635 = vld [vmem:[#allocation8 + $0x6e0] sm:$0xff]
      %v636 = vld [vmem:[#allocation8 + $0x6e8] sm:$0xff]
      %v637 = vld [vmem:[#allocation8 + $0x6f0] sm:$0xff]
      %v638 = vld [vmem:[#allocation8 + $0x6f8] sm:$0xff]
      %v639 = vld [vmem:[#allocation8 + $0x700] sm:$0xff]
      %v640 = vld [vmem:[#allocation8 + $0x708] sm:$0xff]
      %v641 = vld [vmem:[#allocation8 + $0x710] sm:$0xff]
      %v642 = vld [vmem:[#allocation8 + $0x718] sm:$0xff]
      %v643 = vld [vmem:[#allocation8 + $0x720] sm:$0xff]
      %v644 = vld [vmem:[#allocation8 + $0x728] sm:$0xff]
      %v645 = vld [vmem:[#allocation8 + $0x730] sm:$0xff]
      %v646 = vld [vmem:[#allocation8 + $0x738] sm:$0xff]
      %v647 = vld [vmem:[#allocation8 + $0x740] sm:$0xff]
      %v648 = vld [vmem:[#allocation8 + $0x748] sm:$0xff]
      %v649 = vld [vmem:[#allocation8 + $0x750] sm:$0xff]
      %v650 = vld [vmem:[#allocation8 + $0x758] sm:$0xff]
      %v651 = vld [vmem:[#allocation8 + $0x760] sm:$0xff]
      %v652 = vld [vmem:[#allocation8 + $0x768] sm:$0xff]
      %v653 = vld [vmem:[#allocation8 + $0x770] sm:$0xff]
      %v654 = vld [vmem:[#allocation8 + $0x778] sm:$0xff]
      %v655 = vld [vmem:[#allocation8 + $0x780] sm:$0xff]
      %v656 = vld [vmem:[#allocation8 + $0x788] sm:$0xff]
      %v657 = vld [vmem:[#allocation8 + $0x790] sm:$0xff]
      %v658 = vld [vmem:[#allocation8 + $0x798] sm:$0xff]
      %v659 = vld [vmem:[#allocation8 + $0x7a0] sm:$0xff]
      %v660 = vld [vmem:[#allocation8 + $0x7a8] sm:$0xff]
      %v661 = vld [vmem:[#allocation8 + $0x7b0] sm:$0xff]
      %v662 = vld [vmem:[#allocation8 + $0x7b8] sm:$0xff]
      %v663 = vld [vmem:[#allocation8 + $0x7c0] sm:$0xff]
      %v664 = vld [vmem:[#allocation8 + $0x7c8] sm:$0xff]
      %v665 = vld [vmem:[#allocation8 + $0x7d0] sm:$0xff]
      %v666 = vld [vmem:[#allocation8 + $0x7d8] sm:$0xff]
      %v667 = vld [vmem:[#allocation8 + $0x7e0] sm:$0xff]
      %v668 = vld [vmem:[#allocation8 + $0x7e8] sm:$0xff]
      %v669 = vld [vmem:[#allocation8 + $0x7f0] sm:$0xff]
      %v670 = vld [vmem:[#allocation8 + $0x7f8] sm:$0xff]
      %v671 = vld [vmem:[#allocation8 + $0x800] sm:$0xff]
      %v672 = vld [vmem:[#allocation8 + $0x808] sm:$0xff]
      %v673 = vld [vmem:[#allocation8 + $0x810] sm:$0xff]
      %v674 = vld [vmem:[#allocation8 + $0x818] sm:$0xff]
      %v675 = vld [vmem:[#allocation8 + $0x820] sm:$0xff]
      %v676 = vld [vmem:[#allocation8 + $0x828] sm:$0xff]
      %v677 = vld [vmem:[#allocation8 + $0x830] sm:$0xff]
      %v678 = vld [vmem:[#allocation8 + $0x838] sm:$0xff]
      %v679 = vld [vmem:[#allocation8 + $0x840] sm:$0xff]
      %v680 = vld [vmem:[#allocation8 + $0x848] sm:$0xff]
      %v681 = vld [vmem:[#allocation8 + $0x850] sm:$0xff]
      %v682 = vld [vmem:[#allocation8 + $0x858] sm:$0xff]
      %v683 = vld [vmem:[#allocation8 + $0x860] sm:$0xff]
      %v684 = vld [vmem:[#allocation8 + $0x868] sm:$0xff]
      %v685 = vld [vmem:[#allocation8 + $0x870] sm:$0xff]
      %v686 = vld [vmem:[#allocation8 + $0x878] sm:$0xff]
      %v687 = vld [vmem:[#allocation8 + $0x880] sm:$0xff]
      %v688 = vld [vmem:[#allocation8 + $0x888] sm:$0xff]
      %v689 = vld [vmem:[#allocation8 + $0x890] sm:$0xff]
      %v690 = vld [vmem:[#allocation8 + $0x898] sm:$0xff]
      %v691 = vld [vmem:[#allocation8 + $0x8a0] sm:$0xff]
      %v692 = vld [vmem:[#allocation8 + $0x8a8] sm:$0xff]
      %v693 = vld [vmem:[#allocation8 + $0x8b0] sm:$0xff]
      %v694 = vld [vmem:[#allocation8 + $0x8b8] sm:$0xff]
      %v695 = vld [vmem:[#allocation8 + $0x8c0] sm:$0xff]
      %v696 = vld [vmem:[#allocation8 + $0x8c8] sm:$0xff]
      %v697 = vld [vmem:[#allocation8 + $0x8d0] sm:$0xff]
      %v698 = vld [vmem:[#allocation8 + $0x8d8] sm:$0xff]
      %v699 = vld [vmem:[#allocation8 + $0x8e0] sm:$0xff]
      %v700 = vld [vmem:[#allocation8 + $0x8e8] sm:$0xff]
      %v701 = vld [vmem:[#allocation8 + $0x8f0] sm:$0xff]
      %v702 = vld [vmem:[#allocation8 + $0x8f8] sm:$0xff]
      %v703 = vld [vmem:[#allocation8 + $0x900] sm:$0xff]
      %v704 = vld [vmem:[#allocation8 + $0x908] sm:$0xff]
      %v705 = vld [vmem:[#allocation8 + $0x910] sm:$0xff]
      %v706 = vld [vmem:[#allocation8 + $0x918] sm:$0xff]
      %v707 = vld [vmem:[#allocation8 + $0x920] sm:$0xff]
      %v708 = vld [vmem:[#allocation8 + $0x928] sm:$0xff]
      %v709 = vld [vmem:[#allocation8 + $0x930] sm:$0xff]
      %v710 = vld [vmem:[#allocation8 + $0x938] sm:$0xff]
      %v711 = vld [vmem:[#allocation8 + $0x940] sm:$0xff]
      %v712 = vld [vmem:[#allocation8 + $0x948] sm:$0xff]
      %v713 = vld [vmem:[#allocation8 + $0x950] sm:$0xff]
      %v714 = vld [vmem:[#allocation8 + $0x958] sm:$0xff]
      %v715 = vld [vmem:[#allocation8 + $0x960] sm:$0xff]
      %v716 = vld [vmem:[#allocation8 + $0x968] sm:$0xff]
      %v717 = vld [vmem:[#allocation8 + $0x970] sm:$0xff]
      %v718 = vld [vmem:[#allocation8 + $0x978] sm:$0xff]
      %v719 = vld [vmem:[#allocation8 + $0x980] sm:$0xff]
      %v720 = vld [vmem:[#allocation8 + $0x988] sm:$0xff]
      %v721 = vld [vmem:[#allocation8 + $0x990] sm:$0xff]
      %v722 = vld [vmem:[#allocation8 + $0x998] sm:$0xff]
      %v723 = vld [vmem:[#allocation8 + $0x9a0] sm:$0xff]
      %v724 = vld [vmem:[#allocation8 + $0x9a8] sm:$0xff]
      %v725 = vld [vmem:[#allocation8 + $0x9b0] sm:$0xff]
      %v726 = vld [vmem:[#allocation8 + $0x9b8] sm:$0xff]
      %v727 = vld [vmem:[#allocation8 + $0x9c0] sm:$0xff]
      %v728 = vld [vmem:[#allocation8 + $0x9c8] sm:$0xff]
      %v729 = vld [vmem:[#allocation8 + $0x9d0] sm:$0xff]
      %v730 = vld [vmem:[#allocation8 + $0x9d8] sm:$0xff]
      %v731 = vld [vmem:[#allocation8 + $0x9e0] sm:$0xff]
      %v732 = vld [vmem:[#allocation8 + $0x9e8] sm:$0xff]
      %v733 = vld [vmem:[#allocation8 + $0x9f0] sm:$0xff]
      %v734 = vld [vmem:[#allocation8 + $0x9f8] sm:$0xff]
      %v735 = vld [vmem:[#allocation8 + $0xa00] sm:$0xff]
      %v736 = vld [vmem:[#allocation8 + $0xa08] sm:$0xff]
      %v737 = vld [vmem:[#allocation8 + $0xa10] sm:$0xff]
      %v738 = vld [vmem:[#allocation8 + $0xa18] sm:$0xff]
      %v739 = vld [vmem:[#allocation8 + $0xa20] sm:$0xff]
      %v740 = vld [vmem:[#allocation8 + $0xa28] sm:$0xff]
      %v741 = vld [vmem:[#allocation8 + $0xa30] sm:$0xff]
      %v742 = vld [vmem:[#allocation8 + $0xa38] sm:$0xff]
      %v743 = vld [vmem:[#allocation8 + $0xa40] sm:$0xff]
      %v744 = vld [vmem:[#allocation8 + $0xa48] sm:$0xff]
      %v745 = vld [vmem:[#allocation8 + $0xa50] sm:$0xff]
      %v746 = vld [vmem:[#allocation8 + $0xa58] sm:$0xff]
      %v747 = vld [vmem:[#allocation8 + $0xa60] sm:$0xff]
      %v748 = vld [vmem:[#allocation8 + $0xa68] sm:$0xff]
      %v749 = vld [vmem:[#allocation8 + $0xa70] sm:$0xff]
      %v750 = vld [vmem:[#allocation8 + $0xa78] sm:$0xff]
      %v751 = vld [vmem:[#allocation8 + $0xa80] sm:$0xff]
      %v752 = vld [vmem:[#allocation8 + $0xa88] sm:$0xff]
      %v753 = vld [vmem:[#allocation8 + $0xa90] sm:$0xff]
      %v754 = vld [vmem:[#allocation8 + $0xa98] sm:$0xff]
      %v755 = vld [vmem:[#allocation8 + $0xaa0] sm:$0xff]
      %v756 = vld [vmem:[#allocation8 + $0xaa8] sm:$0xff]
      %v757 = vld [vmem:[#allocation8 + $0xab0] sm:$0xff]
      %v758 = vld [vmem:[#allocation8 + $0xab8] sm:$0xff]
      %v759 = vld [vmem:[#allocation8 + $0xac0] sm:$0xff]
      %v760 = vld [vmem:[#allocation8 + $0xac8] sm:$0xff]
      %v761 = vld [vmem:[#allocation8 + $0xad0] sm:$0xff]
      %v762 = vld [vmem:[#allocation8 + $0xad8] sm:$0xff]
      %v763 = vld [vmem:[#allocation8 + $0xae0] sm:$0xff]
      %v764 = vld [vmem:[#allocation8 + $0xae8] sm:$0xff]
      %v765 = vld [vmem:[#allocation8 + $0xaf0] sm:$0xff]
      %v766 = vld [vmem:[#allocation8 + $0xaf8] sm:$0xff]
      %v767 = vld [vmem:[#allocation8 + $0xb00] sm:$0xff]
      %v768 = vld [vmem:[#allocation8 + $0xb08] sm:$0xff]
      %v769 = vld [vmem:[#allocation8 + $0xb10] sm:$0xff]
      %v770 = vld [vmem:[#allocation8 + $0xb18] sm:$0xff]
      %v771 = vld [vmem:[#allocation8 + $0xb20] sm:$0xff]
      %v772 = vld [vmem:[#allocation8 + $0xb28] sm:$0xff]
      %v773 = vld [vmem:[#allocation8 + $0xb30] sm:$0xff]
      %v774 = vld [vmem:[#allocation8 + $0xb38] sm:$0xff]
      %v775 = vld [vmem:[#allocation8 + $0xb40] sm:$0xff]
      %v776 = vld [vmem:[#allocation8 + $0xb48] sm:$0xff]
      %v777 = vld [vmem:[#allocation8 + $0xb50] sm:$0xff]
      %v778 = vld [vmem:[#allocation8 + $0xb58] sm:$0xff]
      %v779 = vld [vmem:[#allocation8 + $0xb60] sm:$0xff]
      %v780 = vld [vmem:[#allocation8 + $0xb68] sm:$0xff]
      %v781 = vld [vmem:[#allocation8 + $0xb70] sm:$0xff]
      %v782 = vld [vmem:[#allocation8 + $0xb78] sm:$0xff]
      %v783 = vld [vmem:[#allocation8 + $0xb80] sm:$0xff]
      %v784 = vld [vmem:[#allocation8 + $0xb88] sm:$0xff]
      %v785 = vld [vmem:[#allocation8 + $0xb90] sm:$0xff]
      %v786 = vld [vmem:[#allocation8 + $0xb98] sm:$0xff]
      %v787 = vld [vmem:[#allocation8 + $0xba0] sm:$0xff]
      %v788 = vld [vmem:[#allocation8 + $0xba8] sm:$0xff]
      %v789 = vld [vmem:[#allocation8 + $0xbb0] sm:$0xff]
      %v790 = vld [vmem:[#allocation8 + $0xbb8] sm:$0xff]
      %v791 = vld [vmem:[#allocation8 + $0xbc0] sm:$0xff]
      %v792 = vld [vmem:[#allocation8 + $0xbc8] sm:$0xff]
      %v793 = vld [vmem:[#allocation8 + $0xbd0] sm:$0xff]
      %v794 = vld [vmem:[#allocation8 + $0xbd8] sm:$0xff]
      %v795 = vld [vmem:[#allocation8 + $0xbe0] sm:$0xff]
      %v796 = vld [vmem:[#allocation8 + $0xbe8] sm:$0xff]
      %v797 = vld [vmem:[#allocation8 + $0xbf0] sm:$0xff]
      %v798 = vld [vmem:[#allocation8 + $0xbf8] sm:$0xff]
      %v799 = vld [vmem:[#allocation8 + $0xc00] sm:$0xff]
      %v800 = vld [vmem:[#allocation8 + $0xc08] sm:$0xff]
      %v801 = vld [vmem:[#allocation8 + $0xc10] sm:$0xff]
      %v802 = vld [vmem:[#allocation8 + $0xc18] sm:$0xff]
      %v803 = vld [vmem:[#allocation8 + $0xc20] sm:$0xff]
      %v804 = vld [vmem:[#allocation8 + $0xc28] sm:$0xff]
      %v805 = vld [vmem:[#allocation8 + $0xc30] sm:$0xff]
      %v806 = vld [vmem:[#allocation8 + $0xc38] sm:$0xff]
      %v807 = vld [vmem:[#allocation8 + $0xc40] sm:$0xff]
      %v808 = vld [vmem:[#allocation8 + $0xc48] sm:$0xff]
      %v809 = vld [vmem:[#allocation8 + $0xc50] sm:$0xff]
      %v810 = vld [vmem:[#allocation8 + $0xc58] sm:$0xff]
      %v811 = vld [vmem:[#allocation8 + $0xc60] sm:$0xff]
      %v812 = vld [vmem:[#allocation8 + $0xc68] sm:$0xff]
      %v813 = vld [vmem:[#allocation8 + $0xc70] sm:$0xff]
      %v814 = vld [vmem:[#allocation8 + $0xc78] sm:$0xff]
      %v815 = vld [vmem:[#allocation8 + $0xc80] sm:$0xff]
      %v816 = vld [vmem:[#allocation8 + $0xc88] sm:$0xff]
      %v817 = vld [vmem:[#allocation8 + $0xc90] sm:$0xff]
      %v818 = vld [vmem:[#allocation8 + $0xc98] sm:$0xff]
      %v819 = vld [vmem:[#allocation8 + $0xca0] sm:$0xff]
      %v820 = vld [vmem:[#allocation8 + $0xca8] sm:$0xff]
      %v821 = vld [vmem:[#allocation8 + $0xcb0] sm:$0xff]
      %v822 = vld [vmem:[#allocation8 + $0xcb8] sm:$0xff]
      %v823 = vld [vmem:[#allocation8 + $0xcc0] sm:$0xff]
      %v824 = vld [vmem:[#allocation8 + $0xcc8] sm:$0xff]
      %v825 = vld [vmem:[#allocation8 + $0xcd0] sm:$0xff]
      %v826 = vld [vmem:[#allocation8 + $0xcd8] sm:$0xff]
      %v827 = vld [vmem:[#allocation8 + $0xce0] sm:$0xff]
      %v828 = vld [vmem:[#allocation8 + $0xce8] sm:$0xff]
      %v829 = vld [vmem:[#allocation8 + $0xcf0] sm:$0xff]
      %v830 = vld [vmem:[#allocation8 + $0xcf8] sm:$0xff]
      %v831 = vld [vmem:[#allocation8 + $0xd00] sm:$0xff]
      %v832 = vld [vmem:[#allocation8 + $0xd08] sm:$0xff]
      %v833 = vld [vmem:[#allocation8 + $0xd10] sm:$0xff]
      %v834 = vld [vmem:[#allocation8 + $0xd18] sm:$0xff]
      %v835 = vld [vmem:[#allocation8 + $0xd20] sm:$0xff]
      %v836 = vld [vmem:[#allocation8 + $0xd28] sm:$0xff]
      %v837 = vld [vmem:[#allocation8 + $0xd30] sm:$0xff]
      %v838 = vld [vmem:[#allocation8 + $0xd38] sm:$0xff]
      %v839 = vld [vmem:[#allocation8 + $0xd40] sm:$0xff]
      %v840 = vld [vmem:[#allocation8 + $0xd48] sm:$0xff]
      %v841 = vld [vmem:[#allocation8 + $0xd50] sm:$0xff]
      %v842 = vld [vmem:[#allocation8 + $0xd58] sm:$0xff]
      %v843 = vld [vmem:[#allocation8 + $0xd60] sm:$0xff]
      %v844 = vld [vmem:[#allocation8 + $0xd68] sm:$0xff]
      %v845 = vld [vmem:[#allocation8 + $0xd70] sm:$0xff]
      %v846 = vld [vmem:[#allocation8 + $0xd78] sm:$0xff]
      %v847 = vld [vmem:[#allocation8 + $0xd80] sm:$0xff]
      %v848 = vld [vmem:[#allocation8 + $0xd88] sm:$0xff]
      %v849 = vld [vmem:[#allocation8 + $0xd90] sm:$0xff]
      %v850 = vld [vmem:[#allocation8 + $0xd98] sm:$0xff]
      %v851 = vld [vmem:[#allocation8 + $0xda0] sm:$0xff]
      %v852 = vld [vmem:[#allocation8 + $0xda8] sm:$0xff]
      %v853 = vld [vmem:[#allocation8 + $0xdb0] sm:$0xff]
      %v854 = vld [vmem:[#allocation8 + $0xdb8] sm:$0xff]
      %v855 = vld [vmem:[#allocation8 + $0xdc0] sm:$0xff]
      %v856 = vld [vmem:[#allocation8 + $0xdc8] sm:$0xff]
      %v857 = vld [vmem:[#allocation8 + $0xdd0] sm:$0xff]
      %v858 = vld [vmem:[#allocation8 + $0xdd8] sm:$0xff]
      %v859 = vld [vmem:[#allocation8 + $0xde0] sm:$0xff]
      %v860 = vld [vmem:[#allocation8 + $0xde8] sm:$0xff]
      %v861 = vld [vmem:[#allocation8 + $0xdf0] sm:$0xff]
      %v862 = vld [vmem:[#allocation8 + $0xdf8] sm:$0xff]
      %v863 = vld [vmem:[#allocation8 + $0xe00] sm:$0xff]
      %v864 = vld [vmem:[#allocation8 + $0xe08] sm:$0xff]
      %v865 = vld [vmem:[#allocation8 + $0xe10] sm:$0xff]
      %v866 = vld [vmem:[#allocation8 + $0xe18] sm:$0xff]
      %v867 = vld [vmem:[#allocation8 + $0xe20] sm:$0xff]
      %v868 = vld [vmem:[#allocation8 + $0xe28] sm:$0xff]
      %v869 = vld [vmem:[#allocation8 + $0xe30] sm:$0xff]
      %v870 = vld [vmem:[#allocation8 + $0xe38] sm:$0xff]
      %v871 = vld [vmem:[#allocation8 + $0xe40] sm:$0xff]
      %v872 = vld [vmem:[#allocation8 + $0xe48] sm:$0xff]
      %v873 = vld [vmem:[#allocation8 + $0xe50] sm:$0xff]
      %v874 = vld [vmem:[#allocation8 + $0xe58] sm:$0xff]
      %v875 = vld [vmem:[#allocation8 + $0xe60] sm:$0xff]
      %v876 = vld [vmem:[#allocation8 + $0xe68] sm:$0xff]
      %v877 = vld [vmem:[#allocation8 + $0xe70] sm:$0xff]
      %v878 = vld [vmem:[#allocation8 + $0xe78] sm:$0xff]
      %v879 = vld [vmem:[#allocation8 + $0xe80] sm:$0xff]
      %v880 = vld [vmem:[#allocation8 + $0xe88] sm:$0xff]
      %v881 = vld [vmem:[#allocation8 + $0xe90] sm:$0xff]
      %v882 = vld [vmem:[#allocation8 + $0xe98] sm:$0xff]
      %v883 = vld [vmem:[#allocation8 + $0xea0] sm:$0xff]
      %v884 = vld [vmem:[#allocation8 + $0xea8] sm:$0xff]
      %v885 = vld [vmem:[#allocation8 + $0xeb0] sm:$0xff]
      %v886 = vld [vmem:[#allocation8 + $0xeb8] sm:$0xff]
      %v887 = vld [vmem:[#allocation8 + $0xec0] sm:$0xff]
      %v888 = vld [vmem:[#allocation8 + $0xec8] sm:$0xff]
      %v889 = vld [vmem:[#allocation8 + $0xed0] sm:$0xff]
      %v890 = vld [vmem:[#allocation8 + $0xed8] sm:$0xff]
      %v891 = vld [vmem:[#allocation8 + $0xee0] sm:$0xff]
      %v892 = vld [vmem:[#allocation8 + $0xee8] sm:$0xff]
      %v893 = vld [vmem:[#allocation8 + $0xef0] sm:$0xff]
      %v894 = vld [vmem:[#allocation8 + $0xef8] sm:$0xff]
      %v895 = vld [vmem:[#allocation8 + $0xf00] sm:$0xff]
      %v896 = vld [vmem:[#allocation8 + $0xf08] sm:$0xff]
      %v897 = vld [vmem:[#allocation8 + $0xf10] sm:$0xff]
      %v898 = vld [vmem:[#allocation8 + $0xf18] sm:$0xff]
      %v899 = vld [vmem:[#allocation8 + $0xf20] sm:$0xff]
      %v900 = vld [vmem:[#allocation8 + $0xf28] sm:$0xff]
      %v901 = vld [vmem:[#allocation8 + $0xf30] sm:$0xff]
      %v902 = vld [vmem:[#allocation8 + $0xf38] sm:$0xff]
      %v903 = vld [vmem:[#allocation8 + $0xf40] sm:$0xff]
      %v904 = vld [vmem:[#allocation8 + $0xf48] sm:$0xff]
      %v905 = vld [vmem:[#allocation8 + $0xf50] sm:$0xff]
      %v906 = vld [vmem:[#allocation8 + $0xf58] sm:$0xff]
      %v907 = vld [vmem:[#allocation8 + $0xf60] sm:$0xff]
      %v908 = vld [vmem:[#allocation8 + $0xf68] sm:$0xff]
      %v909 = vld [vmem:[#allocation8 + $0xf70] sm:$0xff]
      %v910 = vld [vmem:[#allocation8 + $0xf78] sm:$0xff]
      %v911 = vld [vmem:[#allocation8 + $0xf80] sm:$0xff]
      %v912 = vld [vmem:[#allocation8 + $0xf88] sm:$0xff]
      %v913 = vld [vmem:[#allocation8 + $0xf90] sm:$0xff]
      %v914 = vld [vmem:[#allocation8 + $0xf98] sm:$0xff]
      %v915 = vld [vmem:[#allocation8 + $0xfa0] sm:$0xff]
      %v916 = vld [vmem:[#allocation8 + $0xfa8] sm:$0xff]
      %v917 = vld [vmem:[#allocation8 + $0xfb0] sm:$0xff]
      %v918 = vld [vmem:[#allocation8 + $0xfb8] sm:$0xff]
      %v919 = vld [vmem:[#allocation8 + $0xfc0] sm:$0xff]
      %v920 = vld [vmem:[#allocation8 + $0xfc8] sm:$0xff]
      %v921 = vld [vmem:[#allocation8 + $0xfd0] sm:$0xff]
      %v922 = vld [vmem:[#allocation8 + $0xfd8] sm:$0xff]
      %v923 = vld [vmem:[#allocation8 + $0xfe0] sm:$0xff]
      %v924 = vld [vmem:[#allocation8 + $0xfe8] sm:$0xff]
      %v925 = vld [vmem:[#allocation8 + $0xff0] sm:$0xff]
      %v926 = vld [vmem:[#allocation8 + $0xff8] sm:$0xff]
      %v927 = vld [vmem:[#allocation8 + $0x1000] sm:$0xff]
      %v928 = vld [vmem:[#allocation8 + $0x1008] sm:$0xff]
      %v929 = vld [vmem:[#allocation8 + $0x1010] sm:$0xff]
      %v930 = vld [vmem:[#allocation8 + $0x1018] sm:$0xff]
      %v931 = vld [vmem:[#allocation8 + $0x1020] sm:$0xff]
      %v932 = vld [vmem:[#allocation8 + $0x1028] sm:$0xff]
      %v933 = vld [vmem:[#allocation8 + $0x1030] sm:$0xff]
      %v934 = vld [vmem:[#allocation8 + $0x1038] sm:$0xff]
      %v935 = vld [vmem:[#allocation8 + $0x1040] sm:$0xff]
      %v936 = vld [vmem:[#allocation8 + $0x1048] sm:$0xff]
      %v937 = vld [vmem:[#allocation8 + $0x1050] sm:$0xff]
      %v938 = vld [vmem:[#allocation8 + $0x1058] sm:$0xff]
      %v939 = vld [vmem:[#allocation8 + $0x1060] sm:$0xff]
      %v940 = vld [vmem:[#allocation8 + $0x1068] sm:$0xff]
      %v941 = vld [vmem:[#allocation8 + $0x1070] sm:$0xff]
      %v942 = vld [vmem:[#allocation8 + $0x1078] sm:$0xff]
      %v943 = vld [vmem:[#allocation8 + $0x1080] sm:$0xff]
      %v944 = vld [vmem:[#allocation8 + $0x1088] sm:$0xff]
      %v945 = vld [vmem:[#allocation8 + $0x1090] sm:$0xff]
      %v946 = vld [vmem:[#allocation8 + $0x1098] sm:$0xff]
      %v947 = vld [vmem:[#allocation8 + $0x10a0] sm:$0xff]
      %v948 = vld [vmem:[#allocation8 + $0x10a8] sm:$0xff]
      %v949 = vld [vmem:[#allocation8 + $0x10b0] sm:$0xff]
      %v950 = vld [vmem:[#allocation8 + $0x10b8] sm:$0xff]
      %v951 = vld [vmem:[#allocation8 + $0x10c0] sm:$0xff]
      %v952 = vld [vmem:[#allocation8 + $0x10c8] sm:$0xff]
      %v953 = vld [vmem:[#allocation8 + $0x10d0] sm:$0xff]
      %v954 = vld [vmem:[#allocation8 + $0x10d8] sm:$0xff]
      %v955 = vld [vmem:[#allocation8 + $0x10e0] sm:$0xff]
      %v956 = vld [vmem:[#allocation8 + $0x10e8] sm:$0xff]
      %v957 = vld [vmem:[#allocation8 + $0x10f0] sm:$0xff]
      %v958 = vld [vmem:[#allocation8 + $0x10f8] sm:$0xff]
      %v959 = vld [vmem:[#allocation8 + $0x1100] sm:$0xff]
      %v960 = vld [vmem:[#allocation8 + $0x1108] sm:$0xff]
      %v961 = vld [vmem:[#allocation8 + $0x1110] sm:$0xff]
      %v962 = vld [vmem:[#allocation8 + $0x1118] sm:$0xff]
      %v963 = vld [vmem:[#allocation8 + $0x1120] sm:$0xff]
      %v964 = vld [vmem:[#allocation8 + $0x1128] sm:$0xff]
      %v965 = vld [vmem:[#allocation8 + $0x1130] sm:$0xff]
      %v966 = vld [vmem:[#allocation8 + $0x1138] sm:$0xff]
      %v967 = vld [vmem:[#allocation8 + $0x1140] sm:$0xff]
      %v968 = vld [vmem:[#allocation8 + $0x1148] sm:$0xff]
      %v969 = vld [vmem:[#allocation8 + $0x1150] sm:$0xff]
      %v970 = vld [vmem:[#allocation8 + $0x1158] sm:$0xff]
      %v971 = vld [vmem:[#allocation8 + $0x1160] sm:$0xff]
      %v972 = vld [vmem:[#allocation8 + $0x1168] sm:$0xff]
      %v973 = vld [vmem:[#allocation8 + $0x1170] sm:$0xff]
      %v974 = vld [vmem:[#allocation8 + $0x1178] sm:$0xff]
      %v975 = vld [vmem:[#allocation8 + $0x1180] sm:$0xff]
      %v976 = vld [vmem:[#allocation8 + $0x1188] sm:$0xff]
      %v977 = vld [vmem:[#allocation8 + $0x1190] sm:$0xff]
      %v978 = vld [vmem:[#allocation8 + $0x1198] sm:$0xff]
      %v979 = vld [vmem:[#allocation8 + $0x11a0] sm:$0xff]
      %v980 = vld [vmem:[#allocation8 + $0x11a8] sm:$0xff]
      %v981 = vld [vmem:[#allocation8 + $0x11b0] sm:$0xff]
      %v982 = vld [vmem:[#allocation8 + $0x11b8] sm:$0xff]
      %v983 = vld [vmem:[#allocation8 + $0x11c0] sm:$0xff]
      %v984 = vld [vmem:[#allocation8 + $0x11c8] sm:$0xff]
      %v985 = vld [vmem:[#allocation8 + $0x11d0] sm:$0xff]
      %v986 = vld [vmem:[#allocation8 + $0x11d8] sm:$0xff]
      %v987 = vld [vmem:[#allocation8 + $0x11e0] sm:$0xff]
      %v988 = vld [vmem:[#allocation8 + $0x11e8] sm:$0xff]
      %v989 = vld [vmem:[#allocation8 + $0x11f0] sm:$0xff]
      %v990 = vld [vmem:[#allocation8 + $0x11f8] sm:$0xff]
      %v991 = vld [vmem:[#allocation8 + $0x1200] sm:$0xff]
      %v992 = vld [vmem:[#allocation8 + $0x1208] sm:$0xff]
      %v993 = vld [vmem:[#allocation8 + $0x1210] sm:$0xff]
      %v994 = vld [vmem:[#allocation8 + $0x1218] sm:$0xff]
      %v995 = vld [vmem:[#allocation8 + $0x1220] sm:$0xff]
      %v996 = vld [vmem:[#allocation8 + $0x1228] sm:$0xff]
      %v997 = vld [vmem:[#allocation8 + $0x1230] sm:$0xff]
      %v998 = vld [vmem:[#allocation8 + $0x1238] sm:$0xff]
      %v999 = vld [vmem:[#allocation8 + $0x1240] sm:$0xff]
      %v1000 = vld [vmem:[#allocation8 + $0x1248] sm:$0xff]
      %v1001 = vld [vmem:[#allocation8 + $0x1250] sm:$0xff]
      %v1002 = vld [vmem:[#allocation8 + $0x1258] sm:$0xff]
      %v1003 = vld [vmem:[#allocation8 + $0x1260] sm:$0xff]
      %v1004 = vld [vmem:[#allocation8 + $0x1268] sm:$0xff]
      %v1005 = vld [vmem:[#allocation8 + $0x1270] sm:$0xff]
      %v1006 = vld [vmem:[#allocation8 + $0x1278] sm:$0xff]
      %v1007 = vld [vmem:[#allocation8 + $0x1280] sm:$0xff]
      %v1008 = vld [vmem:[#allocation8 + $0x1288] sm:$0xff]
      %v1009 = vld [vmem:[#allocation8 + $0x1290] sm:$0xff]
      %v1010 = vld [vmem:[#allocation8 + $0x1298] sm:$0xff]
      %v1011 = vld [vmem:[#allocation8 + $0x12a0] sm:$0xff]
      %v1012 = vld [vmem:[#allocation8 + $0x12a8] sm:$0xff]
      %v1013 = vld [vmem:[#allocation8 + $0x12b0] sm:$0xff]
      %v1014 = vld [vmem:[#allocation8 + $0x12b8] sm:$0xff]
      %v1015 = vld [vmem:[#allocation8 + $0x12c0] sm:$0xff]
      %v1016 = vld [vmem:[#allocation8 + $0x12c8] sm:$0xff]
      %v1017 = vld [vmem:[#allocation8 + $0x12d0] sm:$0xff]
      %v1018 = vld [vmem:[#allocation8 + $0x12d8] sm:$0xff]
      %v1019 = vld [vmem:[#allocation8 + $0x12e0] sm:$0xff]
      %v1020 = vld [vmem:[#allocation8 + $0x12e8] sm:$0xff]
      %v1021 = vld [vmem:[#allocation8 + $0x12f0] sm:$0xff]
      %v1022 = vld [vmem:[#allocation8 + $0x12f8] sm:$0xff]
      %v1023 = vld [vmem:[#allocation8 + $0x1300] sm:$0xff]
      %v1024 = vld [vmem:[#allocation8 + $0x1308] sm:$0xff]
      %v1025 = vld [vmem:[#allocation8 + $0x1310] sm:$0xff]
      %v1026 = vld [vmem:[#allocation8 + $0x1318] sm:$0xff]
      %v1027 = vld [vmem:[#allocation8 + $0x1320] sm:$0xff]
      %v1028 = vld [vmem:[#allocation8 + $0x1328] sm:$0xff]
      %v1029 = vld [vmem:[#allocation8 + $0x1330] sm:$0xff]
      %v1030 = vld [vmem:[#allocation8 + $0x1338] sm:$0xff]
      %v1031 = vld [vmem:[#allocation8 + $0x1340] sm:$0xff]
      %v1032 = vld [vmem:[#allocation8 + $0x1348] sm:$0xff]
      %v1033 = vld [vmem:[#allocation8 + $0x1350] sm:$0xff]
      %v1034 = vld [vmem:[#allocation8 + $0x1358] sm:$0xff]
      %v1035 = vld [vmem:[#allocation8 + $0x1360] sm:$0xff]
      %v1036 = vld [vmem:[#allocation8 + $0x1368] sm:$0xff]
      %v1037 = vld [vmem:[#allocation8 + $0x1370] sm:$0xff]
      %v1038 = vld [vmem:[#allocation8 + $0x1378] sm:$0xff]
      %v1039 = vld [vmem:[#allocation8 + $0x1380] sm:$0xff]
      %v1040 = vld [vmem:[#allocation8 + $0x1388] sm:$0xff]
      %v1041 = vld [vmem:[#allocation8 + $0x1390] sm:$0xff]
      %v1042 = vld [vmem:[#allocation8 + $0x1398] sm:$0xff]
      %v1043 = vld [vmem:[#allocation8 + $0x13a0] sm:$0xff]
      %v1044 = vld [vmem:[#allocation8 + $0x13a8] sm:$0xff]
      %v1045 = vld [vmem:[#allocation8 + $0x13b0] sm:$0xff]
      %v1046 = vld [vmem:[#allocation8 + $0x13b8] sm:$0xff]
      %v1047 = vld [vmem:[#allocation8 + $0x13c0] sm:$0xff]
      %v1048 = vld [vmem:[#allocation8 + $0x13c8] sm:$0xff]
      %v1049 = vld [vmem:[#allocation8 + $0x13d0] sm:$0xff]
      %v1050 = vld [vmem:[#allocation8 + $0x13d8] sm:$0xff]
      %v1051 = vld [vmem:[#allocation8 + $0x13e0] sm:$0xff]
      %v1052 = vld [vmem:[#allocation8 + $0x13e8] sm:$0xff]
      %v1053 = vld [vmem:[#allocation8 + $0x13f0] sm:$0xff]
      %v1054 = vld [vmem:[#allocation8 + $0x13f8] sm:$0xff]
      %v1055 = vld [vmem:[#allocation8 + $0x1400] sm:$0xff]
      %v1056 = vld [vmem:[#allocation8 + $0x1408] sm:$0xff]
      %v1057 = vld [vmem:[#allocation8 + $0x1410] sm:$0xff]
      %v1058 = vld [vmem:[#allocation8 + $0x1418] sm:$0xff]
      %v1059 = vld [vmem:[#allocation8 + $0x1420] sm:$0xff]
      %v1060 = vld [vmem:[#allocation8 + $0x1428] sm:$0xff]
      %v1061 = vld [vmem:[#allocation8 + $0x1430] sm:$0xff]
      %v1062 = vld [vmem:[#allocation8 + $0x1438] sm:$0xff]
      %v1063 = vld [vmem:[#allocation8 + $0x1440] sm:$0xff]
      %v1064 = vld [vmem:[#allocation8 + $0x1448] sm:$0xff]
      %v1065 = vld [vmem:[#allocation8 + $0x1450] sm:$0xff]
      %v1066 = vld [vmem:[#allocation8 + $0x1458] sm:$0xff]
      %v1067 = vld [vmem:[#allocation8 + $0x1460] sm:$0xff]
      %v1068 = vld [vmem:[#allocation8 + $0x1468] sm:$0xff]
      %v1069 = vld [vmem:[#allocation8 + $0x1470] sm:$0xff]
      %v1070 = vld [vmem:[#allocation8 + $0x1478] sm:$0xff]
      %v1071 = vld [vmem:[#allocation8 + $0x1480] sm:$0xff]
      %v1072 = vld [vmem:[#allocation8 + $0x1488] sm:$0xff]
      %v1073 = vld [vmem:[#allocation8 + $0x1490] sm:$0xff]
      %v1074 = vld [vmem:[#allocation8 + $0x1498] sm:$0xff]
      %v1075 = vld [vmem:[#allocation8 + $0x14a0] sm:$0xff]
      %v1076 = vld [vmem:[#allocation8 + $0x14a8] sm:$0xff]
      %v1077 = vld [vmem:[#allocation8 + $0x14b0] sm:$0xff]
      %v1078 = vld [vmem:[#allocation8 + $0x14b8] sm:$0xff]
      %v1079 = vld [vmem:[#allocation8 + $0x14c0] sm:$0xff]
      %v1080 = vld [vmem:[#allocation8 + $0x14c8] sm:$0xff]
      %v1081 = vld [vmem:[#allocation8 + $0x14d0] sm:$0xff]
      %v1082 = vld [vmem:[#allocation8 + $0x14d8] sm:$0xff]
      %v1083 = vld [vmem:[#allocation8 + $0x14e0] sm:$0xff]
      %v1084 = vld [vmem:[#allocation8 + $0x14e8] sm:$0xff]
      %v1085 = vld [vmem:[#allocation8 + $0x14f0] sm:$0xff]
      %v1086 = vld [vmem:[#allocation8 + $0x14f8] sm:$0xff]
      %v1087 = vld [vmem:[#allocation8 + $0x1500] sm:$0xff]
      %v1088 = vld [vmem:[#allocation8 + $0x1508] sm:$0xff]
      %v1089 = vld [vmem:[#allocation8 + $0x1510] sm:$0xff]
      %v1090 = vld [vmem:[#allocation8 + $0x1518] sm:$0xff]
      %v1091 = vld [vmem:[#allocation8 + $0x1520] sm:$0xff]
      %v1092 = vld [vmem:[#allocation8 + $0x1528] sm:$0xff]
      %v1093 = vld [vmem:[#allocation8 + $0x1530] sm:$0xff]
      %v1094 = vld [vmem:[#allocation8 + $0x1538] sm:$0xff]
      %v1095 = vld [vmem:[#allocation8 + $0x1540] sm:$0xff]
      %v1096 = vld [vmem:[#allocation8 + $0x1548] sm:$0xff]
      %v1097 = vld [vmem:[#allocation8 + $0x1550] sm:$0xff]
      %v1098 = vld [vmem:[#allocation8 + $0x1558] sm:$0xff]
      %v1099 = vld [vmem:[#allocation8 + $0x1560] sm:$0xff]
      %v1100 = vld [vmem:[#allocation8 + $0x1568] sm:$0xff]
      %v1101 = vld [vmem:[#allocation8 + $0x1570] sm:$0xff]
      %v1102 = vld [vmem:[#allocation8 + $0x1578] sm:$0xff]
      %v1103 = vld [vmem:[#allocation8 + $0x1580] sm:$0xff]
      %v1104 = vld [vmem:[#allocation8 + $0x1588] sm:$0xff]
      %v1105 = vld [vmem:[#allocation8 + $0x1590] sm:$0xff]
      %v1106 = vld [vmem:[#allocation8 + $0x1598] sm:$0xff]
      %v1107 = vld [vmem:[#allocation8 + $0x15a0] sm:$0xff]
      %v1108 = vld [vmem:[#allocation8 + $0x15a8] sm:$0xff]
      %v1109 = vld [vmem:[#allocation8 + $0x15b0] sm:$0xff]
      %v1110 = vld [vmem:[#allocation8 + $0x15b8] sm:$0xff]
      %v1111 = vld [vmem:[#allocation8 + $0x15c0] sm:$0xff]
      %v1112 = vld [vmem:[#allocation8 + $0x15c8] sm:$0xff]
      %v1113 = vld [vmem:[#allocation8 + $0x15d0] sm:$0xff]
      %v1114 = vld [vmem:[#allocation8 + $0x15d8] sm:$0xff]
      %v1115 = vld [vmem:[#allocation8 + $0x15e0] sm:$0xff]
      %v1116 = vld [vmem:[#allocation8 + $0x15e8] sm:$0xff]
      %v1117 = vld [vmem:[#allocation8 + $0x15f0] sm:$0xff]
      %v1118 = vld [vmem:[#allocation8 + $0x15f8] sm:$0xff]
      %v1119 = vld [vmem:[#allocation8 + $0x1600] sm:$0xff]
      %v1120 = vld [vmem:[#allocation8 + $0x1608] sm:$0xff]
      %v1121 = vld [vmem:[#allocation8 + $0x1610] sm:$0xff]
      %v1122 = vld [vmem:[#allocation8 + $0x1618] sm:$0xff]
      %v1123 = vld [vmem:[#allocation8 + $0x1620] sm:$0xff]
      %v1124 = vld [vmem:[#allocation8 + $0x1628] sm:$0xff]
      %v1125 = vld [vmem:[#allocation8 + $0x1630] sm:$0xff]
      %v1126 = vld [vmem:[#allocation8 + $0x1638] sm:$0xff]
      %v1127 = vld [vmem:[#allocation8 + $0x1640] sm:$0xff]
      %v1128 = vld [vmem:[#allocation8 + $0x1648] sm:$0xff]
      %v1129 = vld [vmem:[#allocation8 + $0x1650] sm:$0xff]
      %v1130 = vld [vmem:[#allocation8 + $0x1658] sm:$0xff]
      %v1131 = vld [vmem:[#allocation8 + $0x1660] sm:$0xff]
      %v1132 = vld [vmem:[#allocation8 + $0x1668] sm:$0xff]
      %v1133 = vld [vmem:[#allocation8 + $0x1670] sm:$0xff]
      %v1134 = vld [vmem:[#allocation8 + $0x1678] sm:$0xff]
      %v1135 = vld [vmem:[#allocation8 + $0x1680] sm:$0xff]
      %v1136 = vld [vmem:[#allocation8 + $0x1688] sm:$0xff]
      %v1137 = vld [vmem:[#allocation8 + $0x1690] sm:$0xff]
      %v1138 = vld [vmem:[#allocation8 + $0x1698] sm:$0xff]
      %v1139 = vld [vmem:[#allocation8 + $0x16a0] sm:$0xff]
      %v1140 = vld [vmem:[#allocation8 + $0x16a8] sm:$0xff]
      %v1141 = vld [vmem:[#allocation8 + $0x16b0] sm:$0xff]
      %v1142 = vld [vmem:[#allocation8 + $0x16b8] sm:$0xff]
      %v1143 = vld [vmem:[#allocation8 + $0x16c0] sm:$0xff]
      %v1144 = vld [vmem:[#allocation8 + $0x16c8] sm:$0xff]
      %v1145 = vld [vmem:[#allocation8 + $0x16d0] sm:$0xff]
      %v1146 = vld [vmem:[#allocation8 + $0x16d8] sm:$0xff]
      %v1147 = vld [vmem:[#allocation8 + $0x16e0] sm:$0xff]
      %v1148 = vld [vmem:[#allocation8 + $0x16e8] sm:$0xff]
      %v1149 = vld [vmem:[#allocation8 + $0x16f0] sm:$0xff]
      %v1150 = vld [vmem:[#allocation8 + $0x16f8] sm:$0xff]
      %v1151 = vld [vmem:[#allocation8 + $0x1700] sm:$0xff]
      %v1152 = vld [vmem:[#allocation8 + $0x1708] sm:$0xff]
      %v1153 = vld [vmem:[#allocation8 + $0x1710] sm:$0xff]
      %v1154 = vld [vmem:[#allocation8 + $0x1718] sm:$0xff]
      %v1155 = vld [vmem:[#allocation8 + $0x1720] sm:$0xff]
      %v1156 = vld [vmem:[#allocation8 + $0x1728] sm:$0xff]
      %v1157 = vld [vmem:[#allocation8 + $0x1730] sm:$0xff]
      %v1158 = vld [vmem:[#allocation8 + $0x1738] sm:$0xff]
      %v1159 = vld [vmem:[#allocation8 + $0x1740] sm:$0xff]
      %v1160 = vld [vmem:[#allocation8 + $0x1748] sm:$0xff]
      %v1161 = vld [vmem:[#allocation8 + $0x1750] sm:$0xff]
      %v1162 = vld [vmem:[#allocation8 + $0x1758] sm:$0xff]
      %v1163 = vld [vmem:[#allocation8 + $0x1760] sm:$0xff]
      %v1164 = vld [vmem:[#allocation8 + $0x1768] sm:$0xff]
      %v1165 = vld [vmem:[#allocation8 + $0x1770] sm:$0xff]
      %v1166 = vld [vmem:[#allocation8 + $0x1778] sm:$0xff]
      %v1167 = vld [vmem:[#allocation8 + $0x1780] sm:$0xff]
      %v1168 = vld [vmem:[#allocation8 + $0x1788] sm:$0xff]
      %v1169 = vld [vmem:[#allocation8 + $0x1790] sm:$0xff]
      %v1170 = vld [vmem:[#allocation8 + $0x1798] sm:$0xff]
      %v1171 = vld [vmem:[#allocation8 + $0x17a0] sm:$0xff]
      %v1172 = vld [vmem:[#allocation8 + $0x17a8] sm:$0xff]
      %v1173 = vld [vmem:[#allocation8 + $0x17b0] sm:$0xff]
      %v1174 = vld [vmem:[#allocation8 + $0x17b8] sm:$0xff]
      %v1175 = vld [vmem:[#allocation8 + $0x17c0] sm:$0xff]
      %v1176 = vld [vmem:[#allocation8 + $0x17c8] sm:$0xff]
      %v1177 = vld [vmem:[#allocation8 + $0x17d0] sm:$0xff]
      %v1178 = vld [vmem:[#allocation8 + $0x17d8] sm:$0xff]
      %v1179 = vld [vmem:[#allocation8 + $0x17e0] sm:$0xff]
      %v1180 = vld [vmem:[#allocation8 + $0x17e8] sm:$0xff]
      %v1181 = vld [vmem:[#allocation8 + $0x17f0] sm:$0xff]
      %v1182 = vld [vmem:[#allocation8 + $0x17f8] sm:$0xff]
      %v1183 = vld [vmem:[#allocation8 + $0x1800] sm:$0xff]
      %v1184 = vld [vmem:[#allocation8 + $0x1808] sm:$0xff]
      %v1185 = vld [vmem:[#allocation8 + $0x1810] sm:$0xff]
      %v1186 = vld [vmem:[#allocation8 + $0x1818] sm:$0xff]
      %v1187 = vld [vmem:[#allocation8 + $0x1820] sm:$0xff]
      %v1188 = vld [vmem:[#allocation8 + $0x1828] sm:$0xff]
      %v1189 = vld [vmem:[#allocation8 + $0x1830] sm:$0xff]
      %v1190 = vld [vmem:[#allocation8 + $0x1838] sm:$0xff]
      %v1191 = vld [vmem:[#allocation8 + $0x1840] sm:$0xff]
      %v1192 = vld [vmem:[#allocation8 + $0x1848] sm:$0xff]
      %v1193 = vld [vmem:[#allocation8 + $0x1850] sm:$0xff]
      %v1194 = vld [vmem:[#allocation8 + $0x1858] sm:$0xff]
      %v1195 = vld [vmem:[#allocation8 + $0x1860] sm:$0xff]
      %v1196 = vld [vmem:[#allocation8 + $0x1868] sm:$0xff]
      %v1197 = vld [vmem:[#allocation8 + $0x1870] sm:$0xff]
      %v1198 = vld [vmem:[#allocation8 + $0x1878] sm:$0xff]
      %v1199 = vld [vmem:[#allocation8 + $0x1880] sm:$0xff]
      %v1200 = vld [vmem:[#allocation8 + $0x1888] sm:$0xff]
      %v1201 = vld [vmem:[#allocation8 + $0x1890] sm:$0xff]
      %v1202 = vld [vmem:[#allocation8 + $0x1898] sm:$0xff]
      %v1203 = vld [vmem:[#allocation8 + $0x18a0] sm:$0xff]
      %v1204 = vld [vmem:[#allocation8 + $0x18a8] sm:$0xff]
      %v1205 = vld [vmem:[#allocation8 + $0x18b0] sm:$0xff]
      %v1206 = vld [vmem:[#allocation8 + $0x18b8] sm:$0xff]
      %v1207 = vld [vmem:[#allocation8 + $0x18c0] sm:$0xff]
      %v1208 = vld [vmem:[#allocation8 + $0x18c8] sm:$0xff]
      %v1209 = vld [vmem:[#allocation8 + $0x18d0] sm:$0xff]
      %v1210 = vld [vmem:[#allocation8 + $0x18d8] sm:$0xff]
      %v1211 = vld [vmem:[#allocation8 + $0x18e0] sm:$0xff]
      %v1212 = vld [vmem:[#allocation8 + $0x18e8] sm:$0xff]
      %v1213 = vld [vmem:[#allocation8 + $0x18f0] sm:$0xff]
      %v1214 = vld [vmem:[#allocation8 + $0x18f8] sm:$0xff]
      %v1215 = vld [vmem:[#allocation8 + $0x1900] sm:$0xff]
      %v1216 = vld [vmem:[#allocation8 + $0x1908] sm:$0xff]
      %v1217 = vld [vmem:[#allocation8 + $0x1910] sm:$0xff]
      %v1218 = vld [vmem:[#allocation8 + $0x1918] sm:$0xff]
      %v1219 = vld [vmem:[#allocation8 + $0x1920] sm:$0xff]
      %v1220 = vld [vmem:[#allocation8 + $0x1928] sm:$0xff]
      %v1221 = vld [vmem:[#allocation8 + $0x1930] sm:$0xff]
      %v1222 = vld [vmem:[#allocation8 + $0x1938] sm:$0xff]
      %v1223 = vld [vmem:[#allocation8 + $0x1940] sm:$0xff]
      %v1224 = vld [vmem:[#allocation8 + $0x1948] sm:$0xff]
      %v1225 = vld [vmem:[#allocation8 + $0x1950] sm:$0xff]
      %v1226 = vld [vmem:[#allocation8 + $0x1958] sm:$0xff]
      %v1227 = vld [vmem:[#allocation8 + $0x1960] sm:$0xff]
      %v1228 = vld [vmem:[#allocation8 + $0x1968] sm:$0xff]
      %v1229 = vld [vmem:[#allocation8 + $0x1970] sm:$0xff]
      %v1230 = vld [vmem:[#allocation8 + $0x1978] sm:$0xff]
      %v1231 = vld [vmem:[#allocation8 + $0x1980] sm:$0xff]
      %v1232 = vld [vmem:[#allocation8 + $0x1988] sm:$0xff]
      %v1233 = vld [vmem:[#allocation8 + $0x1990] sm:$0xff]
      %v1234 = vld [vmem:[#allocation8 + $0x1998] sm:$0xff]
      %v1235 = vld [vmem:[#allocation8 + $0x19a0] sm:$0xff]
      %v1236 = vld [vmem:[#allocation8 + $0x19a8] sm:$0xff]
      %v1237 = vld [vmem:[#allocation8 + $0x19b0] sm:$0xff]
      %v1238 = vld [vmem:[#allocation8 + $0x19b8] sm:$0xff]
      %v1239 = vld [vmem:[#allocation8 + $0x19c0] sm:$0xff]
      %v1240 = vld [vmem:[#allocation8 + $0x19c8] sm:$0xff]
      %v1241 = vld [vmem:[#allocation8 + $0x19d0] sm:$0xff]
      %v1242 = vld [vmem:[#allocation8 + $0x19d8] sm:$0xff]
      %v1243 = vld [vmem:[#allocation8 + $0x19e0] sm:$0xff]
      %v1244 = vld [vmem:[#allocation8 + $0x19e8] sm:$0xff]
      %v1245 = vld [vmem:[#allocation8 + $0x19f0] sm:$0xff]
      %v1246 = vld [vmem:[#allocation8 + $0x19f8] sm:$0xff]
      %v1247 = vld [vmem:[#allocation8 + $0x1a00] sm:$0xff]
      %v1248 = vld [vmem:[#allocation8 + $0x1a08] sm:$0xff]
      %v1249 = vld [vmem:[#allocation8 + $0x1a10] sm:$0xff]
      %v1250 = vld [vmem:[#allocation8 + $0x1a18] sm:$0xff]
      %v1251 = vld [vmem:[#allocation8 + $0x1a20] sm:$0xff]
      %v1252 = vld [vmem:[#allocation8 + $0x1a28] sm:$0xff]
      %v1253 = vld [vmem:[#allocation8 + $0x1a30] sm:$0xff]
      %v1254 = vld [vmem:[#allocation8 + $0x1a38] sm:$0xff]
      %v1255 = vld [vmem:[#allocation8 + $0x1a40] sm:$0xff]
      %v1256 = vld [vmem:[#allocation8 + $0x1a48] sm:$0xff]
      %v1257 = vld [vmem:[#allocation8 + $0x1a50] sm:$0xff]
      %v1258 = vld [vmem:[#allocation8 + $0x1a58] sm:$0xff]
      %v1259 = vld [vmem:[#allocation8 + $0x1a60] sm:$0xff]
      %v1260 = vld [vmem:[#allocation8 + $0x1a68] sm:$0xff]
      %v1261 = vld [vmem:[#allocation8 + $0x1a70] sm:$0xff]
      %v1262 = vld [vmem:[#allocation8 + $0x1a78] sm:$0xff]
      %v1263 = vld [vmem:[#allocation8 + $0x1a80] sm:$0xff]
      %v1264 = vld [vmem:[#allocation8 + $0x1a88] sm:$0xff]
      %v1265 = vld [vmem:[#allocation8 + $0x1a90] sm:$0xff]
      %v1266 = vld [vmem:[#allocation8 + $0x1a98] sm:$0xff]
      %v1267 = vld [vmem:[#allocation8 + $0x1aa0] sm:$0xff]
      %v1268 = vld [vmem:[#allocation8 + $0x1aa8] sm:$0xff]
      %v1269 = vld [vmem:[#allocation8 + $0x1ab0] sm:$0xff]
      %v1270 = vld [vmem:[#allocation8 + $0x1ab8] sm:$0xff]
      %v1271 = vld [vmem:[#allocation8 + $0x1ac0] sm:$0xff]
      %v1272 = vld [vmem:[#allocation8 + $0x1ac8] sm:$0xff]
      %v1273 = vld [vmem:[#allocation8 + $0x1ad0] sm:$0xff]
      %v1274 = vld [vmem:[#allocation8 + $0x1ad8] sm:$0xff]
      %v1275 = vld [vmem:[#allocation8 + $0x1ae0] sm:$0xff]
      %v1276 = vld [vmem:[#allocation8 + $0x1ae8] sm:$0xff]
      %v1277 = vld [vmem:[#allocation8 + $0x1af0] sm:$0xff]
      %v1278 = vld [vmem:[#allocation8 + $0x1af8] sm:$0xff]
      %v1279 = vld [vmem:[#allocation8 + $0x1b00] sm:$0xff]
      %v1280 = vld [vmem:[#allocation8 + $0x1b08] sm:$0xff]
      %v1281 = vld [vmem:[#allocation8 + $0x1b10] sm:$0xff]
      %v1282 = vld [vmem:[#allocation8 + $0x1b18] sm:$0xff]
      %v1283 = vld [vmem:[#allocation8 + $0x1b20] sm:$0xff]
      %v1284 = vld [vmem:[#allocation8 + $0x1b28] sm:$0xff]
      %v1285 = vld [vmem:[#allocation8 + $0x1b30] sm:$0xff]
      %v1286 = vld [vmem:[#allocation8 + $0x1b38] sm:$0xff]
      %v1287 = vld [vmem:[#allocation8 + $0x1b40] sm:$0xff]
      %v1288 = vld [vmem:[#allocation8 + $0x1b48] sm:$0xff]
      %v1289 = vld [vmem:[#allocation8 + $0x1b50] sm:$0xff]
      %v1290 = vld [vmem:[#allocation8 + $0x1b58] sm:$0xff]
      %v1291 = vld [vmem:[#allocation8 + $0x1b60] sm:$0xff]
      %v1292 = vld [vmem:[#allocation8 + $0x1b68] sm:$0xff]
      %v1293 = vld [vmem:[#allocation8 + $0x1b70] sm:$0xff]
      %v1294 = vld [vmem:[#allocation8 + $0x1b78] sm:$0xff]
      %v1295 = vld [vmem:[#allocation8 + $0x1b80] sm:$0xff]
      %v1296 = vld [vmem:[#allocation8 + $0x1b88] sm:$0xff]
      %v1297 = vld [vmem:[#allocation8 + $0x1b90] sm:$0xff]
      %v1298 = vld [vmem:[#allocation8 + $0x1b98] sm:$0xff]
      %v1299 = vld [vmem:[#allocation8 + $0x1ba0] sm:$0xff]
      %v1300 = vld [vmem:[#allocation8 + $0x1ba8] sm:$0xff]
      %v1301 = vld [vmem:[#allocation8 + $0x1bb0] sm:$0xff]
      %v1302 = vld [vmem:[#allocation8 + $0x1bb8] sm:$0xff]
      %v1303 = vld [vmem:[#allocation8 + $0x1bc0] sm:$0xff]
      %v1304 = vld [vmem:[#allocation8 + $0x1bc8] sm:$0xff]
      %v1305 = vld [vmem:[#allocation8 + $0x1bd0] sm:$0xff]
      %v1306 = vld [vmem:[#allocation8 + $0x1bd8] sm:$0xff]
      %v1307 = vld [vmem:[#allocation8 + $0x1be0] sm:$0xff]
      %v1308 = vld [vmem:[#allocation8 + $0x1be8] sm:$0xff]
      %v1309 = vld [vmem:[#allocation8 + $0x1bf0] sm:$0xff]
      %v1310 = vld [vmem:[#allocation8 + $0x1bf8] sm:$0xff]
      %v1311 = vld [vmem:[#allocation8 + $0x1c00] sm:$0xff]
      %v1312 = vld [vmem:[#allocation8 + $0x1c08] sm:$0xff]
      %v1313 = vld [vmem:[#allocation8 + $0x1c10] sm:$0xff]
      %v1314 = vld [vmem:[#allocation8 + $0x1c18] sm:$0xff]
      %v1315 = vld [vmem:[#allocation8 + $0x1c20] sm:$0xff]
      %v1316 = vld [vmem:[#allocation8 + $0x1c28] sm:$0xff]
      %v1317 = vld [vmem:[#allocation8 + $0x1c30] sm:$0xff]
      %v1318 = vld [vmem:[#allocation8 + $0x1c38] sm:$0xff]
      %v1319 = vld [vmem:[#allocation8 + $0x1c40] sm:$0xff]
      %v1320 = vld [vmem:[#allocation8 + $0x1c48] sm:$0xff]
      %v1321 = vld [vmem:[#allocation8 + $0x1c50] sm:$0xff]
      %v1322 = vld [vmem:[#allocation8 + $0x1c58] sm:$0xff]
      %v1323 = vld [vmem:[#allocation8 + $0x1c60] sm:$0xff]
      %v1324 = vld [vmem:[#allocation8 + $0x1c68] sm:$0xff]
      %v1325 = vld [vmem:[#allocation8 + $0x1c70] sm:$0xff]
      %v1326 = vld [vmem:[#allocation8 + $0x1c78] sm:$0xff]
      %v1327 = vld [vmem:[#allocation8 + $0x1c80] sm:$0xff]
      %v1328 = vld [vmem:[#allocation8 + $0x1c88] sm:$0xff]
      %v1329 = vld [vmem:[#allocation8 + $0x1c90] sm:$0xff]
      %v1330 = vld [vmem:[#allocation8 + $0x1c98] sm:$0xff]
      %v1331 = vld [vmem:[#allocation8 + $0x1ca0] sm:$0xff]
      %v1332 = vld [vmem:[#allocation8 + $0x1ca8] sm:$0xff]
      %v1333 = vld [vmem:[#allocation8 + $0x1cb0] sm:$0xff]
      %v1334 = vld [vmem:[#allocation8 + $0x1cb8] sm:$0xff]
      %v1335 = vld [vmem:[#allocation8 + $0x1cc0] sm:$0xff]
      %v1336 = vld [vmem:[#allocation8 + $0x1cc8] sm:$0xff]
      %v1337 = vld [vmem:[#allocation8 + $0x1cd0] sm:$0xff]
      %v1338 = vld [vmem:[#allocation8 + $0x1cd8] sm:$0xff]
      %v1339 = vld [vmem:[#allocation8 + $0x1ce0] sm:$0xff]
      %v1340 = vld [vmem:[#allocation8 + $0x1ce8] sm:$0xff]
      %v1341 = vld [vmem:[#allocation8 + $0x1cf0] sm:$0xff]
      %v1342 = vld [vmem:[#allocation8 + $0x1cf8] sm:$0xff]
      %v1343 = vld [vmem:[#allocation8 + $0x1d00] sm:$0xff]
      %v1344 = vld [vmem:[#allocation8 + $0x1d08] sm:$0xff]
      %v1345 = vld [vmem:[#allocation8 + $0x1d10] sm:$0xff]
      %v1346 = vld [vmem:[#allocation8 + $0x1d18] sm:$0xff]
      %v1347 = vld [vmem:[#allocation8 + $0x1d20] sm:$0xff]
      %v1348 = vld [vmem:[#allocation8 + $0x1d28] sm:$0xff]
      %v1349 = vld [vmem:[#allocation8 + $0x1d30] sm:$0xff]
      %v1350 = vld [vmem:[#allocation8 + $0x1d38] sm:$0xff]
      %v1351 = vld [vmem:[#allocation8 + $0x1d40] sm:$0xff]
      %v1352 = vld [vmem:[#allocation8 + $0x1d48] sm:$0xff]
      %v1353 = vld [vmem:[#allocation8 + $0x1d50] sm:$0xff]
      %v1354 = vld [vmem:[#allocation8 + $0x1d58] sm:$0xff]
      %v1355 = vld [vmem:[#allocation8 + $0x1d60] sm:$0xff]
      %v1356 = vld [vmem:[#allocation8 + $0x1d68] sm:$0xff]
      %v1357 = vld [vmem:[#allocation8 + $0x1d70] sm:$0xff]
      %v1358 = vld [vmem:[#allocation8 + $0x1d78] sm:$0xff]
      %v1359 = vld [vmem:[#allocation8 + $0x1d80] sm:$0xff]
      %v1360 = vld [vmem:[#allocation8 + $0x1d88] sm:$0xff]
      %v1361 = vld [vmem:[#allocation8 + $0x1d90] sm:$0xff]
      %v1362 = vld [vmem:[#allocation8 + $0x1d98] sm:$0xff]
      %v1363 = vld [vmem:[#allocation8 + $0x1da0] sm:$0xff]
      %v1364 = vld [vmem:[#allocation8 + $0x1da8] sm:$0xff]
      %v1365 = vld [vmem:[#allocation8 + $0x1db0] sm:$0xff]
      %v1366 = vld [vmem:[#allocation8 + $0x1db8] sm:$0xff]
      %v1367 = vld [vmem:[#allocation8 + $0x1dc0] sm:$0xff]
      %v1368 = vld [vmem:[#allocation8 + $0x1dc8] sm:$0xff]
      %v1369 = vld [vmem:[#allocation8 + $0x1dd0] sm:$0xff]
      %v1370 = vld [vmem:[#allocation8 + $0x1dd8] sm:$0xff]
      %v1371 = vld [vmem:[#allocation8 + $0x1de0] sm:$0xff]
      %v1372 = vld [vmem:[#allocation8 + $0x1de8] sm:$0xff]
      %v1373 = vld [vmem:[#allocation8 + $0x1df0] sm:$0xff]
      %v1374 = vld [vmem:[#allocation8 + $0x1df8] sm:$0xff]
      %v1375 = vld [vmem:[#allocation8 + $0x1e00] sm:$0xff]
      %v1376 = vld [vmem:[#allocation8 + $0x1e08] sm:$0xff]
      %v1377 = vld [vmem:[#allocation8 + $0x1e10] sm:$0xff]
      %v1378 = vld [vmem:[#allocation8 + $0x1e18] sm:$0xff]
      %v1379 = vld [vmem:[#allocation8 + $0x1e20] sm:$0xff]
      %v1380 = vld [vmem:[#allocation8 + $0x1e28] sm:$0xff]
      %v1381 = vld [vmem:[#allocation8 + $0x1e30] sm:$0xff]
      %v1382 = vld [vmem:[#allocation8 + $0x1e38] sm:$0xff]
      %v1383 = vld [vmem:[#allocation8 + $0x1e40] sm:$0xff]
      %v1384 = vld [vmem:[#allocation8 + $0x1e48] sm:$0xff]
      %v1385 = vld [vmem:[#allocation8 + $0x1e50] sm:$0xff]
      %v1386 = vld [vmem:[#allocation8 + $0x1e58] sm:$0xff]
      %v1387 = vld [vmem:[#allocation8 + $0x1e60] sm:$0xff]
      %v1388 = vld [vmem:[#allocation8 + $0x1e68] sm:$0xff]
      %v1389 = vld [vmem:[#allocation8 + $0x1e70] sm:$0xff]
      %v1390 = vld [vmem:[#allocation8 + $0x1e78] sm:$0xff]
      %v1391 = vld [vmem:[#allocation8 + $0x1e80] sm:$0xff]
      %v1392 = vld [vmem:[#allocation8 + $0x1e88] sm:$0xff]
      %v1393 = vld [vmem:[#allocation8 + $0x1e90] sm:$0xff]
      %v1394 = vld [vmem:[#allocation8 + $0x1e98] sm:$0xff]
      %v1395 = vld [vmem:[#allocation8 + $0x1ea0] sm:$0xff]
      %v1396 = vld [vmem:[#allocation8 + $0x1ea8] sm:$0xff]
      %v1397 = vld [vmem:[#allocation8 + $0x1eb0] sm:$0xff]
      %v1398 = vld [vmem:[#allocation8 + $0x1eb8] sm:$0xff]
      %v1399 = vld [vmem:[#allocation8 + $0x1ec0] sm:$0xff]
      %v1400 = vld [vmem:[#allocation8 + $0x1ec8] sm:$0xff]
      %v1401 = vld [vmem:[#allocation8 + $0x1ed0] sm:$0xff]
      %v1402 = vld [vmem:[#allocation8 + $0x1ed8] sm:$0xff]
      %v1403 = vld [vmem:[#allocation8 + $0x1ee0] sm:$0xff]
      %v1404 = vld [vmem:[#allocation8 + $0x1ee8] sm:$0xff]
      %v1405 = vld [vmem:[#allocation8 + $0x1ef0] sm:$0xff]
      %v1406 = vld [vmem:[#allocation8 + $0x1ef8] sm:$0xff]
      %v1407 = vld [vmem:[#allocation8 + $0x1f00] sm:$0xff]
      %v1408 = vld [vmem:[#allocation8 + $0x1f08] sm:$0xff]
      %v1409 = vld [vmem:[#allocation8 + $0x1f10] sm:$0xff]
      %v1410 = vld [vmem:[#allocation8 + $0x1f18] sm:$0xff]
      %v1411 = vld [vmem:[#allocation8 + $0x1f20] sm:$0xff]
      %v1412 = vld [vmem:[#allocation8 + $0x1f28] sm:$0xff]
      %v1413 = vld [vmem:[#allocation8 + $0x1f30] sm:$0xff]
      %v1414 = vld [vmem:[#allocation8 + $0x1f38] sm:$0xff]
      %v1415 = vld [vmem:[#allocation8 + $0x1f40] sm:$0xff]
      %v1416 = vld [vmem:[#allocation8 + $0x1f48] sm:$0xff]
      %v1417 = vld [vmem:[#allocation8 + $0x1f50] sm:$0xff]
      %v1418 = vld [vmem:[#allocation8 + $0x1f58] sm:$0xff]
      %v1419 = vld [vmem:[#allocation8 + $0x1f60] sm:$0xff]
      %v1420 = vld [vmem:[#allocation8 + $0x1f68] sm:$0xff]
      %v1421 = vld [vmem:[#allocation8 + $0x1f70] sm:$0xff]
      %v1422 = vld [vmem:[#allocation8 + $0x1f78] sm:$0xff]
      %v1423 = vld [vmem:[#allocation8 + $0x1f80] sm:$0xff]
      %v1424 = vld [vmem:[#allocation8 + $0x1f88] sm:$0xff]
      %v1425 = vld [vmem:[#allocation8 + $0x1f90] sm:$0xff]
      %v1426 = vld [vmem:[#allocation8 + $0x1f98] sm:$0xff]
      %v1427 = vld [vmem:[#allocation8 + $0x1fa0] sm:$0xff]
      %v1428 = vld [vmem:[#allocation8 + $0x1fa8] sm:$0xff]
      %v1429 = vld [vmem:[#allocation8 + $0x1fb0] sm:$0xff]
      %v1430 = vld [vmem:[#allocation8 + $0x1fb8] sm:$0xff]
      %v1431 = vld [vmem:[#allocation8 + $0x1fc0] sm:$0xff]
      %v1432 = vld [vmem:[#allocation8 + $0x1fc8] sm:$0xff]
      %v1433 = vld [vmem:[#allocation8 + $0x1fd0] sm:$0xff]
      %v1434 = vld [vmem:[#allocation8 + $0x1fd8] sm:$0xff]
      %v1435 = vld [vmem:[#allocation8 + $0x1fe0] sm:$0xff]
      %v1436 = vld [vmem:[#allocation8 + $0x1fe8] sm:$0xff]
      %v1437 = vld [vmem:[#allocation8 + $0x1ff0] sm:$0xff]
      %v1438 = vld [vmem:[#allocation8 + $0x1ff8] sm:$0xff]
      %1439 = vmatprep.subr.mxu0 %v536
      %1440 = vmatpush1.msra.mxu0 %v535
      %1441 = vmatprep.subr.mxu0 %v528
      %1442 = vmatpush1.msra.mxu0 %v527
      %1443 = vmatprep.subr.mxu0 %v520
      %1444 = vmatpush1.msra.mxu0 %v519
      %1445 = vmatprep.subr.mxu0 %v512
      %1446 = vmatpush1.msra.mxu0 %v511
      %1447 = vmatprep.subr.mxu0 %v504
      %1448 = vmatpush1.msra.mxu0 %v503
      %1449 = vmatprep.subr.mxu0 %v496
      %1450 = vmatpush1.msra.mxu0 %v495
      %1451 = vmatprep.subr.mxu0 %v488
      %1452 = vmatpush1.msra.mxu0 %v487
      %1453 = vmatprep.subr.mxu0 %v480
      %1454 = vmatpush1.msra.mxu0 %v479
      %1455 = vmatprep.subr.mxu0 %v472
      %1456 = vmatpush1.msra.mxu0 %v471
      %1457 = vmatprep.subr.mxu0 %v464
      %1458 = vmatpush1.msra.mxu0 %v463
      %1459 = vmatprep.subr.mxu0 %v456
      %1460 = vmatpush1.msra.mxu0 %v455
      %1461 = vmatprep.subr.mxu0 %v448
      %1462 = vmatpush1.msra.mxu0 %v447
      %1463 = vmatprep.subr.mxu0 %v440
      %1464 = vmatpush1.msra.mxu0 %v439
      %1465 = vmatprep.subr.mxu0 %v432
      %1466 = vmatpush1.msra.mxu0 %v431
      %1467 = vmatprep.subr.mxu0 %v424
      %1468 = vmatpush1.msra.mxu0 %v423
      %1469 = vmatprep.subr.mxu0 %v416
      %1470 = vmatpush1.msra.mxu0 %v415
      %1471 = vmatprep.subr.mxu0 %v664
      %1472 = vmatpush2.msra.mxu0 %v663
      %1473 = vmatprep.subr.mxu0 %v656
      %1474 = vmatpush2.msra.mxu0 %v655
      %1475 = vmatprep.subr.mxu0 %v648
      %1476 = vmatpush2.msra.mxu0 %v647
      %1477 = vmatprep.subr.mxu0 %v640
      %1478 = vmatpush2.msra.mxu0 %v639
      %1479 = vmatprep.subr.mxu0 %v632
      %1480 = vmatpush2.msra.mxu0 %v631
      %1481 = vmatprep.subr.mxu0 %v624
      %1482 = vmatpush2.msra.mxu0 %v623
      %1483 = vmatprep.subr.mxu0 %v616
      %1484 = vmatpush2.msra.mxu0 %v615
      %1485 = vmatprep.subr.mxu0 %v608
      %1486 = vmatpush2.msra.mxu0 %v607
      %1487 = vmatprep.subr.mxu0 %v600
      %1488 = vmatpush2.msra.mxu0 %v599
      %1489 = vmatprep.subr.mxu0 %v592
      %1490 = vmatpush2.msra.mxu0 %v591
      %1491 = vmatprep.subr.mxu0 %v584
      %1492 = vmatpush2.msra.mxu0 %v583
      %1493 = vmatprep.subr.mxu0 %v576
      %1494 = vmatpush2.msra.mxu0 %v575
      %1495 = vmatprep.subr.mxu0 %v568
      %1496 = vmatpush2.msra.mxu0 %v567
      %1497 = vmatprep.subr.mxu0 %v560
      %1498 = vmatpush2.msra.mxu0 %v559
      %1499 = vmatprep.subr.mxu0 %v552
      %1500 = vmatpush2.msra.mxu0 %v551
      %1501 = vmatprep.subr.mxu0 %v544
      %1502 = vmatpush2.msra.mxu0 %v543
      %1503 = vmatprep.mubr.f32.mxu0 %v408
      %1504 = vmatmul.mubr.f32.gmra.mxu0 %v407
      %v1505 = vpop.f32.mrf.mxu0
      %v1506 = vadd.f32 0.0, %v1505
      %v1507 = vpop.f32.mrf.mxu0
      %v1508 = vadd.f32 0.0, %v1507
      %1509 = vdwg.mxu0
      %1510 = vmatprep.subr.mxu0 %v792
      %1511 = vmatpush1.msra.mxu0 %v791
      %1512 = vmatprep.subr.mxu0 %v784
      %1513 = vmatpush1.msra.mxu0 %v783
      %1514 = vmatprep.subr.mxu0 %v776
      %1515 = vmatpush1.msra.mxu0 %v775
      %1516 = vmatprep.subr.mxu0 %v768
      %1517 = vmatpush1.msra.mxu0 %v767
      %1518 = vmatprep.subr.mxu0 %v760
      %1519 = vmatpush1.msra.mxu0 %v759
      %1520 = vmatprep.subr.mxu0 %v752
      %1521 = vmatpush1.msra.mxu0 %v751
      %1522 = vmatprep.subr.mxu0 %v744
      %1523 = vmatpush1.msra.mxu0 %v743
      %1524 = vmatprep.subr.mxu0 %v736
      %1525 = vmatpush1.msra.mxu0 %v735
      %1526 = vmatprep.subr.mxu0 %v728
      %1527 = vmatpush1.msra.mxu0 %v727
      %1528 = vmatprep.subr.mxu0 %v720
      %1529 = vmatpush1.msra.mxu0 %v719
      %1530 = vmatprep.subr.mxu0 %v712
      %1531 = vmatpush1.msra.mxu0 %v711
      %1532 = vmatprep.subr.mxu0 %v704
      %1533 = vmatpush1.msra.mxu0 %v703
      %1534 = vmatprep.subr.mxu0 %v696
      %1535 = vmatpush1.msra.mxu0 %v695
      %1536 = vmatprep.subr.mxu0 %v688
      %1537 = vmatpush1.msra.mxu0 %v687
      %1538 = vmatprep.subr.mxu0 %v680
      %1539 = vmatpush1.msra.mxu0 %v679
      %1540 = vmatprep.subr.mxu0 %v672
      %1541 = vmatpush1.msra.mxu0 %v671
      %1542 = vmatprep.subr.mxu0 %v920
      %1543 = vmatpush2.msra.mxu0 %v919
      %1544 = vmatprep.subr.mxu0 %v912
      %1545 = vmatpush2.msra.mxu0 %v911
      %1546 = vmatprep.subr.mxu0 %v904
      %1547 = vmatpush2.msra.mxu0 %v903
      %1548 = vmatprep.subr.mxu0 %v896
      %1549 = vmatpush2.msra.mxu0 %v895
      %1550 = vmatprep.subr.mxu0 %v888
      %1551 = vmatpush2.msra.mxu0 %v887
      %1552 = vmatprep.subr.mxu0 %v880
      %1553 = vmatpush2.msra.mxu0 %v879
      %1554 = vmatprep.subr.mxu0 %v872
      %1555 = vmatpush2.msra.mxu0 %v871
      %1556 = vmatprep.subr.mxu0 %v864
      %1557 = vmatpush2.msra.mxu0 %v863
      %1558 = vmatprep.subr.mxu0 %v856
      %1559 = vmatpush2.msra.mxu0 %v855
      %1560 = vmatprep.subr.mxu0 %v848
      %1561 = vmatpush2.msra.mxu0 %v847
      %1562 = vmatprep.subr.mxu0 %v840
      %1563 = vmatpush2.msra.mxu0 %v839
      %1564 = vmatprep.subr.mxu0 %v832
      %1565 = vmatpush2.msra.mxu0 %v831
      %1566 = vmatprep.subr.mxu0 %v824
      %1567 = vmatpush2.msra.mxu0 %v823
      %1568 = vmatprep.subr.mxu0 %v816
      %1569 = vmatpush2.msra.mxu0 %v815
      %1570 = vmatprep.subr.mxu0 %v808
      %1571 = vmatpush2.msra.mxu0 %v807
      %1572 = vmatprep.subr.mxu0 %v800
      %1573 = vmatpush2.msra.mxu0 %v799
      %1574 = vmatprep.mubr.f32.mxu0 %v410
      %1575 = vmatmul.mubr.f32.gmra.mxu0 %v409
      %v1576 = vpop.f32.mrf.mxu0
      %v1577 = vadd.f32 %v1506, %v1576
      %v1578 = vpop.f32.mrf.mxu0
      %v1579 = vadd.f32 %v1508, %v1578
      %1580 = vdwg.mxu0
      %1581 = vmatprep.subr.mxu0 %v1048
      %1582 = vmatpush1.msra.mxu0 %v1047
      %1583 = vmatprep.subr.mxu0 %v1040
      %1584 = vmatpush1.msra.mxu0 %v1039
      %1585 = vmatprep.subr.mxu0 %v1032
      %1586 = vmatpush1.msra.mxu0 %v1031
      %1587 = vmatprep.subr.mxu0 %v1024
      %1588 = vmatpush1.msra.mxu0 %v1023
      %1589 = vmatprep.subr.mxu0 %v1016
      %1590 = vmatpush1.msra.mxu0 %v1015
      %1591 = vmatprep.subr.mxu0 %v1008
      %1592 = vmatpush1.msra.mxu0 %v1007
      %1593 = vmatprep.subr.mxu0 %v1000
      %1594 = vmatpush1.msra.mxu0 %v999
      %1595 = vmatprep.subr.mxu0 %v992
      %1596 = vmatpush1.msra.mxu0 %v991
      %1597 = vmatprep.subr.mxu0 %v984
      %1598 = vmatpush1.msra.mxu0 %v983
      %1599 = vmatprep.subr.mxu0 %v976
      %1600 = vmatpush1.msra.mxu0 %v975
      %1601 = vmatprep.subr.mxu0 %v968
      %1602 = vmatpush1.msra.mxu0 %v967
      %1603 = vmatprep.subr.mxu0 %v960
      %1604 = vmatpush1.msra.mxu0 %v959
      %1605 = vmatprep.subr.mxu0 %v952
      %1606 = vmatpush1.msra.mxu0 %v951
      %1607 = vmatprep.subr.mxu0 %v944
      %1608 = vmatpush1.msra.mxu0 %v943
      %1609 = vmatprep.subr.mxu0 %v936
      %1610 = vmatpush1.msra.mxu0 %v935
      %1611 = vmatprep.subr.mxu0 %v928
      %1612 = vmatpush1.msra.mxu0 %v927
      %1613 = vmatprep.subr.mxu0 %v1176
      %1614 = vmatpush2.msra.mxu0 %v1175
      %1615 = vmatprep.subr.mxu0 %v1168
      %1616 = vmatpush2.msra.mxu0 %v1167
      %1617 = vmatprep.subr.mxu0 %v1160
      %1618 = vmatpush2.msra.mxu0 %v1159
      %1619 = vmatprep.subr.mxu0 %v1152
      %1620 = vmatpush2.msra.mxu0 %v1151
      %1621 = vmatprep.subr.mxu0 %v1144
      %1622 = vmatpush2.msra.mxu0 %v1143
      %1623 = vmatprep.subr.mxu0 %v1136
      %1624 = vmatpush2.msra.mxu0 %v1135
      %1625 = vmatprep.subr.mxu0 %v1128
      %1626 = vmatpush2.msra.mxu0 %v1127
      %1627 = vmatprep.subr.mxu0 %v1120
      %1628 = vmatpush2.msra.mxu0 %v1119
      %1629 = vmatprep.subr.mxu0 %v1112
      %1630 = vmatpush2.msra.mxu0 %v1111
      %1631 = vmatprep.subr.mxu0 %v1104
      %1632 = vmatpush2.msra.mxu0 %v1103
      %1633 = vmatprep.subr.mxu0 %v1096
      %1634 = vmatpush2.msra.mxu0 %v1095
      %1635 = vmatprep.subr.mxu0 %v1088
      %1636 = vmatpush2.msra.mxu0 %v1087
      %1637 = vmatprep.subr.mxu0 %v1080
      %1638 = vmatpush2.msra.mxu0 %v1079
      %1639 = vmatprep.subr.mxu0 %v1072
      %1640 = vmatpush2.msra.mxu0 %v1071
      %1641 = vmatprep.subr.mxu0 %v1064
      %1642 = vmatpush2.msra.mxu0 %v1063
      %1643 = vmatprep.subr.mxu0 %v1056
      %1644 = vmatpush2.msra.mxu0 %v1055
      %1645 = vmatprep.mubr.f32.mxu0 %v412
      %1646 = vmatmul.mubr.f32.gmra.mxu0 %v411
      %v1647 = vpop.f32.mrf.mxu0
      %v1648 = vadd.f32 %v1577, %v1647
      %v1649 = vpop.f32.mrf.mxu0
      %v1650 = vadd.f32 %v1579, %v1649
      %1651 = vdwg.mxu0
      %1652 = vmatprep.subr.mxu0 %v1304
      %1653 = vmatpush1.msra.mxu0 %v1303
      %1654 = vmatprep.subr.mxu0 %v1296
      %1655 = vmatpush1.msra.mxu0 %v1295
      %1656 = vmatprep.subr.mxu0 %v1288
      %1657 = vmatpush1.msra.mxu0 %v1287
      %1658 = vmatprep.subr.mxu0 %v1280
      %1659 = vmatpush1.msra.mxu0 %v1279
      %1660 = vmatprep.subr.mxu0 %v1272
      %1661 = vmatpush1.msra.mxu0 %v1271
      %1662 = vmatprep.subr.mxu0 %v1264
      %1663 = vmatpush1.msra.mxu0 %v1263
      %1664 = vmatprep.subr.mxu0 %v1256
      %1665 = vmatpush1.msra.mxu0 %v1255
      %1666 = vmatprep.subr.mxu0 %v1248
      %1667 = vmatpush1.msra.mxu0 %v1247
      %1668 = vmatprep.subr.mxu0 %v1240
      %1669 = vmatpush1.msra.mxu0 %v1239
      %1670 = vmatprep.subr.mxu0 %v1232
      %1671 = vmatpush1.msra.mxu0 %v1231
      %1672 = vmatprep.subr.mxu0 %v1224
      %1673 = vmatpush1.msra.mxu0 %v1223
      %1674 = vmatprep.subr.mxu0 %v1216
      %1675 = vmatpush1.msra.mxu0 %v1215
      %1676 = vmatprep.subr.mxu0 %v1208
      %1677 = vmatpush1.msra.mxu0 %v1207
      %1678 = vmatprep.subr.mxu0 %v1200
      %1679 = vmatpush1.msra.mxu0 %v1199
      %1680 = vmatprep.subr.mxu0 %v1192
      %1681 = vmatpush1.msra.mxu0 %v1191
      %1682 = vmatprep.subr.mxu0 %v1184
      %1683 = vmatpush1.msra.mxu0 %v1183
      %1684 = vmatprep.subr.mxu0 %v1432
      %1685 = vmatpush2.msra.mxu0 %v1431
      %1686 = vmatprep.subr.mxu0 %v1424
      %1687 = vmatpush2.msra.mxu0 %v1423
      %1688 = vmatprep.subr.mxu0 %v1416
      %1689 = vmatpush2.msra.mxu0 %v1415
      %1690 = vmatprep.subr.mxu0 %v1408
      %1691 = vmatpush2.msra.mxu0 %v1407
      %1692 = vmatprep.subr.mxu0 %v1400
      %1693 = vmatpush2.msra.mxu0 %v1399
      %1694 = vmatprep.subr.mxu0 %v1392
      %1695 = vmatpush2.msra.mxu0 %v1391
      %1696 = vmatprep.subr.mxu0 %v1384
      %1697 = vmatpush2.msra.mxu0 %v1383
      %1698 = vmatprep.subr.mxu0 %v1376
      %1699 = vmatpush2.msra.mxu0 %v1375
      %1700 = vmatprep.subr.mxu0 %v1368
      %1701 = vmatpush2.msra.mxu0 %v1367
      %1702 = vmatprep.subr.mxu0 %v1360
      %1703 = vmatpush2.msra.mxu0 %v1359
      %1704 = vmatprep.subr.mxu0 %v1352
      %1705 = vmatpush2.msra.mxu0 %v1351
      %1706 = vmatprep.subr.mxu0 %v1344
      %1707 = vmatpush2.msra.mxu0 %v1343
      %1708 = vmatprep.subr.mxu0 %v1336
      %1709 = vmatpush2.msra.mxu0 %v1335
      %1710 = vmatprep.subr.mxu0 %v1328
      %1711 = vmatpush2.msra.mxu0 %v1327
      %1712 = vmatprep.subr.mxu0 %v1320
      %1713 = vmatpush2.msra.mxu0 %v1319
      %1714 = vmatprep.subr.mxu0 %v1312
      %1715 = vmatpush2.msra.mxu0 %v1311
      %1716 = vmatprep.mubr.f32.mxu0 %v414
      %1717 = vmatmul.mubr.f32.gmra.mxu0 %v413
      %v1718 = vpop.f32.mrf.mxu0
      %v1719 = vadd.f32 %v1648, %v1718
      %v1720 = vpop.f32.mrf.mxu0
      %v1721 = vadd.f32 %v1650, %v1720
      %1722 = vdwg.mxu0
      %1723 = vmatprep.subr.mxu0 %v538
      %1724 = vmatpush1.msra.mxu0 %v537
      %1725 = vmatprep.subr.mxu0 %v530
      %1726 = vmatpush1.msra.mxu0 %v529
      %1727 = vmatprep.subr.mxu0 %v522
      %1728 = vmatpush1.msra.mxu0 %v521
      %1729 = vmatprep.subr.mxu0 %v514
      %1730 = vmatpush1.msra.mxu0 %v513
      %1731 = vmatprep.subr.mxu0 %v506
      %1732 = vmatpush1.msra.mxu0 %v505
      %1733 = vmatprep.subr.mxu0 %v498
      %1734 = vmatpush1.msra.mxu0 %v497
      %1735 = vmatprep.subr.mxu0 %v490
      %1736 = vmatpush1.msra.mxu0 %v489
      %1737 = vmatprep.subr.mxu0 %v482
      %1738 = vmatpush1.msra.mxu0 %v481
      %1739 = vmatprep.subr.mxu0 %v474
      %1740 = vmatpush1.msra.mxu0 %v473
      %1741 = vmatprep.subr.mxu0 %v466
      %1742 = vmatpush1.msra.mxu0 %v465
      %1743 = vmatprep.subr.mxu0 %v458
      %1744 = vmatpush1.msra.mxu0 %v457
      %1745 = vmatprep.subr.mxu0 %v450
      %1746 = vmatpush1.msra.mxu0 %v449
      %1747 = vmatprep.subr.mxu0 %v442
      %1748 = vmatpush1.msra.mxu0 %v441
      %1749 = vmatprep.subr.mxu0 %v434
      %1750 = vmatpush1.msra.mxu0 %v433
      %1751 = vmatprep.subr.mxu0 %v426
      %1752 = vmatpush1.msra.mxu0 %v425
      %1753 = vmatprep.subr.mxu0 %v418
      %1754 = vmatpush1.msra.mxu0 %v417
      %1755 = vmatprep.subr.mxu0 %v666
      %1756 = vmatpush2.msra.mxu0 %v665
      %1757 = vmatprep.subr.mxu0 %v658
      %1758 = vmatpush2.msra.mxu0 %v657
      %1759 = vmatprep.subr.mxu0 %v650
      %1760 = vmatpush2.msra.mxu0 %v649
      %1761 = vmatprep.subr.mxu0 %v642
      %1762 = vmatpush2.msra.mxu0 %v641
      %1763 = vmatprep.subr.mxu0 %v634
      %1764 = vmatpush2.msra.mxu0 %v633
      %1765 = vmatprep.subr.mxu0 %v626
      %1766 = vmatpush2.msra.mxu0 %v625
      %1767 = vmatprep.subr.mxu0 %v618
      %1768 = vmatpush2.msra.mxu0 %v617
      %1769 = vmatprep.subr.mxu0 %v610
      %1770 = vmatpush2.msra.mxu0 %v609
      %1771 = vmatprep.subr.mxu0 %v602
      %1772 = vmatpush2.msra.mxu0 %v601
      %1773 = vmatprep.subr.mxu0 %v594
      %1774 = vmatpush2.msra.mxu0 %v593
      %1775 = vmatprep.subr.mxu0 %v586
      %1776 = vmatpush2.msra.mxu0 %v585
      %1777 = vmatprep.subr.mxu0 %v578
      %1778 = vmatpush2.msra.mxu0 %v577
      %1779 = vmatprep.subr.mxu0 %v570
      %1780 = vmatpush2.msra.mxu0 %v569
      %1781 = vmatprep.subr.mxu0 %v562
      %1782 = vmatpush2.msra.mxu0 %v561
      %1783 = vmatprep.subr.mxu0 %v554
      %1784 = vmatpush2.msra.mxu0 %v553
      %1785 = vmatprep.subr.mxu0 %v546
      %1786 = vmatpush2.msra.mxu0 %v545
      %1787 = vmatprep.mubr.f32.mxu0 %v408
      %1788 = vmatmul.mubr.f32.gmra.mxu0 %v407
      %v1789 = vpop.f32.mrf.mxu0
      %v1790 = vadd.f32 0.0, %v1789
      %v1791 = vpop.f32.mrf.mxu0
      %v1792 = vadd.f32 0.0, %v1791
      %1793 = vdwg.mxu0
      %1794 = vmatprep.subr.mxu0 %v794
      %1795 = vmatpush1.msra.mxu0 %v793
      %1796 = vmatprep.subr.mxu0 %v786
      %1797 = vmatpush1.msra.mxu0 %v785
      %1798 = vmatprep.subr.mxu0 %v778
      %1799 = vmatpush1.msra.mxu0 %v777
      %1800 = vmatprep.subr.mxu0 %v770
      %1801 = vmatpush1.msra.mxu0 %v769
      %1802 = vmatprep.subr.mxu0 %v762
      %1803 = vmatpush1.msra.mxu0 %v761
      %1804 = vmatprep.subr.mxu0 %v754
      %1805 = vmatpush1.msra.mxu0 %v753
      %1806 = vmatprep.subr.mxu0 %v746
      %1807 = vmatpush1.msra.mxu0 %v745
      %1808 = vmatprep.subr.mxu0 %v738
      %1809 = vmatpush1.msra.mxu0 %v737
      %1810 = vmatprep.subr.mxu0 %v730
      %1811 = vmatpush1.msra.mxu0 %v729
      %1812 = vmatprep.subr.mxu0 %v722
      %1813 = vmatpush1.msra.mxu0 %v721
      %1814 = vmatprep.subr.mxu0 %v714
      %1815 = vmatpush1.msra.mxu0 %v713
      %1816 = vmatprep.subr.mxu0 %v706
      %1817 = vmatpush1.msra.mxu0 %v705
      %1818 = vmatprep.subr.mxu0 %v698
      %1819 = vmatpush1.msra.mxu0 %v697
      %1820 = vmatprep.subr.mxu0 %v690
      %1821 = vmatpush1.msra.mxu0 %v689
      %1822 = vmatprep.subr.mxu0 %v682
      %1823 = vmatpush1.msra.mxu0 %v681
      %1824 = vmatprep.subr.mxu0 %v674
      %1825 = vmatpush1.msra.mxu0 %v673
      %1826 = vmatprep.subr.mxu0 %v922
      %1827 = vmatpush2.msra.mxu0 %v921
      %1828 = vmatprep.subr.mxu0 %v914
      %1829 = vmatpush2.msra.mxu0 %v913
      %1830 = vmatprep.subr.mxu0 %v906
      %1831 = vmatpush2.msra.mxu0 %v905
      %1832 = vmatprep.subr.mxu0 %v898
      %1833 = vmatpush2.msra.mxu0 %v897
      %1834 = vmatprep.subr.mxu0 %v890
      %1835 = vmatpush2.msra.mxu0 %v889
      %1836 = vmatprep.subr.mxu0 %v882
      %1837 = vmatpush2.msra.mxu0 %v881
      %1838 = vmatprep.subr.mxu0 %v874
      %1839 = vmatpush2.msra.mxu0 %v873
      %1840 = vmatprep.subr.mxu0 %v866
      %1841 = vmatpush2.msra.mxu0 %v865
      %1842 = vmatprep.subr.mxu0 %v858
      %1843 = vmatpush2.msra.mxu0 %v857
      %1844 = vmatprep.subr.mxu0 %v850
      %1845 = vmatpush2.msra.mxu0 %v849
      %1846 = vmatprep.subr.mxu0 %v842
      %1847 = vmatpush2.msra.mxu0 %v841
      %1848 = vmatprep.subr.mxu0 %v834
      %1849 = vmatpush2.msra.mxu0 %v833
      %1850 = vmatprep.subr.mxu0 %v826
      %1851 = vmatpush2.msra.mxu0 %v825
      %1852 = vmatprep.subr.mxu0 %v818
      %1853 = vmatpush2.msra.mxu0 %v817
      %1854 = vmatprep.subr.mxu0 %v810
      %1855 = vmatpush2.msra.mxu0 %v809
      %1856 = vmatprep.subr.mxu0 %v802
      %1857 = vmatpush2.msra.mxu0 %v801
      %1858 = vmatprep.mubr.f32.mxu0 %v410
      %1859 = vmatmul.mubr.f32.gmra.mxu0 %v409
      %v1860 = vpop.f32.mrf.mxu0
      %v1861 = vadd.f32 %v1790, %v1860
      %v1862 = vpop.f32.mrf.mxu0
      %v1863 = vadd.f32 %v1792, %v1862
      %1864 = vdwg.mxu0
      %1865 = vmatprep.subr.mxu0 %v1050
      %1866 = vmatpush1.msra.mxu0 %v1049
      %1867 = vmatprep.subr.mxu0 %v1042
      %1868 = vmatpush1.msra.mxu0 %v1041
      %1869 = vmatprep.subr.mxu0 %v1034
      %1870 = vmatpush1.msra.mxu0 %v1033
      %1871 = vmatprep.subr.mxu0 %v1026
      %1872 = vmatpush1.msra.mxu0 %v1025
      %1873 = vmatprep.subr.mxu0 %v1018
      %1874 = vmatpush1.msra.mxu0 %v1017
      %1875 = vmatprep.subr.mxu0 %v1010
      %1876 = vmatpush1.msra.mxu0 %v1009
      %1877 = vmatprep.subr.mxu0 %v1002
      %1878 = vmatpush1.msra.mxu0 %v1001
      %1879 = vmatprep.subr.mxu0 %v994
      %1880 = vmatpush1.msra.mxu0 %v993
      %1881 = vmatprep.subr.mxu0 %v986
      %1882 = vmatpush1.msra.mxu0 %v985
      %1883 = vmatprep.subr.mxu0 %v978
      %1884 = vmatpush1.msra.mxu0 %v977
      %1885 = vmatprep.subr.mxu0 %v970
      %1886 = vmatpush1.msra.mxu0 %v969
      %1887 = vmatprep.subr.mxu0 %v962
      %1888 = vmatpush1.msra.mxu0 %v961
      %1889 = vmatprep.subr.mxu0 %v954
      %1890 = vmatpush1.msra.mxu0 %v953
      %1891 = vmatprep.subr.mxu0 %v946
      %1892 = vmatpush1.msra.mxu0 %v945
      %1893 = vmatprep.subr.mxu0 %v938
      %1894 = vmatpush1.msra.mxu0 %v937
      %1895 = vmatprep.subr.mxu0 %v930
      %1896 = vmatpush1.msra.mxu0 %v929
      %1897 = vmatprep.subr.mxu0 %v1178
      %1898 = vmatpush2.msra.mxu0 %v1177
      %1899 = vmatprep.subr.mxu0 %v1170
      %1900 = vmatpush2.msra.mxu0 %v1169
      %1901 = vmatprep.subr.mxu0 %v1162
      %1902 = vmatpush2.msra.mxu0 %v1161
      %1903 = vmatprep.subr.mxu0 %v1154
      %1904 = vmatpush2.msra.mxu0 %v1153
      %1905 = vmatprep.subr.mxu0 %v1146
      %1906 = vmatpush2.msra.mxu0 %v1145
      %1907 = vmatprep.subr.mxu0 %v1138
      %1908 = vmatpush2.msra.mxu0 %v1137
      %1909 = vmatprep.subr.mxu0 %v1130
      %1910 = vmatpush2.msra.mxu0 %v1129
      %1911 = vmatprep.subr.mxu0 %v1122
      %1912 = vmatpush2.msra.mxu0 %v1121
      %1913 = vmatprep.subr.mxu0 %v1114
      %1914 = vmatpush2.msra.mxu0 %v1113
      %1915 = vmatprep.subr.mxu0 %v1106
      %1916 = vmatpush2.msra.mxu0 %v1105
      %1917 = vmatprep.subr.mxu0 %v1098
      %1918 = vmatpush2.msra.mxu0 %v1097
      %1919 = vmatprep.subr.mxu0 %v1090
      %1920 = vmatpush2.msra.mxu0 %v1089
      %1921 = vmatprep.subr.mxu0 %v1082
      %1922 = vmatpush2.msra.mxu0 %v1081
      %1923 = vmatprep.subr.mxu0 %v1074
      %1924 = vmatpush2.msra.mxu0 %v1073
      %1925 = vmatprep.subr.mxu0 %v1066
      %1926 = vmatpush2.msra.mxu0 %v1065
      %1927 = vmatprep.subr.mxu0 %v1058
      %1928 = vmatpush2.msra.mxu0 %v1057
      %1929 = vmatprep.mubr.f32.mxu0 %v412
      %1930 = vmatmul.mubr.f32.gmra.mxu0 %v411
      %v1931 = vpop.f32.mrf.mxu0
      %v1932 = vadd.f32 %v1861, %v1931
      %v1933 = vpop.f32.mrf.mxu0
      %v1934 = vadd.f32 %v1863, %v1933
      %1935 = vdwg.mxu0
      %1936 = vmatprep.subr.mxu0 %v1306
      %1937 = vmatpush1.msra.mxu0 %v1305
      %1938 = vmatprep.subr.mxu0 %v1298
      %1939 = vmatpush1.msra.mxu0 %v1297
      %1940 = vmatprep.subr.mxu0 %v1290
      %1941 = vmatpush1.msra.mxu0 %v1289
      %1942 = vmatprep.subr.mxu0 %v1282
      %1943 = vmatpush1.msra.mxu0 %v1281
      %1944 = vmatprep.subr.mxu0 %v1274
      %1945 = vmatpush1.msra.mxu0 %v1273
      %1946 = vmatprep.subr.mxu0 %v1266
      %1947 = vmatpush1.msra.mxu0 %v1265
      %1948 = vmatprep.subr.mxu0 %v1258
      %1949 = vmatpush1.msra.mxu0 %v1257
      %1950 = vmatprep.subr.mxu0 %v1250
      %1951 = vmatpush1.msra.mxu0 %v1249
      %1952 = vmatprep.subr.mxu0 %v1242
      %1953 = vmatpush1.msra.mxu0 %v1241
      %1954 = vmatprep.subr.mxu0 %v1234
      %1955 = vmatpush1.msra.mxu0 %v1233
      %1956 = vmatprep.subr.mxu0 %v1226
      %1957 = vmatpush1.msra.mxu0 %v1225
      %1958 = vmatprep.subr.mxu0 %v1218
      %1959 = vmatpush1.msra.mxu0 %v1217
      %1960 = vmatprep.subr.mxu0 %v1210
      %1961 = vmatpush1.msra.mxu0 %v1209
      %1962 = vmatprep.subr.mxu0 %v1202
      %1963 = vmatpush1.msra.mxu0 %v1201
      %1964 = vmatprep.subr.mxu0 %v1194
      %1965 = vmatpush1.msra.mxu0 %v1193
      %1966 = vmatprep.subr.mxu0 %v1186
      %1967 = vmatpush1.msra.mxu0 %v1185
      %1968 = vmatprep.subr.mxu0 %v1434
      %1969 = vmatpush2.msra.mxu0 %v1433
      %1970 = vmatprep.subr.mxu0 %v1426
      %1971 = vmatpush2.msra.mxu0 %v1425
      %1972 = vmatprep.subr.mxu0 %v1418
      %1973 = vmatpush2.msra.mxu0 %v1417
      %1974 = vmatprep.subr.mxu0 %v1410
      %1975 = vmatpush2.msra.mxu0 %v1409
      %1976 = vmatprep.subr.mxu0 %v1402
      %1977 = vmatpush2.msra.mxu0 %v1401
      %1978 = vmatprep.subr.mxu0 %v1394
      %1979 = vmatpush2.msra.mxu0 %v1393
      %1980 = vmatprep.subr.mxu0 %v1386
      %1981 = vmatpush2.msra.mxu0 %v1385
      %1982 = vmatprep.subr.mxu0 %v1378
      %1983 = vmatpush2.msra.mxu0 %v1377
      %1984 = vmatprep.subr.mxu0 %v1370
      %1985 = vmatpush2.msra.mxu0 %v1369
      %1986 = vmatprep.subr.mxu0 %v1362
      %1987 = vmatpush2.msra.mxu0 %v1361
      %1988 = vmatprep.subr.mxu0 %v1354
      %1989 = vmatpush2.msra.mxu0 %v1353
      %1990 = vmatprep.subr.mxu0 %v1346
      %1991 = vmatpush2.msra.mxu0 %v1345
      %1992 = vmatprep.subr.mxu0 %v1338
      %1993 = vmatpush2.msra.mxu0 %v1337
      %1994 = vmatprep.subr.mxu0 %v1330
      %1995 = vmatpush2.msra.mxu0 %v1329
      %1996 = vmatprep.subr.mxu0 %v1322
      %1997 = vmatpush2.msra.mxu0 %v1321
      %1998 = vmatprep.subr.mxu0 %v1314
      %1999 = vmatpush2.msra.mxu0 %v1313
      %2000 = vmatprep.mubr.f32.mxu0 %v414
      %2001 = vmatmul.mubr.f32.gmra.mxu0 %v413
      %v2002 = vpop.f32.mrf.mxu0
      %v2003 = vadd.f32 %v1932, %v2002
      %v2004 = vpop.f32.mrf.mxu0
      %v2005 = vadd.f32 %v1934, %v2004
      %2006 = vdwg.mxu0
      %2007 = vmatprep.subr.mxu0 %v540
      %2008 = vmatpush1.msra.mxu0 %v539
      %2009 = vmatprep.subr.mxu0 %v532
      %2010 = vmatpush1.msra.mxu0 %v531
      %2011 = vmatprep.subr.mxu0 %v524
      %2012 = vmatpush1.msra.mxu0 %v523
      %2013 = vmatprep.subr.mxu0 %v516
      %2014 = vmatpush1.msra.mxu0 %v515
      %2015 = vmatprep.subr.mxu0 %v508
      %2016 = vmatpush1.msra.mxu0 %v507
      %2017 = vmatprep.subr.mxu0 %v500
      %2018 = vmatpush1.msra.mxu0 %v499
      %2019 = vmatprep.subr.mxu0 %v492
      %2020 = vmatpush1.msra.mxu0 %v491
      %2021 = vmatprep.subr.mxu0 %v484
      %2022 = vmatpush1.msra.mxu0 %v483
      %2023 = vmatprep.subr.mxu0 %v476
      %2024 = vmatpush1.msra.mxu0 %v475
      %2025 = vmatprep.subr.mxu0 %v468
      %2026 = vmatpush1.msra.mxu0 %v467
      %2027 = vmatprep.subr.mxu0 %v460
      %2028 = vmatpush1.msra.mxu0 %v459
      %2029 = vmatprep.subr.mxu0 %v452
      %2030 = vmatpush1.msra.mxu0 %v451
      %2031 = vmatprep.subr.mxu0 %v444
      %2032 = vmatpush1.msra.mxu0 %v443
      %2033 = vmatprep.subr.mxu0 %v436
      %2034 = vmatpush1.msra.mxu0 %v435
      %2035 = vmatprep.subr.mxu0 %v428
      %2036 = vmatpush1.msra.mxu0 %v427
      %2037 = vmatprep.subr.mxu0 %v420
      %2038 = vmatpush1.msra.mxu0 %v419
      %2039 = vmatprep.subr.mxu0 %v668
      %2040 = vmatpush2.msra.mxu0 %v667
      %2041 = vmatprep.subr.mxu0 %v660
      %2042 = vmatpush2.msra.mxu0 %v659
      %2043 = vmatprep.subr.mxu0 %v652
      %2044 = vmatpush2.msra.mxu0 %v651
      %2045 = vmatprep.subr.mxu0 %v644
      %2046 = vmatpush2.msra.mxu0 %v643
      %2047 = vmatprep.subr.mxu0 %v636
      %2048 = vmatpush2.msra.mxu0 %v635
      %2049 = vmatprep.subr.mxu0 %v628
      %2050 = vmatpush2.msra.mxu0 %v627
      %2051 = vmatprep.subr.mxu0 %v620
      %2052 = vmatpush2.msra.mxu0 %v619
      %2053 = vmatprep.subr.mxu0 %v612
      %2054 = vmatpush2.msra.mxu0 %v611
      %2055 = vmatprep.subr.mxu0 %v604
      %2056 = vmatpush2.msra.mxu0 %v603
      %2057 = vmatprep.subr.mxu0 %v596
      %2058 = vmatpush2.msra.mxu0 %v595
      %2059 = vmatprep.subr.mxu0 %v588
      %2060 = vmatpush2.msra.mxu0 %v587
      %2061 = vmatprep.subr.mxu0 %v580
      %2062 = vmatpush2.msra.mxu0 %v579
      %2063 = vmatprep.subr.mxu0 %v572
      %2064 = vmatpush2.msra.mxu0 %v571
      %2065 = vmatprep.subr.mxu0 %v564
      %2066 = vmatpush2.msra.mxu0 %v563
      %2067 = vmatprep.subr.mxu0 %v556
      %2068 = vmatpush2.msra.mxu0 %v555
      %2069 = vmatprep.subr.mxu0 %v548
      %2070 = vmatpush2.msra.mxu0 %v547
      %2071 = vmatprep.mubr.f32.mxu0 %v408
      %2072 = vmatmul.mubr.f32.gmra.mxu0 %v407
      %v2073 = vpop.f32.mrf.mxu0
      %v2074 = vadd.f32 0.0, %v2073
      %v2075 = vpop.f32.mrf.mxu0
      %v2076 = vadd.f32 0.0, %v2075
      %2077 = vdwg.mxu0
      %2078 = vmatprep.subr.mxu0 %v796
      %2079 = vmatpush1.msra.mxu0 %v795
      %2080 = vmatprep.subr.mxu0 %v788
      %2081 = vmatpush1.msra.mxu0 %v787
      %2082 = vmatprep.subr.mxu0 %v780
      %2083 = vmatpush1.msra.mxu0 %v779
      %2084 = vmatprep.subr.mxu0 %v772
      %2085 = vmatpush1.msra.mxu0 %v771
      %2086 = vmatprep.subr.mxu0 %v764
      %2087 = vmatpush1.msra.mxu0 %v763
      %2088 = vmatprep.subr.mxu0 %v756
      %2089 = vmatpush1.msra.mxu0 %v755
      %2090 = vmatprep.subr.mxu0 %v748
      %2091 = vmatpush1.msra.mxu0 %v747
      %2092 = vmatprep.subr.mxu0 %v740
      %2093 = vmatpush1.msra.mxu0 %v739
      %2094 = vmatprep.subr.mxu0 %v732
      %2095 = vmatpush1.msra.mxu0 %v731
      %2096 = vmatprep.subr.mxu0 %v724
      %2097 = vmatpush1.msra.mxu0 %v723
      %2098 = vmatprep.subr.mxu0 %v716
      %2099 = vmatpush1.msra.mxu0 %v715
      %2100 = vmatprep.subr.mxu0 %v708
      %2101 = vmatpush1.msra.mxu0 %v707
      %2102 = vmatprep.subr.mxu0 %v700
      %2103 = vmatpush1.msra.mxu0 %v699
      %2104 = vmatprep.subr.mxu0 %v692
      %2105 = vmatpush1.msra.mxu0 %v691
      %2106 = vmatprep.subr.mxu0 %v684
      %2107 = vmatpush1.msra.mxu0 %v683
      %2108 = vmatprep.subr.mxu0 %v676
      %2109 = vmatpush1.msra.mxu0 %v675
      %2110 = vmatprep.subr.mxu0 %v924
      %2111 = vmatpush2.msra.mxu0 %v923
      %2112 = vmatprep.subr.mxu0 %v916
      %2113 = vmatpush2.msra.mxu0 %v915
      %2114 = vmatprep.subr.mxu0 %v908
      %2115 = vmatpush2.msra.mxu0 %v907
      %2116 = vmatprep.subr.mxu0 %v900
      %2117 = vmatpush2.msra.mxu0 %v899
      %2118 = vmatprep.subr.mxu0 %v892
      %2119 = vmatpush2.msra.mxu0 %v891
      %2120 = vmatprep.subr.mxu0 %v884
      %2121 = vmatpush2.msra.mxu0 %v883
      %2122 = vmatprep.subr.mxu0 %v876
      %2123 = vmatpush2.msra.mxu0 %v875
      %2124 = vmatprep.subr.mxu0 %v868
      %2125 = vmatpush2.msra.mxu0 %v867
      %2126 = vmatprep.subr.mxu0 %v860
      %2127 = vmatpush2.msra.mxu0 %v859
      %2128 = vmatprep.subr.mxu0 %v852
      %2129 = vmatpush2.msra.mxu0 %v851
      %2130 = vmatprep.subr.mxu0 %v844
      %2131 = vmatpush2.msra.mxu0 %v843
      %2132 = vmatprep.subr.mxu0 %v836
      %2133 = vmatpush2.msra.mxu0 %v835
      %2134 = vmatprep.subr.mxu0 %v828
      %2135 = vmatpush2.msra.mxu0 %v827
      %2136 = vmatprep.subr.mxu0 %v820
      %2137 = vmatpush2.msra.mxu0 %v819
      %2138 = vmatprep.subr.mxu0 %v812
      %2139 = vmatpush2.msra.mxu0 %v811
      %2140 = vmatprep.subr.mxu0 %v804
      %2141 = vmatpush2.msra.mxu0 %v803
      %2142 = vmatprep.mubr.f32.mxu0 %v410
      %2143 = vmatmul.mubr.f32.gmra.mxu0 %v409
      %v2144 = vpop.f32.mrf.mxu0
      %v2145 = vadd.f32 %v2074, %v2144
      %v2146 = vpop.f32.mrf.mxu0
      %v2147 = vadd.f32 %v2076, %v2146
      %2148 = vdwg.mxu0
      %2149 = vmatprep.subr.mxu0 %v1052
      %2150 = vmatpush1.msra.mxu0 %v1051
      %2151 = vmatprep.subr.mxu0 %v1044
      %2152 = vmatpush1.msra.mxu0 %v1043
      %2153 = vmatprep.subr.mxu0 %v1036
      %2154 = vmatpush1.msra.mxu0 %v1035
      %2155 = vmatprep.subr.mxu0 %v1028
      %2156 = vmatpush1.msra.mxu0 %v1027
      %2157 = vmatprep.subr.mxu0 %v1020
      %2158 = vmatpush1.msra.mxu0 %v1019
      %2159 = vmatprep.subr.mxu0 %v1012
      %2160 = vmatpush1.msra.mxu0 %v1011
      %2161 = vmatprep.subr.mxu0 %v1004
      %2162 = vmatpush1.msra.mxu0 %v1003
      %2163 = vmatprep.subr.mxu0 %v996
      %2164 = vmatpush1.msra.mxu0 %v995
      %2165 = vmatprep.subr.mxu0 %v988
      %2166 = vmatpush1.msra.mxu0 %v987
      %2167 = vmatprep.subr.mxu0 %v980
      %2168 = vmatpush1.msra.mxu0 %v979
      %2169 = vmatprep.subr.mxu0 %v972
      %2170 = vmatpush1.msra.mxu0 %v971
      %2171 = vmatprep.subr.mxu0 %v964
      %2172 = vmatpush1.msra.mxu0 %v963
      %2173 = vmatprep.subr.mxu0 %v956
      %2174 = vmatpush1.msra.mxu0 %v955
      %2175 = vmatprep.subr.mxu0 %v948
      %2176 = vmatpush1.msra.mxu0 %v947
      %2177 = vmatprep.subr.mxu0 %v940
      %2178 = vmatpush1.msra.mxu0 %v939
      %2179 = vmatprep.subr.mxu0 %v932
      %2180 = vmatpush1.msra.mxu0 %v931
      %2181 = vmatprep.subr.mxu0 %v1180
      %2182 = vmatpush2.msra.mxu0 %v1179
      %2183 = vmatprep.subr.mxu0 %v1172
      %2184 = vmatpush2.msra.mxu0 %v1171
      %2185 = vmatprep.subr.mxu0 %v1164
      %2186 = vmatpush2.msra.mxu0 %v1163
      %2187 = vmatprep.subr.mxu0 %v1156
      %2188 = vmatpush2.msra.mxu0 %v1155
      %2189 = vmatprep.subr.mxu0 %v1148
      %2190 = vmatpush2.msra.mxu0 %v1147
      %2191 = vmatprep.subr.mxu0 %v1140
      %2192 = vmatpush2.msra.mxu0 %v1139
      %2193 = vmatprep.subr.mxu0 %v1132
      %2194 = vmatpush2.msra.mxu0 %v1131
      %2195 = vmatprep.subr.mxu0 %v1124
      %2196 = vmatpush2.msra.mxu0 %v1123
      %2197 = vmatprep.subr.mxu0 %v1116
      %2198 = vmatpush2.msra.mxu0 %v1115
      %2199 = vmatprep.subr.mxu0 %v1108
      %2200 = vmatpush2.msra.mxu0 %v1107
      %2201 = vmatprep.subr.mxu0 %v1100
      %2202 = vmatpush2.msra.mxu0 %v1099
      %2203 = vmatprep.subr.mxu0 %v1092
      %2204 = vmatpush2.msra.mxu0 %v1091
      %2205 = vmatprep.subr.mxu0 %v1084
      %2206 = vmatpush2.msra.mxu0 %v1083
      %2207 = vmatprep.subr.mxu0 %v1076
      %2208 = vmatpush2.msra.mxu0 %v1075
      %2209 = vmatprep.subr.mxu0 %v1068
      %2210 = vmatpush2.msra.mxu0 %v1067
      %2211 = vmatprep.subr.mxu0 %v1060
      %2212 = vmatpush2.msra.mxu0 %v1059
      %2213 = vmatprep.mubr.f32.mxu0 %v412
      %2214 = vmatmul.mubr.f32.gmra.mxu0 %v411
      %v2215 = vpop.f32.mrf.mxu0
      %v2216 = vadd.f32 %v2145, %v2215
      %v2217 = vpop.f32.mrf.mxu0
      %v2218 = vadd.f32 %v2147, %v2217
      %2219 = vdwg.mxu0
      %2220 = vmatprep.subr.mxu0 %v1308
      %2221 = vmatpush1.msra.mxu0 %v1307
      %2222 = vmatprep.subr.mxu0 %v1300
      %2223 = vmatpush1.msra.mxu0 %v1299
      %2224 = vmatprep.subr.mxu0 %v1292
      %2225 = vmatpush1.msra.mxu0 %v1291
      %2226 = vmatprep.subr.mxu0 %v1284
      %2227 = vmatpush1.msra.mxu0 %v1283
      %2228 = vmatprep.subr.mxu0 %v1276
      %2229 = vmatpush1.msra.mxu0 %v1275
      %2230 = vmatprep.subr.mxu0 %v1268
      %2231 = vmatpush1.msra.mxu0 %v1267
      %2232 = vmatprep.subr.mxu0 %v1260
      %2233 = vmatpush1.msra.mxu0 %v1259
      %2234 = vmatprep.subr.mxu0 %v1252
      %2235 = vmatpush1.msra.mxu0 %v1251
      %2236 = vmatprep.subr.mxu0 %v1244
      %2237 = vmatpush1.msra.mxu0 %v1243
      %2238 = vmatprep.subr.mxu0 %v1236
      %2239 = vmatpush1.msra.mxu0 %v1235
      %2240 = vmatprep.subr.mxu0 %v1228
      %2241 = vmatpush1.msra.mxu0 %v1227
      %2242 = vmatprep.subr.mxu0 %v1220
      %2243 = vmatpush1.msra.mxu0 %v1219
      %2244 = vmatprep.subr.mxu0 %v1212
      %2245 = vmatpush1.msra.mxu0 %v1211
      %2246 = vmatprep.subr.mxu0 %v1204
      %2247 = vmatpush1.msra.mxu0 %v1203
      %2248 = vmatprep.subr.mxu0 %v1196
      %2249 = vmatpush1.msra.mxu0 %v1195
      %2250 = vmatprep.subr.mxu0 %v1188
      %2251 = vmatpush1.msra.mxu0 %v1187
      %2252 = vmatprep.subr.mxu0 %v1436
      %2253 = vmatpush2.msra.mxu0 %v1435
      %2254 = vmatprep.subr.mxu0 %v1428
      %2255 = vmatpush2.msra.mxu0 %v1427
      %2256 = vmatprep.subr.mxu0 %v1420
      %2257 = vmatpush2.msra.mxu0 %v1419
      %2258 = vmatprep.subr.mxu0 %v1412
      %2259 = vmatpush2.msra.mxu0 %v1411
      %2260 = vmatprep.subr.mxu0 %v1404
      %2261 = vmatpush2.msra.mxu0 %v1403
      %2262 = vmatprep.subr.mxu0 %v1396
      %2263 = vmatpush2.msra.mxu0 %v1395
      %2264 = vmatprep.subr.mxu0 %v1388
      %2265 = vmatpush2.msra.mxu0 %v1387
      %2266 = vmatprep.subr.mxu0 %v1380
      %2267 = vmatpush2.msra.mxu0 %v1379
      %2268 = vmatprep.subr.mxu0 %v1372
      %2269 = vmatpush2.msra.mxu0 %v1371
      %2270 = vmatprep.subr.mxu0 %v1364
      %2271 = vmatpush2.msra.mxu0 %v1363
      %2272 = vmatprep.subr.mxu0 %v1356
      %2273 = vmatpush2.msra.mxu0 %v1355
      %2274 = vmatprep.subr.mxu0 %v1348
      %2275 = vmatpush2.msra.mxu0 %v1347
      %2276 = vmatprep.subr.mxu0 %v1340
      %2277 = vmatpush2.msra.mxu0 %v1339
      %2278 = vmatprep.subr.mxu0 %v1332
      %2279 = vmatpush2.msra.mxu0 %v1331
      %2280 = vmatprep.subr.mxu0 %v1324
      %2281 = vmatpush2.msra.mxu0 %v1323
      %2282 = vmatprep.subr.mxu0 %v1316
      %2283 = vmatpush2.msra.mxu0 %v1315
      %2284 = vmatprep.mubr.f32.mxu0 %v414
      %2285 = vmatmul.mubr.f32.gmra.mxu0 %v413
      %v2286 = vpop.f32.mrf.mxu0
      %v2287 = vadd.f32 %v2216, %v2286
      %v2288 = vpop.f32.mrf.mxu0
      %v2289 = vadd.f32 %v2218, %v2288
      %2290 = vdwg.mxu0
      %2291 = vmatprep.subr.mxu0 %v542
      %2292 = vmatpush1.msra.mxu0 %v541
      %2293 = vmatprep.subr.mxu0 %v534
      %2294 = vmatpush1.msra.mxu0 %v533
      %2295 = vmatprep.subr.mxu0 %v526
      %2296 = vmatpush1.msra.mxu0 %v525
      %2297 = vmatprep.subr.mxu0 %v518
      %2298 = vmatpush1.msra.mxu0 %v517
      %2299 = vmatprep.subr.mxu0 %v510
      %2300 = vmatpush1.msra.mxu0 %v509
      %2301 = vmatprep.subr.mxu0 %v502
      %2302 = vmatpush1.msra.mxu0 %v501
      %2303 = vmatprep.subr.mxu0 %v494
      %2304 = vmatpush1.msra.mxu0 %v493
      %2305 = vmatprep.subr.mxu0 %v486
      %2306 = vmatpush1.msra.mxu0 %v485
      %2307 = vmatprep.subr.mxu0 %v478
      %2308 = vmatpush1.msra.mxu0 %v477
      %2309 = vmatprep.subr.mxu0 %v470
      %2310 = vmatpush1.msra.mxu0 %v469
      %2311 = vmatprep.subr.mxu0 %v462
      %2312 = vmatpush1.msra.mxu0 %v461
      %2313 = vmatprep.subr.mxu0 %v454
      %2314 = vmatpush1.msra.mxu0 %v453
      %2315 = vmatprep.subr.mxu0 %v446
      %2316 = vmatpush1.msra.mxu0 %v445
      %2317 = vmatprep.subr.mxu0 %v438
      %2318 = vmatpush1.msra.mxu0 %v437
      %2319 = vmatprep.subr.mxu0 %v430
      %2320 = vmatpush1.msra.mxu0 %v429
      %2321 = vmatprep.subr.mxu0 %v422
      %2322 = vmatpush1.msra.mxu0 %v421
      %2323 = vmatprep.subr.mxu0 %v670
      %2324 = vmatpush2.msra.mxu0 %v669
      %2325 = vmatprep.subr.mxu0 %v662
      %2326 = vmatpush2.msra.mxu0 %v661
      %2327 = vmatprep.subr.mxu0 %v654
      %2328 = vmatpush2.msra.mxu0 %v653
      %2329 = vmatprep.subr.mxu0 %v646
      %2330 = vmatpush2.msra.mxu0 %v645
      %2331 = vmatprep.subr.mxu0 %v638
      %2332 = vmatpush2.msra.mxu0 %v637
      %2333 = vmatprep.subr.mxu0 %v630
      %2334 = vmatpush2.msra.mxu0 %v629
      %2335 = vmatprep.subr.mxu0 %v622
      %2336 = vmatpush2.msra.mxu0 %v621
      %2337 = vmatprep.subr.mxu0 %v614
      %2338 = vmatpush2.msra.mxu0 %v613
      %2339 = vmatprep.subr.mxu0 %v606
      %2340 = vmatpush2.msra.mxu0 %v605
      %2341 = vmatprep.subr.mxu0 %v598
      %2342 = vmatpush2.msra.mxu0 %v597
      %2343 = vmatprep.subr.mxu0 %v590
      %2344 = vmatpush2.msra.mxu0 %v589
      %2345 = vmatprep.subr.mxu0 %v582
      %2346 = vmatpush2.msra.mxu0 %v581
      %2347 = vmatprep.subr.mxu0 %v574
      %2348 = vmatpush2.msra.mxu0 %v573
      %2349 = vmatprep.subr.mxu0 %v566
      %2350 = vmatpush2.msra.mxu0 %v565
      %2351 = vmatprep.subr.mxu0 %v558
      %2352 = vmatpush2.msra.mxu0 %v557
      %2353 = vmatprep.subr.mxu0 %v550
      %2354 = vmatpush2.msra.mxu0 %v549
      %2355 = vmatprep.mubr.f32.mxu0 %v408
      %2356 = vmatmul.mubr.f32.gmra.mxu0 %v407
      %v2357 = vpop.f32.mrf.mxu0
      %v2358 = vadd.f32 0.0, %v2357
      %v2359 = vpop.f32.mrf.mxu0
      %v2360 = vadd.f32 0.0, %v2359
      %2361 = vdwg.mxu0
      %2362 = vmatprep.subr.mxu0 %v798
      %2363 = vmatpush1.msra.mxu0 %v797
      %2364 = vmatprep.subr.mxu0 %v790
      %2365 = vmatpush1.msra.mxu0 %v789
      %2366 = vmatprep.subr.mxu0 %v782
      %2367 = vmatpush1.msra.mxu0 %v781
      %2368 = vmatprep.subr.mxu0 %v774
      %2369 = vmatpush1.msra.mxu0 %v773
      %2370 = vmatprep.subr.mxu0 %v766
      %2371 = vmatpush1.msra.mxu0 %v765
      %2372 = vmatprep.subr.mxu0 %v758
      %2373 = vmatpush1.msra.mxu0 %v757
      %2374 = vmatprep.subr.mxu0 %v750
      %2375 = vmatpush1.msra.mxu0 %v749
      %2376 = vmatprep.subr.mxu0 %v742
      %2377 = vmatpush1.msra.mxu0 %v741
      %2378 = vmatprep.subr.mxu0 %v734
      %2379 = vmatpush1.msra.mxu0 %v733
      %2380 = vmatprep.subr.mxu0 %v726
      %2381 = vmatpush1.msra.mxu0 %v725
      %2382 = vmatprep.subr.mxu0 %v718
      %2383 = vmatpush1.msra.mxu0 %v717
      %2384 = vmatprep.subr.mxu0 %v710
      %2385 = vmatpush1.msra.mxu0 %v709
      %2386 = vmatprep.subr.mxu0 %v702
      %2387 = vmatpush1.msra.mxu0 %v701
      %2388 = vmatprep.subr.mxu0 %v694
      %2389 = vmatpush1.msra.mxu0 %v693
      %2390 = vmatprep.subr.mxu0 %v686
      %2391 = vmatpush1.msra.mxu0 %v685
      %2392 = vmatprep.subr.mxu0 %v678
      %2393 = vmatpush1.msra.mxu0 %v677
      %2394 = vmatprep.subr.mxu0 %v926
      %2395 = vmatpush2.msra.mxu0 %v925
      %2396 = vmatprep.subr.mxu0 %v918
      %2397 = vmatpush2.msra.mxu0 %v917
      %2398 = vmatprep.subr.mxu0 %v910
      %2399 = vmatpush2.msra.mxu0 %v909
      %2400 = vmatprep.subr.mxu0 %v902
      %2401 = vmatpush2.msra.mxu0 %v901
      %2402 = vmatprep.subr.mxu0 %v894
      %2403 = vmatpush2.msra.mxu0 %v893
      %2404 = vmatprep.subr.mxu0 %v886
      %2405 = vmatpush2.msra.mxu0 %v885
      %2406 = vmatprep.subr.mxu0 %v878
      %2407 = vmatpush2.msra.mxu0 %v877
      %2408 = vmatprep.subr.mxu0 %v870
      %2409 = vmatpush2.msra.mxu0 %v869
      %2410 = vmatprep.subr.mxu0 %v862
      %2411 = vmatpush2.msra.mxu0 %v861
      %2412 = vmatprep.subr.mxu0 %v854
      %2413 = vmatpush2.msra.mxu0 %v853
      %2414 = vmatprep.subr.mxu0 %v846
      %2415 = vmatpush2.msra.mxu0 %v845
      %2416 = vmatprep.subr.mxu0 %v838
      %2417 = vmatpush2.msra.mxu0 %v837
      %2418 = vmatprep.subr.mxu0 %v830
      %2419 = vmatpush2.msra.mxu0 %v829
      %2420 = vmatprep.subr.mxu0 %v822
      %2421 = vmatpush2.msra.mxu0 %v821
      %2422 = vmatprep.subr.mxu0 %v814
      %2423 = vmatpush2.msra.mxu0 %v813
      %2424 = vmatprep.subr.mxu0 %v806
      %2425 = vmatpush2.msra.mxu0 %v805
      %2426 = vmatprep.mubr.f32.mxu0 %v410
      %2427 = vmatmul.mubr.f32.gmra.mxu0 %v409
      %v2428 = vpop.f32.mrf.mxu0
      %v2429 = vadd.f32 %v2358, %v2428
      %v2430 = vpop.f32.mrf.mxu0
      %v2431 = vadd.f32 %v2360, %v2430
      %2432 = vdwg.mxu0
      %2433 = vmatprep.subr.mxu0 %v1054
      %2434 = vmatpush1.msra.mxu0 %v1053
      %2435 = vmatprep.subr.mxu0 %v1046
      %2436 = vmatpush1.msra.mxu0 %v1045
      %2437 = vmatprep.subr.mxu0 %v1038
      %2438 = vmatpush1.msra.mxu0 %v1037
      %2439 = vmatprep.subr.mxu0 %v1030
      %2440 = vmatpush1.msra.mxu0 %v1029
      %2441 = vmatprep.subr.mxu0 %v1022
      %2442 = vmatpush1.msra.mxu0 %v1021
      %2443 = vmatprep.subr.mxu0 %v1014
      %2444 = vmatpush1.msra.mxu0 %v1013
      %2445 = vmatprep.subr.mxu0 %v1006
      %2446 = vmatpush1.msra.mxu0 %v1005
      %2447 = vmatprep.subr.mxu0 %v998
      %2448 = vmatpush1.msra.mxu0 %v997
      %2449 = vmatprep.subr.mxu0 %v990
      %2450 = vmatpush1.msra.mxu0 %v989
      %2451 = vmatprep.subr.mxu0 %v982
      %2452 = vmatpush1.msra.mxu0 %v981
      %2453 = vmatprep.subr.mxu0 %v974
      %2454 = vmatpush1.msra.mxu0 %v973
      %2455 = vmatprep.subr.mxu0 %v966
      %2456 = vmatpush1.msra.mxu0 %v965
      %2457 = vmatprep.subr.mxu0 %v958
      %2458 = vmatpush1.msra.mxu0 %v957
      %2459 = vmatprep.subr.mxu0 %v950
      %2460 = vmatpush1.msra.mxu0 %v949
      %2461 = vmatprep.subr.mxu0 %v942
      %2462 = vmatpush1.msra.mxu0 %v941
      %2463 = vmatprep.subr.mxu0 %v934
      %2464 = vmatpush1.msra.mxu0 %v933
      %2465 = vmatprep.subr.mxu0 %v1182
      %2466 = vmatpush2.msra.mxu0 %v1181
      %2467 = vmatprep.subr.mxu0 %v1174
      %2468 = vmatpush2.msra.mxu0 %v1173
      %2469 = vmatprep.subr.mxu0 %v1166
      %2470 = vmatpush2.msra.mxu0 %v1165
      %2471 = vmatprep.subr.mxu0 %v1158
      %2472 = vmatpush2.msra.mxu0 %v1157
      %2473 = vmatprep.subr.mxu0 %v1150
      %2474 = vmatpush2.msra.mxu0 %v1149
      %2475 = vmatprep.subr.mxu0 %v1142
      %2476 = vmatpush2.msra.mxu0 %v1141
      %2477 = vmatprep.subr.mxu0 %v1134
      %2478 = vmatpush2.msra.mxu0 %v1133
      %2479 = vmatprep.subr.mxu0 %v1126
      %2480 = vmatpush2.msra.mxu0 %v1125
      %2481 = vmatprep.subr.mxu0 %v1118
      %2482 = vmatpush2.msra.mxu0 %v1117
      %2483 = vmatprep.subr.mxu0 %v1110
      %2484 = vmatpush2.msra.mxu0 %v1109
      %2485 = vmatprep.subr.mxu0 %v1102
      %2486 = vmatpush2.msra.mxu0 %v1101
      %2487 = vmatprep.subr.mxu0 %v1094
      %2488 = vmatpush2.msra.mxu0 %v1093
      %2489 = vmatprep.subr.mxu0 %v1086
      %2490 = vmatpush2.msra.mxu0 %v1085
      %2491 = vmatprep.subr.mxu0 %v1078
      %2492 = vmatpush2.msra.mxu0 %v1077
      %2493 = vmatprep.subr.mxu0 %v1070
      %2494 = vmatpush2.msra.mxu0 %v1069
      %2495 = vmatprep.subr.mxu0 %v1062
      %2496 = vmatpush2.msra.mxu0 %v1061
      %2497 = vmatprep.mubr.f32.mxu0 %v412
      %2498 = vmatmul.mubr.f32.gmra.mxu0 %v411
      %v2499 = vpop.f32.mrf.mxu0
      %v2500 = vadd.f32 %v2429, %v2499
      %v2501 = vpop.f32.mrf.mxu0
      %v2502 = vadd.f32 %v2431, %v2501
      %2503 = vdwg.mxu0
      %2504 = vmatprep.subr.mxu0 %v1310
      %2505 = vmatpush1.msra.mxu0 %v1309
      %2506 = vmatprep.subr.mxu0 %v1302
      %2507 = vmatpush1.msra.mxu0 %v1301
      %2508 = vmatprep.subr.mxu0 %v1294
      %2509 = vmatpush1.msra.mxu0 %v1293
      %2510 = vmatprep.subr.mxu0 %v1286
      %2511 = vmatpush1.msra.mxu0 %v1285
      %2512 = vmatprep.subr.mxu0 %v1278
      %2513 = vmatpush1.msra.mxu0 %v1277
      %2514 = vmatprep.subr.mxu0 %v1270
      %2515 = vmatpush1.msra.mxu0 %v1269
      %2516 = vmatprep.subr.mxu0 %v1262
      %2517 = vmatpush1.msra.mxu0 %v1261
      %2518 = vmatprep.subr.mxu0 %v1254
      %2519 = vmatpush1.msra.mxu0 %v1253
      %2520 = vmatprep.subr.mxu0 %v1246
      %2521 = vmatpush1.msra.mxu0 %v1245
      %2522 = vmatprep.subr.mxu0 %v1238
      %2523 = vmatpush1.msra.mxu0 %v1237
      %2524 = vmatprep.subr.mxu0 %v1230
      %2525 = vmatpush1.msra.mxu0 %v1229
      %2526 = vmatprep.subr.mxu0 %v1222
      %2527 = vmatpush1.msra.mxu0 %v1221
      %2528 = vmatprep.subr.mxu0 %v1214
      %2529 = vmatpush1.msra.mxu0 %v1213
      %2530 = vmatprep.subr.mxu0 %v1206
      %2531 = vmatpush1.msra.mxu0 %v1205
      %2532 = vmatprep.subr.mxu0 %v1198
      %2533 = vmatpush1.msra.mxu0 %v1197
      %2534 = vmatprep.subr.mxu0 %v1190
      %2535 = vmatpush1.msra.mxu0 %v1189
      %2536 = vmatprep.subr.mxu0 %v1438
      %2537 = vmatpush2.msra.mxu0 %v1437
      %2538 = vmatprep.subr.mxu0 %v1430
      %2539 = vmatpush2.msra.mxu0 %v1429
      %2540 = vmatprep.subr.mxu0 %v1422
      %2541 = vmatpush2.msra.mxu0 %v1421
      %2542 = vmatprep.subr.mxu0 %v1414
      %2543 = vmatpush2.msra.mxu0 %v1413
      %2544 = vmatprep.subr.mxu0 %v1406
      %2545 = vmatpush2.msra.mxu0 %v1405
      %2546 = vmatprep.subr.mxu0 %v1398
      %2547 = vmatpush2.msra.mxu0 %v1397
      %2548 = vmatprep.subr.mxu0 %v1390
      %2549 = vmatpush2.msra.mxu0 %v1389
      %2550 = vmatprep.subr.mxu0 %v1382
      %2551 = vmatpush2.msra.mxu0 %v1381
      %2552 = vmatprep.subr.mxu0 %v1374
      %2553 = vmatpush2.msra.mxu0 %v1373
      %2554 = vmatprep.subr.mxu0 %v1366
      %2555 = vmatpush2.msra.mxu0 %v1365
      %2556 = vmatprep.subr.mxu0 %v1358
      %2557 = vmatpush2.msra.mxu0 %v1357
      %2558 = vmatprep.subr.mxu0 %v1350
      %2559 = vmatpush2.msra.mxu0 %v1349
      %2560 = vmatprep.subr.mxu0 %v1342
      %2561 = vmatpush2.msra.mxu0 %v1341
      %2562 = vmatprep.subr.mxu0 %v1334
      %2563 = vmatpush2.msra.mxu0 %v1333
      %2564 = vmatprep.subr.mxu0 %v1326
      %2565 = vmatpush2.msra.mxu0 %v1325
      %2566 = vmatprep.subr.mxu0 %v1318
      %2567 = vmatpush2.msra.mxu0 %v1317
      %2568 = vmatprep.mubr.f32.mxu0 %v414
      %2569 = vmatmul.mubr.f32.gmra.mxu0 %v413
      %v2570 = vpop.f32.mrf.mxu0
      %v2571 = vadd.f32 %v2500, %v2570
      %v2572 = vpop.f32.mrf.mxu0
      %v2573 = vadd.f32 %v2502, %v2572
      %2574 = vdwg.mxu0
      %v2576 = vrot.slane %v1721, 7
      %v2579 = vrot.slane %v2003, 6
      %v2582 = vrot.slane %v2005, 5
      %v2585 = vrot.slane %v2287, 4
      %v2588 = vrot.slane %v2289, 3
      %v2591 = vrot.slane %v2571, 2
      %v2594 = vrot.slane %v2573, 1
      %v2597 = vrot.slane %v1719, 1
      %v2599 = vrot.slane %v2003, 7
      %v2601 = vrot.slane %v2005, 6
      %v2603 = vrot.slane %v2287, 5
      %v2605 = vrot.slane %v2289, 4
      %v2607 = vrot.slane %v2571, 3
      %v2609 = vrot.slane %v2573, 2
      %v2611 = vsel %vm406, %v1719, %v2576
      %vm2612 = vcmask 1041408
      %v2613 = vsel %vm2612, %v2611, %v2579
      %vm2614 = vcmask 1042432
      %v2615 = vsel %vm2614, %v2613, %v2582
      %vm2616 = vcmask 1043456
      %v2617 = vsel %vm2616, %v2615, %v2585
      %vm2618 = vcmask 1044480
      %v2619 = vsel %vm2618, %v2617, %v2588
      %vm2620 = vcmask 1045504
      %v2621 = vsel %vm2620, %v2619, %v2591
      %vm2622 = vcmask 1046528
      %v2623 = vsel %vm2622, %v2621, %v2594
      %v2624 = vsel %vm406, %v2597, %v1721
      %v2625 = vsel %vm2612, %v2624, %v2599
      %v2626 = vsel %vm2614, %v2625, %v2601
      %v2627 = vsel %vm2616, %v2626, %v2603
      %v2628 = vsel %vm2618, %v2627, %v2605
      %v2629 = vsel %vm2620, %v2628, %v2607
      %v2630 = vsel %vm2622, %v2629, %v2609
      %v2631 = vld [vmem:[#allocation10] sm:$0xff]
      %v2632 = vld [vmem:[#allocation10 + $0x8] sm:$0xff]
      %v2633 = vld [vmem:[#allocation10 + $0x10] sm:$0xff]
      %v2634 = vld [vmem:[#allocation10 + $0x18] sm:$0xff]
      %v2635 = vld [vmem:[#allocation10 + $0x20] sm:$0xff]
      %v2636 = vld [vmem:[#allocation10 + $0x28] sm:$0xff]
      %v2637 = vld [vmem:[#allocation10 + $0x30] sm:$0xff]
      %v2638 = vld [vmem:[#allocation10 + $0x38] sm:$0xff]
      %v2639 = vld [vmem:[#allocation10 + $0x40] sm:$0xff]
      %v2640 = vld [vmem:[#allocation10 + $0x48] sm:$0xff]
      %v2641 = vld [vmem:[#allocation10 + $0x50] sm:$0xff]
      %v2642 = vld [vmem:[#allocation10 + $0x58] sm:$0xff]
      %v2643 = vld [vmem:[#allocation10 + $0x60] sm:$0xff]
      %v2644 = vld [vmem:[#allocation10 + $0x68] sm:$0xff]
      %v2645 = vld [vmem:[#allocation10 + $0x70] sm:$0xff]
      %v2646 = vld [vmem:[#allocation10 + $0x78] sm:$0xff]
      %v2647 = vld [vmem:[#allocation10 + $0x80] sm:$0xff]
      %v2648 = vld [vmem:[#allocation10 + $0x88] sm:$0xff]
      %v2649 = vld [vmem:[#allocation10 + $0x90] sm:$0xff]
      %v2650 = vld [vmem:[#allocation10 + $0x98] sm:$0xff]
      %v2651 = vld [vmem:[#allocation10 + $0xa0] sm:$0xff]
      %v2652 = vld [vmem:[#allocation10 + $0xa8] sm:$0xff]
      %v2653 = vld [vmem:[#allocation10 + $0xb0] sm:$0xff]
      %v2654 = vld [vmem:[#allocation10 + $0xb8] sm:$0xff]
      %v2655 = vld [vmem:[#allocation10 + $0xc0] sm:$0xff]
      %v2656 = vld [vmem:[#allocation10 + $0xc8] sm:$0xff]
      %v2657 = vld [vmem:[#allocation10 + $0xd0] sm:$0xff]
      %v2658 = vld [vmem:[#allocation10 + $0xd8] sm:$0xff]
      %v2659 = vld [vmem:[#allocation10 + $0xe0] sm:$0xff]
      %v2660 = vld [vmem:[#allocation10 + $0xe8] sm:$0xff]
      %v2661 = vld [vmem:[#allocation10 + $0xf0] sm:$0xff]
      %v2662 = vld [vmem:[#allocation10 + $0xf8] sm:$0xff]
      %2663 = vmatprep.subr.mxu0 %v2662
      %2664 = vmatpush1.msra.mxu0 %v2661
      %2665 = vmatprep.subr.mxu0 %v2660
      %2666 = vmatpush1.msra.mxu0 %v2659
      %2667 = vmatprep.subr.mxu0 %v2658
      %2668 = vmatpush1.msra.mxu0 %v2657
      %2669 = vmatprep.subr.mxu0 %v2656
      %2670 = vmatpush1.msra.mxu0 %v2655
      %2671 = vmatprep.subr.mxu0 %v2654
      %2672 = vmatpush1.msra.mxu0 %v2653
      %2673 = vmatprep.subr.mxu0 %v2652
      %2674 = vmatpush1.msra.mxu0 %v2651
      %2675 = vmatprep.subr.mxu0 %v2650
      %2676 = vmatpush1.msra.mxu0 %v2649
      %2677 = vmatprep.subr.mxu0 %v2648
      %2678 = vmatpush1.msra.mxu0 %v2647
      %2679 = vmatprep.subr.mxu0 %v2646
      %2680 = vmatpush1.msra.mxu0 %v2645
      %2681 = vmatprep.subr.mxu0 %v2644
      %2682 = vmatpush1.msra.mxu0 %v2643
      %2683 = vmatprep.subr.mxu0 %v2642
      %2684 = vmatpush1.msra.mxu0 %v2641
      %2685 = vmatprep.subr.mxu0 %v2640
      %2686 = vmatpush1.msra.mxu0 %v2639
      %2687 = vmatprep.subr.mxu0 %v2638
      %2688 = vmatpush1.msra.mxu0 %v2637
      %2689 = vmatprep.subr.mxu0 %v2636
      %2690 = vmatpush1.msra.mxu0 %v2635
      %2691 = vmatprep.subr.mxu0 %v2634
      %2692 = vmatpush1.msra.mxu0 %v2633
      %2693 = vmatprep.subr.mxu0 %v2632
      %2694 = vmatpush1.msra.mxu0 %v2631
      %2695 = vmatprep.subr.mxu0 0.0
      %2696 = vmatpush2.msra.mxu0 0.0
      %2697 = vmatprep.subr.mxu0 0.0
      %2698 = vmatpush2.msra.mxu0 0.0
      %2699 = vmatprep.subr.mxu0 0.0
      %2700 = vmatpush2.msra.mxu0 0.0
      %2701 = vmatprep.subr.mxu0 0.0
      %2702 = vmatpush2.msra.mxu0 0.0
      %2703 = vmatprep.subr.mxu0 0.0
      %2704 = vmatpush2.msra.mxu0 0.0
      %2705 = vmatprep.subr.mxu0 0.0
      %2706 = vmatpush2.msra.mxu0 0.0
      %2707 = vmatprep.subr.mxu0 0.0
      %2708 = vmatpush2.msra.mxu0 0.0
      %2709 = vmatprep.subr.mxu0 0.0
      %2710 = vmatpush2.msra.mxu0 0.0
      %2711 = vmatprep.subr.mxu0 0.0
      %2712 = vmatpush2.msra.mxu0 0.0
      %2713 = vmatprep.subr.mxu0 0.0
      %2714 = vmatpush2.msra.mxu0 0.0
      %2715 = vmatprep.subr.mxu0 0.0
      %2716 = vmatpush2.msra.mxu0 0.0
      %2717 = vmatprep.subr.mxu0 0.0
      %2718 = vmatpush2.msra.mxu0 0.0
      %2719 = vmatprep.subr.mxu0 0.0
      %2720 = vmatpush2.msra.mxu0 0.0
      %2721 = vmatprep.subr.mxu0 0.0
      %2722 = vmatpush2.msra.mxu0 0.0
      %2723 = vmatprep.subr.mxu0 0.0
      %2724 = vmatpush2.msra.mxu0 0.0
      %2725 = vmatprep.subr.mxu0 0.0
      %2726 = vmatpush2.msra.mxu0 0.0
      %2727 = vmatprep.mubr.f32.mxu0 0.0
      %2728 = vmatmul.mubr.f32.gmra.mxu0 %v2623
      %v2729 = vpop.f32.mrf.mxu0
      %v2730 = vadd.f32 0.0, %v2729
      %v2731 = vpop.f32.mrf.mxu0
      %v2732 = vadd.f32 0.0, %v2731
      %2733 = vmatprep.mubr.f32.mxu0 0.0
      %2734 = vmatmul.mubr.f32.gmra.mxu0 %v2630
      %v2735 = vpop.f32.mrf.mxu0
      %v2736 = vadd.f32 0.0, %v2735
      %v2737 = vpop.f32.mrf.mxu0
      %v2738 = vadd.f32 0.0, %v2737
      %2739 = vdwg.mxu0
      %v2740 = vmul.f32 %v225, 0.49748743
      %v2741 = vmul.f32 %v226, 0.49748743
      %v2742 = vmul.f32 %v227, 0.49748743
      %v2743 = vmul.f32 %v228, 0.49748743
      %v2744 = vsub.f32 %v2730, %v2740
      %v2745 = vsub.f32 %v2732, %v2741
      %v2746 = vsub.f32 %v2736, %v2742
      %v2747 = vsub.f32 %v2738, %v2743
    $region54: #{forward.1} parent=1 // loop_footer
      %s220 = sadd.s32 1, %s216
    $region55: #{forward.1} parent=1 // loop_footer_branch
      %215 = sbr.rel target = $region51
    $region56: #{forward.1} parent=1 // loop_exit
      _
    %v2748 = vmul.f32 %v221, %v221
    %v2749 = vmul.f32 %v223, %v223
    %v2750 = vmul.f32 %v222, %v222
    %v2751 = vmul.f32 %v224, %v224
    %v2752 = vadd.f32 %v2748, %v2750
    %v2753 = vadd.f32 %v2749, %v2751
    %v2754 = vrsqrt.pop %v2752
    %v2755 = vmul.f32 %v2752, %v2754
    %vm2756 = vcmp.eq.f32.partialorder %v2752, inf
    %v2757 = vsel %vm2756, %v2752, %v2755
    %vm2758 = vcmp.eq.f32.partialorder %v2752, 0.0
    %v2759 = vand.u32 %v2752, 2147483648
    %v2760 = vsel %vm2758, %v2759, %v2757
    %v2761 = vrsqrt.pop %v2753
    %v2762 = vmul.f32 %v2753, %v2761
    %vm2763 = vcmp.eq.f32.partialorder %v2753, inf
    %v2764 = vsel %vm2763, %v2753, %v2762
    %vm2765 = vcmp.eq.f32.partialorder %v2753, 0.0
    %v2766 = vand.u32 %v2753, 2147483648
    %v2767 = vsel %vm2765, %v2766, %v2764
    %v2768 = vadd.f32 %v2760, 1e-16
    %v2769 = vadd.f32 %v2767, 1e-16
    %v2770 = vrcp.pop %v2768
    %v2771 = vrcp.pop %v2769
    %v2772 = vmul.f32 %v207, %v221
    %v2773 = vmul.f32 %v214, %v223
    %v2774 = vmul.f32 %v2772, %v2770
    %v2775 = vmul.f32 %v2773, %v2771
    %v2776 = vmul.f32 %v207, %v222
    %v2777 = vmul.f32 %v214, %v224
    %v2778 = vmul.f32 %v2776, %v2770
    %v2779 = vmul.f32 %v2777, %v2771
    %v2780 = vld [vmem:[#allocation7] sm:$0xff]
    %v2781 = vld [vmem:[#allocation7 + $0x8] sm:$0xff]
    %v2782 = vld [vmem:[#allocation7 + $0x10] sm:$0xff]
    %v2783 = vld [vmem:[#allocation7 + $0x18] sm:$0xff]
    %v2784 = vld [vmem:[#allocation7 + $0x20] sm:$0xff]
    %v2785 = vld [vmem:[#allocation7 + $0x28] sm:$0xff]
    %v2786 = vld [vmem:[#allocation7 + $0x30] sm:$0xff]
    %v2787 = vld [vmem:[#allocation7 + $0x38] sm:$0xff]
    %v2788 = vld [vmem:[#allocation7 + $0x40] sm:$0xff]
    %v2789 = vld [vmem:[#allocation7 + $0x48] sm:$0xff]
    %v2790 = vld [vmem:[#allocation7 + $0x50] sm:$0xff]
    %v2791 = vld [vmem:[#allocation7 + $0x58] sm:$0xff]
    %v2792 = vld [vmem:[#allocation7 + $0x60] sm:$0xff]
    %v2793 = vld [vmem:[#allocation7 + $0x68] sm:$0xff]
    %v2794 = vld [vmem:[#allocation7 + $0x70] sm:$0xff]
    %v2795 = vld [vmem:[#allocation7 + $0x78] sm:$0xff]
    %v2796 = vld [vmem:[#allocation7 + $0x80] sm:$0xff]
    %v2797 = vld [vmem:[#allocation7 + $0x88] sm:$0xff]
    %v2798 = vld [vmem:[#allocation7 + $0x90] sm:$0xff]
    %v2799 = vld [vmem:[#allocation7 + $0x98] sm:$0xff]
    %v2800 = vld [vmem:[#allocation7 + $0xa0] sm:$0xff]
    %v2801 = vld [vmem:[#allocation7 + $0xa8] sm:$0xff]
    %v2802 = vld [vmem:[#allocation7 + $0xb0] sm:$0xff]
    %v2803 = vld [vmem:[#allocation7 + $0xb8] sm:$0xff]
    %v2804 = vld [vmem:[#allocation7 + $0xc0] sm:$0xff]
    %v2805 = vld [vmem:[#allocation7 + $0xc8] sm:$0xff]
    %v2806 = vld [vmem:[#allocation7 + $0xd0] sm:$0xff]
    %v2807 = vld [vmem:[#allocation7 + $0xd8] sm:$0xff]
    %v2808 = vld [vmem:[#allocation7 + $0xe0] sm:$0xff]
    %v2809 = vld [vmem:[#allocation7 + $0xe8] sm:$0xff]
    %v2810 = vld [vmem:[#allocation7 + $0xf0] sm:$0xff]
    %v2811 = vld [vmem:[#allocation7 + $0xf8] sm:$0xff]
    %2812 = vmatprep.subr.mxu0 0.0
    %2813 = vmatpush1.msra.mxu0 %v2795
    %2814 = vmatprep.subr.mxu0 0.0
    %2815 = vmatpush1.msra.mxu0 %v2794
    %2816 = vmatprep.subr.mxu0 0.0
    %2817 = vmatpush1.msra.mxu0 %v2793
    %2818 = vmatprep.subr.mxu0 0.0
    %2819 = vmatpush1.msra.mxu0 %v2792
    %2820 = vmatprep.subr.mxu0 0.0
    %2821 = vmatpush1.msra.mxu0 %v2791
    %2822 = vmatprep.subr.mxu0 0.0
    %2823 = vmatpush1.msra.mxu0 %v2790
    %2824 = vmatprep.subr.mxu0 0.0
    %2825 = vmatpush1.msra.mxu0 %v2789
    %2826 = vmatprep.subr.mxu0 0.0
    %2827 = vmatpush1.msra.mxu0 %v2788
    %2828 = vmatprep.subr.mxu0 0.0
    %2829 = vmatpush1.msra.mxu0 %v2787
    %2830 = vmatprep.subr.mxu0 0.0
    %2831 = vmatpush1.msra.mxu0 %v2786
    %2832 = vmatprep.subr.mxu0 0.0
    %2833 = vmatpush1.msra.mxu0 %v2785
    %2834 = vmatprep.subr.mxu0 0.0
    %2835 = vmatpush1.msra.mxu0 %v2784
    %2836 = vmatprep.subr.mxu0 0.0
    %2837 = vmatpush1.msra.mxu0 %v2783
    %2838 = vmatprep.subr.mxu0 0.0
    %2839 = vmatpush1.msra.mxu0 %v2782
    %2840 = vmatprep.subr.mxu0 0.0
    %2841 = vmatpush1.msra.mxu0 %v2781
    %2842 = vmatprep.subr.mxu0 0.0
    %2843 = vmatpush1.msra.mxu0 %v2780
    %2844 = vmatprep.subr.mxu0 0.0
    %2845 = vmatpush2.msra.mxu0 %v2811
    %2846 = vmatprep.subr.mxu0 0.0
    %2847 = vmatpush2.msra.mxu0 %v2810
    %2848 = vmatprep.subr.mxu0 0.0
    %2849 = vmatpush2.msra.mxu0 %v2809
    %2850 = vmatprep.subr.mxu0 0.0
    %2851 = vmatpush2.msra.mxu0 %v2808
    %2852 = vmatprep.subr.mxu0 0.0
    %2853 = vmatpush2.msra.mxu0 %v2807
    %2854 = vmatprep.subr.mxu0 0.0
    %2855 = vmatpush2.msra.mxu0 %v2806
    %2856 = vmatprep.subr.mxu0 0.0
    %2857 = vmatpush2.msra.mxu0 %v2805
    %2858 = vmatprep.subr.mxu0 0.0
    %2859 = vmatpush2.msra.mxu0 %v2804
    %2860 = vmatprep.subr.mxu0 0.0
    %2861 = vmatpush2.msra.mxu0 %v2803
    %2862 = vmatprep.subr.mxu0 0.0
    %2863 = vmatpush2.msra.mxu0 %v2802
    %2864 = vmatprep.subr.mxu0 0.0
    %2865 = vmatpush2.msra.mxu0 %v2801
    %2866 = vmatprep.subr.mxu0 0.0
    %2867 = vmatpush2.msra.mxu0 %v2800
    %2868 = vmatprep.subr.mxu0 0.0
    %2869 = vmatpush2.msra.mxu0 %v2799
    %2870 = vmatprep.subr.mxu0 0.0
    %2871 = vmatpush2.msra.mxu0 %v2798
    %2872 = vmatprep.subr.mxu0 0.0
    %2873 = vmatpush2.msra.mxu0 %v2797
    %2874 = vmatprep.subr.mxu0 0.0
    %2875 = vmatpush2.msra.mxu0 %v2796
    %2876 = vmatprep.mubr.f32.mxu0 %v2778
    %2877 = vmatmul.mubr.f32.gmra.mxu0 %v2774
    %v2878 = vpop.f32.mrf.mxu0
    %v2879 = vadd.f32 0.0, %v2878
    %v2880 = vpop.f32.mrf.mxu0
    %2881 = vmatprep.mubr.f32.mxu0 %v2779
    %2882 = vmatmul.mubr.f32.gmra.mxu0 %v2775
    %v2883 = vpop.f32.mrf.mxu0
    %v2884 = vadd.f32 0.0, %v2883
    %v2885 = vpop.f32.mrf.mxu0
    %2886 = vdwg.mxu0
    %v2888 = vrot.slane %v2879, 1
    %v2890 = vrot.slane %v2879, 2
    %v2892 = vrot.slane %v2879, 3
    %v2894 = vrot.slane %v2879, 4
    %v2896 = vrot.slane %v2879, 5
    %v2898 = vrot.slane %v2879, 6
    %v2900 = vrot.slane %v2879, 7
    %v2903 = vrot.slane %v2884, 1
    %v2904 = vrot.slane %v2884, 2
    %v2905 = vrot.slane %v2884, 3
    %v2906 = vrot.slane %v2884, 4
    %v2907 = vrot.slane %v2884, 5
    %v2908 = vrot.slane %v2884, 6
    %v2909 = vrot.slane %v2884, 7
    %v2910 = vrot.slane %v2903, 7
    %v2911 = vrot.slane %v2904, 7
    %v2912 = vrot.slane %v2905, 7
    %v2913 = vrot.slane %v2906, 7
    %v2914 = vrot.slane %v2907, 7
    %v2915 = vrot.slane %v2908, 7
    %v2916 = vrot.slane %v2909, 7
    %vm2925 = vcmask 1040384
    %v2926 = vsel %vm2925, %v2879, %v2909
    %v2927 = vsel %vm2925, %v2888, %v2910
    %v2928 = vsel %vm2925, %v2890, %v2911
    %v2929 = vsel %vm2925, %v2892, %v2912
    %v2930 = vsel %vm2925, %v2894, %v2913
    %v2931 = vsel %vm2925, %v2896, %v2914
    %v2932 = vsel %vm2925, %v2898, %v2915
    %v2933 = vsel %vm2925, %v2900, %v2916
    %v2934 = vld [vmem:[#allocation11] sm:$0xff]
    %v2935 = vld [vmem:[#allocation11 + $0x8] sm:$0xff]
    %v2936 = vld [vmem:[#allocation11 + $0x10] sm:$0xff]
    %v2937 = vld [vmem:[#allocation11 + $0x18] sm:$0xff]
    %v2938 = vld [vmem:[#allocation11 + $0x20] sm:$0xff]
    %v2939 = vld [vmem:[#allocation11 + $0x28] sm:$0xff]
    %v2940 = vld [vmem:[#allocation11 + $0x30] sm:$0xff]
    %v2941 = vld [vmem:[#allocation11 + $0x38] sm:$0xff]
    %v2942 = vld [vmem:[#allocation11 + $0x40] sm:$0xff]
    %v2943 = vld [vmem:[#allocation11 + $0x48] sm:$0xff]
    %v2944 = vld [vmem:[#allocation11 + $0x50] sm:$0xff]
    %v2945 = vld [vmem:[#allocation11 + $0x58] sm:$0xff]
    %v2946 = vld [vmem:[#allocation11 + $0x60] sm:$0xff]
    %v2947 = vld [vmem:[#allocation11 + $0x68] sm:$0xff]
    %v2948 = vld [vmem:[#allocation11 + $0x70] sm:$0xff]
    %v2949 = vld [vmem:[#allocation11 + $0x78] sm:$0xff]
    %v2950 = vld [vmem:[#allocation11 + $0x80] sm:$0xff]
    %v2951 = vld [vmem:[#allocation11 + $0x88] sm:$0xff]
    %v2952 = vld [vmem:[#allocation11 + $0x90] sm:$0xff]
    %v2953 = vld [vmem:[#allocation11 + $0x98] sm:$0xff]
    %v2954 = vld [vmem:[#allocation11 + $0xa0] sm:$0xff]
    %v2955 = vld [vmem:[#allocation11 + $0xa8] sm:$0xff]
    %v2956 = vld [vmem:[#allocation11 + $0xb0] sm:$0xff]
    %v2957 = vld [vmem:[#allocation11 + $0xb8] sm:$0xff]
    %v2958 = vld [vmem:[#allocation11 + $0xc0] sm:$0xff]
    %v2959 = vld [vmem:[#allocation11 + $0xc8] sm:$0xff]
    %v2960 = vld [vmem:[#allocation11 + $0xd0] sm:$0xff]
    %v2961 = vld [vmem:[#allocation11 + $0xd8] sm:$0xff]
    %v2962 = vld [vmem:[#allocation11 + $0xe0] sm:$0xff]
    %v2963 = vld [vmem:[#allocation11 + $0xe8] sm:$0xff]
    %v2964 = vld [vmem:[#allocation11 + $0xf0] sm:$0xff]
    %v2965 = vld [vmem:[#allocation11 + $0xf8] sm:$0xff]
    %v2966 = vld [vmem:[#allocation11 + $0x100] sm:$0xff]
    %v2967 = vld [vmem:[#allocation11 + $0x108] sm:$0xff]
    %v2968 = vld [vmem:[#allocation11 + $0x110] sm:$0xff]
    %v2969 = vld [vmem:[#allocation11 + $0x118] sm:$0xff]
    %v2970 = vld [vmem:[#allocation11 + $0x120] sm:$0xff]
    %v2971 = vld [vmem:[#allocation11 + $0x128] sm:$0xff]
    %v2972 = vld [vmem:[#allocation11 + $0x130] sm:$0xff]
    %v2973 = vld [vmem:[#allocation11 + $0x138] sm:$0xff]
    %v2974 = vld [vmem:[#allocation11 + $0x140] sm:$0xff]
    %v2975 = vld [vmem:[#allocation11 + $0x148] sm:$0xff]
    %v2976 = vld [vmem:[#allocation11 + $0x150] sm:$0xff]
    %v2977 = vld [vmem:[#allocation11 + $0x158] sm:$0xff]
    %v2978 = vld [vmem:[#allocation11 + $0x160] sm:$0xff]
    %v2979 = vld [vmem:[#allocation11 + $0x168] sm:$0xff]
    %v2980 = vld [vmem:[#allocation11 + $0x170] sm:$0xff]
    %v2981 = vld [vmem:[#allocation11 + $0x178] sm:$0xff]
    %v2982 = vld [vmem:[#allocation11 + $0x180] sm:$0xff]
    %v2983 = vld [vmem:[#allocation11 + $0x188] sm:$0xff]
    %v2984 = vld [vmem:[#allocation11 + $0x190] sm:$0xff]
    %v2985 = vld [vmem:[#allocation11 + $0x198] sm:$0xff]
    %v2986 = vld [vmem:[#allocation11 + $0x1a0] sm:$0xff]
    %v2987 = vld [vmem:[#allocation11 + $0x1a8] sm:$0xff]
    %v2988 = vld [vmem:[#allocation11 + $0x1b0] sm:$0xff]
    %v2989 = vld [vmem:[#allocation11 + $0x1b8] sm:$0xff]
    %v2990 = vld [vmem:[#allocation11 + $0x1c0] sm:$0xff]
    %v2991 = vld [vmem:[#allocation11 + $0x1c8] sm:$0xff]
    %v2992 = vld [vmem:[#allocation11 + $0x1d0] sm:$0xff]
    %v2993 = vld [vmem:[#allocation11 + $0x1d8] sm:$0xff]
    %v2994 = vld [vmem:[#allocation11 + $0x1e0] sm:$0xff]
    %v2995 = vld [vmem:[#allocation11 + $0x1e8] sm:$0xff]
    %v2996 = vld [vmem:[#allocation11 + $0x1f0] sm:$0xff]
    %v2997 = vld [vmem:[#allocation11 + $0x1f8] sm:$0xff]
    %v2998 = vld [vmem:[#allocation11 + $0x200] sm:$0xff]
    %v2999 = vld [vmem:[#allocation11 + $0x208] sm:$0xff]
    %v3000 = vld [vmem:[#allocation11 + $0x210] sm:$0xff]
    %v3001 = vld [vmem:[#allocation11 + $0x218] sm:$0xff]
    %v3002 = vld [vmem:[#allocation11 + $0x220] sm:$0xff]
    %v3003 = vld [vmem:[#allocation11 + $0x228] sm:$0xff]
    %v3004 = vld [vmem:[#allocation11 + $0x230] sm:$0xff]
    %v3005 = vld [vmem:[#allocation11 + $0x238] sm:$0xff]
    %v3006 = vld [vmem:[#allocation11 + $0x240] sm:$0xff]
    %v3007 = vld [vmem:[#allocation11 + $0x248] sm:$0xff]
    %v3008 = vld [vmem:[#allocation11 + $0x250] sm:$0xff]
    %v3009 = vld [vmem:[#allocation11 + $0x258] sm:$0xff]
    %v3010 = vld [vmem:[#allocation11 + $0x260] sm:$0xff]
    %v3011 = vld [vmem:[#allocation11 + $0x268] sm:$0xff]
    %v3012 = vld [vmem:[#allocation11 + $0x270] sm:$0xff]
    %v3013 = vld [vmem:[#allocation11 + $0x278] sm:$0xff]
    %v3014 = vld [vmem:[#allocation11 + $0x280] sm:$0xff]
    %v3015 = vld [vmem:[#allocation11 + $0x288] sm:$0xff]
    %v3016 = vld [vmem:[#allocation11 + $0x290] sm:$0xff]
    %v3017 = vld [vmem:[#allocation11 + $0x298] sm:$0xff]
    %v3018 = vld [vmem:[#allocation11 + $0x2a0] sm:$0xff]
    %v3019 = vld [vmem:[#allocation11 + $0x2a8] sm:$0xff]
    %v3020 = vld [vmem:[#allocation11 + $0x2b0] sm:$0xff]
    %v3021 = vld [vmem:[#allocation11 + $0x2b8] sm:$0xff]
    %v3022 = vld [vmem:[#allocation11 + $0x2c0] sm:$0xff]
    %v3023 = vld [vmem:[#allocation11 + $0x2c8] sm:$0xff]
    %v3024 = vld [vmem:[#allocation11 + $0x2d0] sm:$0xff]
    %v3025 = vld [vmem:[#allocation11 + $0x2d8] sm:$0xff]
    %v3026 = vld [vmem:[#allocation11 + $0x2e0] sm:$0xff]
    %v3027 = vld [vmem:[#allocation11 + $0x2e8] sm:$0xff]
    %v3028 = vld [vmem:[#allocation11 + $0x2f0] sm:$0xff]
    %v3029 = vld [vmem:[#allocation11 + $0x2f8] sm:$0xff]
    %v3030 = vld [vmem:[#allocation11 + $0x300] sm:$0xff]
    %v3031 = vld [vmem:[#allocation11 + $0x308] sm:$0xff]
    %v3032 = vld [vmem:[#allocation11 + $0x310] sm:$0xff]
    %v3033 = vld [vmem:[#allocation11 + $0x318] sm:$0xff]
    %v3034 = vld [vmem:[#allocation11 + $0x320] sm:$0xff]
    %v3035 = vld [vmem:[#allocation11 + $0x328] sm:$0xff]
    %v3036 = vld [vmem:[#allocation11 + $0x330] sm:$0xff]
    %v3037 = vld [vmem:[#allocation11 + $0x338] sm:$0xff]
    %v3038 = vld [vmem:[#allocation11 + $0x340] sm:$0xff]
    %v3039 = vld [vmem:[#allocation11 + $0x348] sm:$0xff]
    %v3040 = vld [vmem:[#allocation11 + $0x350] sm:$0xff]
    %v3041 = vld [vmem:[#allocation11 + $0x358] sm:$0xff]
    %v3042 = vld [vmem:[#allocation11 + $0x360] sm:$0xff]
    %v3043 = vld [vmem:[#allocation11 + $0x368] sm:$0xff]
    %v3044 = vld [vmem:[#allocation11 + $0x370] sm:$0xff]
    %v3045 = vld [vmem:[#allocation11 + $0x378] sm:$0xff]
    %v3046 = vld [vmem:[#allocation11 + $0x380] sm:$0xff]
    %v3047 = vld [vmem:[#allocation11 + $0x388] sm:$0xff]
    %v3048 = vld [vmem:[#allocation11 + $0x390] sm:$0xff]
    %v3049 = vld [vmem:[#allocation11 + $0x398] sm:$0xff]
    %v3050 = vld [vmem:[#allocation11 + $0x3a0] sm:$0xff]
    %v3051 = vld [vmem:[#allocation11 + $0x3a8] sm:$0xff]
    %v3052 = vld [vmem:[#allocation11 + $0x3b0] sm:$0xff]
    %v3053 = vld [vmem:[#allocation11 + $0x3b8] sm:$0xff]
    %v3054 = vld [vmem:[#allocation11 + $0x3c0] sm:$0xff]
    %v3055 = vld [vmem:[#allocation11 + $0x3c8] sm:$0xff]
    %v3056 = vld [vmem:[#allocation11 + $0x3d0] sm:$0xff]
    %v3057 = vld [vmem:[#allocation11 + $0x3d8] sm:$0xff]
    %v3058 = vld [vmem:[#allocation11 + $0x3e0] sm:$0xff]
    %v3059 = vld [vmem:[#allocation11 + $0x3e8] sm:$0xff]
    %v3060 = vld [vmem:[#allocation11 + $0x3f0] sm:$0xff]
    %v3061 = vld [vmem:[#allocation11 + $0x3f8] sm:$0xff]
    %v3062 = vld [vmem:[#allocation11 + $0x400] sm:$0xff]
    %v3063 = vld [vmem:[#allocation11 + $0x408] sm:$0xff]
    %v3064 = vld [vmem:[#allocation11 + $0x410] sm:$0xff]
    %v3065 = vld [vmem:[#allocation11 + $0x418] sm:$0xff]
    %v3066 = vld [vmem:[#allocation11 + $0x420] sm:$0xff]
    %v3067 = vld [vmem:[#allocation11 + $0x428] sm:$0xff]
    %v3068 = vld [vmem:[#allocation11 + $0x430] sm:$0xff]
    %v3069 = vld [vmem:[#allocation11 + $0x438] sm:$0xff]
    %v3070 = vld [vmem:[#allocation11 + $0x440] sm:$0xff]
    %v3071 = vld [vmem:[#allocation11 + $0x448] sm:$0xff]
    %v3072 = vld [vmem:[#allocation11 + $0x450] sm:$0xff]
    %v3073 = vld [vmem:[#allocation11 + $0x458] sm:$0xff]
    %v3074 = vld [vmem:[#allocation11 + $0x460] sm:$0xff]
    %v3075 = vld [vmem:[#allocation11 + $0x468] sm:$0xff]
    %v3076 = vld [vmem:[#allocation11 + $0x470] sm:$0xff]
    %v3077 = vld [vmem:[#allocation11 + $0x478] sm:$0xff]
    %v3078 = vld [vmem:[#allocation11 + $0x480] sm:$0xff]
    %v3079 = vld [vmem:[#allocation11 + $0x488] sm:$0xff]
    %v3080 = vld [vmem:[#allocation11 + $0x490] sm:$0xff]
    %v3081 = vld [vmem:[#allocation11 + $0x498] sm:$0xff]
    %v3082 = vld [vmem:[#allocation11 + $0x4a0] sm:$0xff]
    %v3083 = vld [vmem:[#allocation11 + $0x4a8] sm:$0xff]
    %v3084 = vld [vmem:[#allocation11 + $0x4b0] sm:$0xff]
    %v3085 = vld [vmem:[#allocation11 + $0x4b8] sm:$0xff]
    %v3086 = vld [vmem:[#allocation11 + $0x4c0] sm:$0xff]
    %v3087 = vld [vmem:[#allocation11 + $0x4c8] sm:$0xff]
    %v3088 = vld [vmem:[#allocation11 + $0x4d0] sm:$0xff]
    %v3089 = vld [vmem:[#allocation11 + $0x4d8] sm:$0xff]
    %v3090 = vld [vmem:[#allocation11 + $0x4e0] sm:$0xff]
    %v3091 = vld [vmem:[#allocation11 + $0x4e8] sm:$0xff]
    %v3092 = vld [vmem:[#allocation11 + $0x4f0] sm:$0xff]
    %v3093 = vld [vmem:[#allocation11 + $0x4f8] sm:$0xff]
    %v3094 = vld [vmem:[#allocation11 + $0x500] sm:$0xff]
    %v3095 = vld [vmem:[#allocation11 + $0x508] sm:$0xff]
    %v3096 = vld [vmem:[#allocation11 + $0x510] sm:$0xff]
    %v3097 = vld [vmem:[#allocation11 + $0x518] sm:$0xff]
    %v3098 = vld [vmem:[#allocation11 + $0x520] sm:$0xff]
    %v3099 = vld [vmem:[#allocation11 + $0x528] sm:$0xff]
    %v3100 = vld [vmem:[#allocation11 + $0x530] sm:$0xff]
    %v3101 = vld [vmem:[#allocation11 + $0x538] sm:$0xff]
    %v3102 = vld [vmem:[#allocation11 + $0x540] sm:$0xff]
    %v3103 = vld [vmem:[#allocation11 + $0x548] sm:$0xff]
    %v3104 = vld [vmem:[#allocation11 + $0x550] sm:$0xff]
    %v3105 = vld [vmem:[#allocation11 + $0x558] sm:$0xff]
    %v3106 = vld [vmem:[#allocation11 + $0x560] sm:$0xff]
    %v3107 = vld [vmem:[#allocation11 + $0x568] sm:$0xff]
    %v3108 = vld [vmem:[#allocation11 + $0x570] sm:$0xff]
    %v3109 = vld [vmem:[#allocation11 + $0x578] sm:$0xff]
    %v3110 = vld [vmem:[#allocation11 + $0x580] sm:$0xff]
    %v3111 = vld [vmem:[#allocation11 + $0x588] sm:$0xff]
    %v3112 = vld [vmem:[#allocation11 + $0x590] sm:$0xff]
    %v3113 = vld [vmem:[#allocation11 + $0x598] sm:$0xff]
    %v3114 = vld [vmem:[#allocation11 + $0x5a0] sm:$0xff]
    %v3115 = vld [vmem:[#allocation11 + $0x5a8] sm:$0xff]
    %v3116 = vld [vmem:[#allocation11 + $0x5b0] sm:$0xff]
    %v3117 = vld [vmem:[#allocation11 + $0x5b8] sm:$0xff]
    %v3118 = vld [vmem:[#allocation11 + $0x5c0] sm:$0xff]
    %v3119 = vld [vmem:[#allocation11 + $0x5c8] sm:$0xff]
    %v3120 = vld [vmem:[#allocation11 + $0x5d0] sm:$0xff]
    %v3121 = vld [vmem:[#allocation11 + $0x5d8] sm:$0xff]
    %v3122 = vld [vmem:[#allocation11 + $0x5e0] sm:$0xff]
    %v3123 = vld [vmem:[#allocation11 + $0x5e8] sm:$0xff]
    %v3124 = vld [vmem:[#allocation11 + $0x5f0] sm:$0xff]
    %v3125 = vld [vmem:[#allocation11 + $0x5f8] sm:$0xff]
    %v3126 = vld [vmem:[#allocation11 + $0x600] sm:$0xff]
    %v3127 = vld [vmem:[#allocation11 + $0x608] sm:$0xff]
    %v3128 = vld [vmem:[#allocation11 + $0x610] sm:$0xff]
    %v3129 = vld [vmem:[#allocation11 + $0x618] sm:$0xff]
    %v3130 = vld [vmem:[#allocation11 + $0x620] sm:$0xff]
    %v3131 = vld [vmem:[#allocation11 + $0x628] sm:$0xff]
    %v3132 = vld [vmem:[#allocation11 + $0x630] sm:$0xff]
    %v3133 = vld [vmem:[#allocation11 + $0x638] sm:$0xff]
    %v3134 = vld [vmem:[#allocation11 + $0x640] sm:$0xff]
    %v3135 = vld [vmem:[#allocation11 + $0x648] sm:$0xff]
    %v3136 = vld [vmem:[#allocation11 + $0x650] sm:$0xff]
    %v3137 = vld [vmem:[#allocation11 + $0x658] sm:$0xff]
    %v3138 = vld [vmem:[#allocation11 + $0x660] sm:$0xff]
    %v3139 = vld [vmem:[#allocation11 + $0x668] sm:$0xff]
    %v3140 = vld [vmem:[#allocation11 + $0x670] sm:$0xff]
    %v3141 = vld [vmem:[#allocation11 + $0x678] sm:$0xff]
    %v3142 = vld [vmem:[#allocation11 + $0x680] sm:$0xff]
    %v3143 = vld [vmem:[#allocation11 + $0x688] sm:$0xff]
    %v3144 = vld [vmem:[#allocation11 + $0x690] sm:$0xff]
    %v3145 = vld [vmem:[#allocation11 + $0x698] sm:$0xff]
    %v3146 = vld [vmem:[#allocation11 + $0x6a0] sm:$0xff]
    %v3147 = vld [vmem:[#allocation11 + $0x6a8] sm:$0xff]
    %v3148 = vld [vmem:[#allocation11 + $0x6b0] sm:$0xff]
    %v3149 = vld [vmem:[#allocation11 + $0x6b8] sm:$0xff]
    %v3150 = vld [vmem:[#allocation11 + $0x6c0] sm:$0xff]
    %v3151 = vld [vmem:[#allocation11 + $0x6c8] sm:$0xff]
    %v3152 = vld [vmem:[#allocation11 + $0x6d0] sm:$0xff]
    %v3153 = vld [vmem:[#allocation11 + $0x6d8] sm:$0xff]
    %v3154 = vld [vmem:[#allocation11 + $0x6e0] sm:$0xff]
    %v3155 = vld [vmem:[#allocation11 + $0x6e8] sm:$0xff]
    %v3156 = vld [vmem:[#allocation11 + $0x6f0] sm:$0xff]
    %v3157 = vld [vmem:[#allocation11 + $0x6f8] sm:$0xff]
    %v3158 = vld [vmem:[#allocation11 + $0x700] sm:$0xff]
    %v3159 = vld [vmem:[#allocation11 + $0x708] sm:$0xff]
    %v3160 = vld [vmem:[#allocation11 + $0x710] sm:$0xff]
    %v3161 = vld [vmem:[#allocation11 + $0x718] sm:$0xff]
    %v3162 = vld [vmem:[#allocation11 + $0x720] sm:$0xff]
    %v3163 = vld [vmem:[#allocation11 + $0x728] sm:$0xff]
    %v3164 = vld [vmem:[#allocation11 + $0x730] sm:$0xff]
    %v3165 = vld [vmem:[#allocation11 + $0x738] sm:$0xff]
    %v3166 = vld [vmem:[#allocation11 + $0x740] sm:$0xff]
    %v3167 = vld [vmem:[#allocation11 + $0x748] sm:$0xff]
    %v3168 = vld [vmem:[#allocation11 + $0x750] sm:$0xff]
    %v3169 = vld [vmem:[#allocation11 + $0x758] sm:$0xff]
    %v3170 = vld [vmem:[#allocation11 + $0x760] sm:$0xff]
    %v3171 = vld [vmem:[#allocation11 + $0x768] sm:$0xff]
    %v3172 = vld [vmem:[#allocation11 + $0x770] sm:$0xff]
    %v3173 = vld [vmem:[#allocation11 + $0x778] sm:$0xff]
    %v3174 = vld [vmem:[#allocation11 + $0x780] sm:$0xff]
    %v3175 = vld [vmem:[#allocation11 + $0x788] sm:$0xff]
    %v3176 = vld [vmem:[#allocation11 + $0x790] sm:$0xff]
    %v3177 = vld [vmem:[#allocation11 + $0x798] sm:$0xff]
    %v3178 = vld [vmem:[#allocation11 + $0x7a0] sm:$0xff]
    %v3179 = vld [vmem:[#allocation11 + $0x7a8] sm:$0xff]
    %v3180 = vld [vmem:[#allocation11 + $0x7b0] sm:$0xff]
    %v3181 = vld [vmem:[#allocation11 + $0x7b8] sm:$0xff]
    %v3182 = vld [vmem:[#allocation11 + $0x7c0] sm:$0xff]
    %v3183 = vld [vmem:[#allocation11 + $0x7c8] sm:$0xff]
    %v3184 = vld [vmem:[#allocation11 + $0x7d0] sm:$0xff]
    %v3185 = vld [vmem:[#allocation11 + $0x7d8] sm:$0xff]
    %v3186 = vld [vmem:[#allocation11 + $0x7e0] sm:$0xff]
    %v3187 = vld [vmem:[#allocation11 + $0x7e8] sm:$0xff]
    %v3188 = vld [vmem:[#allocation11 + $0x7f0] sm:$0xff]
    %v3189 = vld [vmem:[#allocation11 + $0x7f8] sm:$0xff]
    %3190 = vmatprep.subr.mxu0 %v2965
    %3191 = vmatpush1.msra.mxu0 %v2964
    %3192 = vmatprep.subr.mxu0 %v2963
    %3193 = vmatpush1.msra.mxu0 %v2962
    %3194 = vmatprep.subr.mxu0 %v2961
    %3195 = vmatpush1.msra.mxu0 %v2960
    %3196 = vmatprep.subr.mxu0 %v2959
    %3197 = vmatpush1.msra.mxu0 %v2958
    %3198 = vmatprep.subr.mxu0 %v2957
    %3199 = vmatpush1.msra.mxu0 %v2956
    %3200 = vmatprep.subr.mxu0 %v2955
    %3201 = vmatpush1.msra.mxu0 %v2954
    %3202 = vmatprep.subr.mxu0 %v2953
    %3203 = vmatpush1.msra.mxu0 %v2952
    %3204 = vmatprep.subr.mxu0 %v2951
    %3205 = vmatpush1.msra.mxu0 %v2950
    %3206 = vmatprep.subr.mxu0 %v2949
    %3207 = vmatpush1.msra.mxu0 %v2948
    %3208 = vmatprep.subr.mxu0 %v2947
    %3209 = vmatpush1.msra.mxu0 %v2946
    %3210 = vmatprep.subr.mxu0 %v2945
    %3211 = vmatpush1.msra.mxu0 %v2944
    %3212 = vmatprep.subr.mxu0 %v2943
    %3213 = vmatpush1.msra.mxu0 %v2942
    %3214 = vmatprep.subr.mxu0 %v2941
    %3215 = vmatpush1.msra.mxu0 %v2940
    %3216 = vmatprep.subr.mxu0 %v2939
    %3217 = vmatpush1.msra.mxu0 %v2938
    %3218 = vmatprep.subr.mxu0 %v2937
    %3219 = vmatpush1.msra.mxu0 %v2936
    %3220 = vmatprep.subr.mxu0 %v2935
    %3221 = vmatpush1.msra.mxu0 %v2934
    %3222 = vmatprep.subr.mxu0 %v2997
    %3223 = vmatpush2.msra.mxu0 %v2996
    %3224 = vmatprep.subr.mxu0 %v2995
    %3225 = vmatpush2.msra.mxu0 %v2994
    %3226 = vmatprep.subr.mxu0 %v2993
    %3227 = vmatpush2.msra.mxu0 %v2992
    %3228 = vmatprep.subr.mxu0 %v2991
    %3229 = vmatpush2.msra.mxu0 %v2990
    %3230 = vmatprep.subr.mxu0 %v2989
    %3231 = vmatpush2.msra.mxu0 %v2988
    %3232 = vmatprep.subr.mxu0 %v2987
    %3233 = vmatpush2.msra.mxu0 %v2986
    %3234 = vmatprep.subr.mxu0 %v2985
    %3235 = vmatpush2.msra.mxu0 %v2984
    %3236 = vmatprep.subr.mxu0 %v2983
    %3237 = vmatpush2.msra.mxu0 %v2982
    %3238 = vmatprep.subr.mxu0 %v2981
    %3239 = vmatpush2.msra.mxu0 %v2980
    %3240 = vmatprep.subr.mxu0 %v2979
    %3241 = vmatpush2.msra.mxu0 %v2978
    %3242 = vmatprep.subr.mxu0 %v2977
    %3243 = vmatpush2.msra.mxu0 %v2976
    %3244 = vmatprep.subr.mxu0 %v2975
    %3245 = vmatpush2.msra.mxu0 %v2974
    %3246 = vmatprep.subr.mxu0 %v2973
    %3247 = vmatpush2.msra.mxu0 %v2972
    %3248 = vmatprep.subr.mxu0 %v2971
    %3249 = vmatpush2.msra.mxu0 %v2970
    %3250 = vmatprep.subr.mxu0 %v2969
    %3251 = vmatpush2.msra.mxu0 %v2968
    %3252 = vmatprep.subr.mxu0 %v2967
    %3253 = vmatpush2.msra.mxu0 %v2966
    %3254 = vmatprep.mubr.f32.mxu0 %v2927
    %3255 = vmatmul.mubr.f32.gmra.mxu0 %v2926
    %v3256 = vpop.f32.mrf.mxu0
    %v3257 = vadd.f32 0.0, %v3256
    %v3258 = vpop.f32.mrf.mxu0
    %v3259 = vadd.f32 0.0, %v3258
    %3260 = vdwg.mxu0
    %3261 = vmatprep.subr.mxu0 %v3029
    %3262 = vmatpush1.msra.mxu0 %v3028
    %3263 = vmatprep.subr.mxu0 %v3027
    %3264 = vmatpush1.msra.mxu0 %v3026
    %3265 = vmatprep.subr.mxu0 %v3025
    %3266 = vmatpush1.msra.mxu0 %v3024
    %3267 = vmatprep.subr.mxu0 %v3023
    %3268 = vmatpush1.msra.mxu0 %v3022
    %3269 = vmatprep.subr.mxu0 %v3021
    %3270 = vmatpush1.msra.mxu0 %v3020
    %3271 = vmatprep.subr.mxu0 %v3019
    %3272 = vmatpush1.msra.mxu0 %v3018
    %3273 = vmatprep.subr.mxu0 %v3017
    %3274 = vmatpush1.msra.mxu0 %v3016
    %3275 = vmatprep.subr.mxu0 %v3015
    %3276 = vmatpush1.msra.mxu0 %v3014
    %3277 = vmatprep.subr.mxu0 %v3013
    %3278 = vmatpush1.msra.mxu0 %v3012
    %3279 = vmatprep.subr.mxu0 %v3011
    %3280 = vmatpush1.msra.mxu0 %v3010
    %3281 = vmatprep.subr.mxu0 %v3009
    %3282 = vmatpush1.msra.mxu0 %v3008
    %3283 = vmatprep.subr.mxu0 %v3007
    %3284 = vmatpush1.msra.mxu0 %v3006
    %3285 = vmatprep.subr.mxu0 %v3005
    %3286 = vmatpush1.msra.mxu0 %v3004
    %3287 = vmatprep.subr.mxu0 %v3003
    %3288 = vmatpush1.msra.mxu0 %v3002
    %3289 = vmatprep.subr.mxu0 %v3001
    %3290 = vmatpush1.msra.mxu0 %v3000
    %3291 = vmatprep.subr.mxu0 %v2999
    %3292 = vmatpush1.msra.mxu0 %v2998
    %3293 = vmatprep.subr.mxu0 %v3061
    %3294 = vmatpush2.msra.mxu0 %v3060
    %3295 = vmatprep.subr.mxu0 %v3059
    %3296 = vmatpush2.msra.mxu0 %v3058
    %3297 = vmatprep.subr.mxu0 %v3057
    %3298 = vmatpush2.msra.mxu0 %v3056
    %3299 = vmatprep.subr.mxu0 %v3055
    %3300 = vmatpush2.msra.mxu0 %v3054
    %3301 = vmatprep.subr.mxu0 %v3053
    %3302 = vmatpush2.msra.mxu0 %v3052
    %3303 = vmatprep.subr.mxu0 %v3051
    %3304 = vmatpush2.msra.mxu0 %v3050
    %3305 = vmatprep.subr.mxu0 %v3049
    %3306 = vmatpush2.msra.mxu0 %v3048
    %3307 = vmatprep.subr.mxu0 %v3047
    %3308 = vmatpush2.msra.mxu0 %v3046
    %3309 = vmatprep.subr.mxu0 %v3045
    %3310 = vmatpush2.msra.mxu0 %v3044
    %3311 = vmatprep.subr.mxu0 %v3043
    %3312 = vmatpush2.msra.mxu0 %v3042
    %3313 = vmatprep.subr.mxu0 %v3041
    %3314 = vmatpush2.msra.mxu0 %v3040
    %3315 = vmatprep.subr.mxu0 %v3039
    %3316 = vmatpush2.msra.mxu0 %v3038
    %3317 = vmatprep.subr.mxu0 %v3037
    %3318 = vmatpush2.msra.mxu0 %v3036
    %3319 = vmatprep.subr.mxu0 %v3035
    %3320 = vmatpush2.msra.mxu0 %v3034
    %3321 = vmatprep.subr.mxu0 %v3033
    %3322 = vmatpush2.msra.mxu0 %v3032
    %3323 = vmatprep.subr.mxu0 %v3031
    %3324 = vmatpush2.msra.mxu0 %v3030
    %3325 = vmatprep.mubr.f32.mxu0 %v2929
    %3326 = vmatmul.mubr.f32.gmra.mxu0 %v2928
    %v3327 = vpop.f32.mrf.mxu0
    %v3328 = vadd.f32 %v3257, %v3327
    %v3329 = vpop.f32.mrf.mxu0
    %v3330 = vadd.f32 %v3259, %v3329
    %3331 = vdwg.mxu0
    %3332 = vmatprep.subr.mxu0 %v3093
    %3333 = vmatpush1.msra.mxu0 %v3092
    %3334 = vmatprep.subr.mxu0 %v3091
    %3335 = vmatpush1.msra.mxu0 %v3090
    %3336 = vmatprep.subr.mxu0 %v3089
    %3337 = vmatpush1.msra.mxu0 %v3088
    %3338 = vmatprep.subr.mxu0 %v3087
    %3339 = vmatpush1.msra.mxu0 %v3086
    %3340 = vmatprep.subr.mxu0 %v3085
    %3341 = vmatpush1.msra.mxu0 %v3084
    %3342 = vmatprep.subr.mxu0 %v3083
    %3343 = vmatpush1.msra.mxu0 %v3082
    %3344 = vmatprep.subr.mxu0 %v3081
    %3345 = vmatpush1.msra.mxu0 %v3080
    %3346 = vmatprep.subr.mxu0 %v3079
    %3347 = vmatpush1.msra.mxu0 %v3078
    %3348 = vmatprep.subr.mxu0 %v3077
    %3349 = vmatpush1.msra.mxu0 %v3076
    %3350 = vmatprep.subr.mxu0 %v3075
    %3351 = vmatpush1.msra.mxu0 %v3074
    %3352 = vmatprep.subr.mxu0 %v3073
    %3353 = vmatpush1.msra.mxu0 %v3072
    %3354 = vmatprep.subr.mxu0 %v3071
    %3355 = vmatpush1.msra.mxu0 %v3070
    %3356 = vmatprep.subr.mxu0 %v3069
    %3357 = vmatpush1.msra.mxu0 %v3068
    %3358 = vmatprep.subr.mxu0 %v3067
    %3359 = vmatpush1.msra.mxu0 %v3066
    %3360 = vmatprep.subr.mxu0 %v3065
    %3361 = vmatpush1.msra.mxu0 %v3064
    %3362 = vmatprep.subr.mxu0 %v3063
    %3363 = vmatpush1.msra.mxu0 %v3062
    %3364 = vmatprep.subr.mxu0 %v3125
    %3365 = vmatpush2.msra.mxu0 %v3124
    %3366 = vmatprep.subr.mxu0 %v3123
    %3367 = vmatpush2.msra.mxu0 %v3122
    %3368 = vmatprep.subr.mxu0 %v3121
    %3369 = vmatpush2.msra.mxu0 %v3120
    %3370 = vmatprep.subr.mxu0 %v3119
    %3371 = vmatpush2.msra.mxu0 %v3118
    %3372 = vmatprep.subr.mxu0 %v3117
    %3373 = vmatpush2.msra.mxu0 %v3116
    %3374 = vmatprep.subr.mxu0 %v3115
    %3375 = vmatpush2.msra.mxu0 %v3114
    %3376 = vmatprep.subr.mxu0 %v3113
    %3377 = vmatpush2.msra.mxu0 %v3112
    %3378 = vmatprep.subr.mxu0 %v3111
    %3379 = vmatpush2.msra.mxu0 %v3110
    %3380 = vmatprep.subr.mxu0 %v3109
    %3381 = vmatpush2.msra.mxu0 %v3108
    %3382 = vmatprep.subr.mxu0 %v3107
    %3383 = vmatpush2.msra.mxu0 %v3106
    %3384 = vmatprep.subr.mxu0 %v3105
    %3385 = vmatpush2.msra.mxu0 %v3104
    %3386 = vmatprep.subr.mxu0 %v3103
    %3387 = vmatpush2.msra.mxu0 %v3102
    %3388 = vmatprep.subr.mxu0 %v3101
    %3389 = vmatpush2.msra.mxu0 %v3100
    %3390 = vmatprep.subr.mxu0 %v3099
    %3391 = vmatpush2.msra.mxu0 %v3098
    %3392 = vmatprep.subr.mxu0 %v3097
    %3393 = vmatpush2.msra.mxu0 %v3096
    %3394 = vmatprep.subr.mxu0 %v3095
    %3395 = vmatpush2.msra.mxu0 %v3094
    %3396 = vmatprep.mubr.f32.mxu0 %v2931
    %3397 = vmatmul.mubr.f32.gmra.mxu0 %v2930
    %v3398 = vpop.f32.mrf.mxu0
    %v3399 = vadd.f32 %v3328, %v3398
    %v3400 = vpop.f32.mrf.mxu0
    %v3401 = vadd.f32 %v3330, %v3400
    %3402 = vdwg.mxu0
    %3403 = vmatprep.subr.mxu0 %v3157
    %3404 = vmatpush1.msra.mxu0 %v3156
    %3405 = vmatprep.subr.mxu0 %v3155
    %3406 = vmatpush1.msra.mxu0 %v3154
    %3407 = vmatprep.subr.mxu0 %v3153
    %3408 = vmatpush1.msra.mxu0 %v3152
    %3409 = vmatprep.subr.mxu0 %v3151
    %3410 = vmatpush1.msra.mxu0 %v3150
    %3411 = vmatprep.subr.mxu0 %v3149
    %3412 = vmatpush1.msra.mxu0 %v3148
    %3413 = vmatprep.subr.mxu0 %v3147
    %3414 = vmatpush1.msra.mxu0 %v3146
    %3415 = vmatprep.subr.mxu0 %v3145
    %3416 = vmatpush1.msra.mxu0 %v3144
    %3417 = vmatprep.subr.mxu0 %v3143
    %3418 = vmatpush1.msra.mxu0 %v3142
    %3419 = vmatprep.subr.mxu0 %v3141
    %3420 = vmatpush1.msra.mxu0 %v3140
    %3421 = vmatprep.subr.mxu0 %v3139
    %3422 = vmatpush1.msra.mxu0 %v3138
    %3423 = vmatprep.subr.mxu0 %v3137
    %3424 = vmatpush1.msra.mxu0 %v3136
    %3425 = vmatprep.subr.mxu0 %v3135
    %3426 = vmatpush1.msra.mxu0 %v3134
    %3427 = vmatprep.subr.mxu0 %v3133
    %3428 = vmatpush1.msra.mxu0 %v3132
    %3429 = vmatprep.subr.mxu0 %v3131
    %3430 = vmatpush1.msra.mxu0 %v3130
    %3431 = vmatprep.subr.mxu0 %v3129
    %3432 = vmatpush1.msra.mxu0 %v3128
    %3433 = vmatprep.subr.mxu0 %v3127
    %3434 = vmatpush1.msra.mxu0 %v3126
    %3435 = vmatprep.subr.mxu0 %v3189
    %3436 = vmatpush2.msra.mxu0 %v3188
    %3437 = vmatprep.subr.mxu0 %v3187
    %3438 = vmatpush2.msra.mxu0 %v3186
    %3439 = vmatprep.subr.mxu0 %v3185
    %3440 = vmatpush2.msra.mxu0 %v3184
    %3441 = vmatprep.subr.mxu0 %v3183
    %3442 = vmatpush2.msra.mxu0 %v3182
    %3443 = vmatprep.subr.mxu0 %v3181
    %3444 = vmatpush2.msra.mxu0 %v3180
    %3445 = vmatprep.subr.mxu0 %v3179
    %3446 = vmatpush2.msra.mxu0 %v3178
    %3447 = vmatprep.subr.mxu0 %v3177
    %3448 = vmatpush2.msra.mxu0 %v3176
    %3449 = vmatprep.subr.mxu0 %v3175
    %3450 = vmatpush2.msra.mxu0 %v3174
    %3451 = vmatprep.subr.mxu0 %v3173
    %3452 = vmatpush2.msra.mxu0 %v3172
    %3453 = vmatprep.subr.mxu0 %v3171
    %3454 = vmatpush2.msra.mxu0 %v3170
    %3455 = vmatprep.subr.mxu0 %v3169
    %3456 = vmatpush2.msra.mxu0 %v3168
    %3457 = vmatprep.subr.mxu0 %v3167
    %3458 = vmatpush2.msra.mxu0 %v3166
    %3459 = vmatprep.subr.mxu0 %v3165
    %3460 = vmatpush2.msra.mxu0 %v3164
    %3461 = vmatprep.subr.mxu0 %v3163
    %3462 = vmatpush2.msra.mxu0 %v3162
    %3463 = vmatprep.subr.mxu0 %v3161
    %3464 = vmatpush2.msra.mxu0 %v3160
    %3465 = vmatprep.subr.mxu0 %v3159
    %3466 = vmatpush2.msra.mxu0 %v3158
    %3467 = vmatprep.mubr.f32.mxu0 %v2933
    %3468 = vmatmul.mubr.f32.gmra.mxu0 %v2932
    %v3469 = vpop.f32.mrf.mxu0
    %v3470 = vadd.f32 %v3399, %v3469
    %v3471 = vpop.f32.mrf.mxu0
    %v3472 = vadd.f32 %v3401, %v3471
    %3473 = vdwg.mxu0
    %v3476 = vcombine.low %v3470, %v3472
    %v3478 = vunpack.c.l.s4 1983009808
    %v3479 = vunpack.c.0.s8 %v3478
    %v3480 = vlaneseq
    %v3481 = vshrl.u32 %v3480, 7
    %v3482 = vsub.s32 %v3479, %v3481
    %v3483 = vrot.slane %v3476, %v3482
    %vm3485 = vcmask 1041408
    %vm3486 = vcmask 781314
    %vm3487 = vmor %vm3486, %vm3485
    %3488 = vst.msk [vmem:[#allocation13] sm:$0xf] %vm3487, %v3483
    // Predicated region
    $region57: #{forward.1} parent=1 // pred_check
      _
    $region58: #{forward.1} parent=1 // pred_check_branch
      %3490 = sbr.rel (0) target = $region60
    $region59: #{forward.1} parent=1 // pred_region
      %s3492 = ssub.s32 64, 64
      %3493 = vsyncadd [#allocation4], %s3492
      %s3495 = sshll.u32 [#allocation13], 4
      %s3496 = int_to_ptr.vmem [resolvable:$true] %s3495
      %3498 = dma.vmem_to_hbm [thread:$0]  %s3496, 64, %s6, [#allocation4]
    $region60: #{forward.1} parent=1 // pred_fallthru
      _
    // Predicated region
    $region61: #{forward.1} parent=1 // pred_check
      _
    $region62: #{forward.1} parent=1 // pred_check_branch
      %3500 = sbr.rel (0) target = $region64
    $region63: #{forward.1} parent=1 // pred_region
      %3501 = dma.done [#allocation4], 64
    $region64: #{forward.1} parent=1 // pred_fallthru
      _
    %3502 = vsyncpa [#allocation3], 1
    %3503 = vsyncpa [#allocation6], 1
    %3504 = vsyncpa [#allocation9], 1
    %3505 = vsyncpa [#allocation12], 1
    %3506 = vsyncpa [#allocation4], 1

</llo_original>
